<compile_context>
chip_gen: v6e
topology: v6e:2x2x1
jax: 0.10.0
libtpu: 0.0.40
codegen_flags: <defaults>
</compile_context>

<pallas_src>
import jax
import jax.numpy as jnp
import numpy as np
from jax import lax
from jax.experimental import pallas as pl
from jax.experimental.pallas import tpu as pltpu

_BT = 8            # batch tile = one sublane group
_UNROLL_MAX = 16   # fully unroll the time loop up to this many steps
_FC_CHUNK = 8      # steps per hoisted-fc chunk


def _make_kernel(S, BT, L, H, D_in, V, has_init, has_rest, use_fori):
    """Build the batch-tile LSTM + fc kernel (all sizes static)."""

    def gate_update(gates, c_prev):
        # One EUP sigmoid over the full (BT, 4H) vreg, tanh only on g.
        sg = jax.nn.sigmoid(gates)
        i_g = sg[:, 0 * H:1 * H]
        f_g = sg[:, 1 * H:2 * H]
        o_g = sg[:, 3 * H:4 * H]
        g_g = jnp.tanh(gates[:, 2 * H:3 * H])
        c_new = f_g * c_prev + i_g * g_g
        h_new = o_g * jnp.tanh(c_new)
        return h_new, c_new

    def kernel(*refs):
        idx = 0
        x_ref = refs[idx]; idx += 1            # (S, BT, D_in)
        wih0_ref = refs[idx]; idx += 1         # (D_in, 4H)
        whh_ref = refs[idx]; idx += 1          # (L, H, 4H)
        if has_rest:
            wihr_ref = refs[idx]; idx += 1     # (L-1, H, 4H)
        b_ref = refs[idx]; idx += 1            # (L, 4H)
        wfc_ref = refs[idx]; idx += 1          # (H, V)
        bfc_ref = refs[idx]; idx += 1          # (1, V)
        if has_init:
            h0_ref = refs[idx]; idx += 1       # (L, BT, H)
            c0_ref = refs[idx]; idx += 1       # (L, BT, H)
        out_ref = refs[idx]; idx += 1          # (S, BT, V)
        hn_ref = refs[idx]; idx += 1           # (L, BT, H)
        cn_ref = refs[idx]; idx += 1           # (L, BT, H)
        if use_fori:
            gin_ref = refs[idx]; idx += 1      # VMEM (S, BT, 4H)
            hs_ref = refs[idx]; idx += 1       # VMEM (S, BT, H)

        b_all = b_ref[...]                                      # (L, 4H)

        # Hoisted layer-0 input projection for the WHOLE sequence, with the
        # layer-0 bias folded in: one MXU pass + one broadcast, off the
        # serial critical path.
        x_all = x_ref[...].reshape(S * BT, D_in)
        gin0 = (jnp.dot(x_all, wih0_ref[...],
                        preferred_element_type=jnp.float32)
                + b_all[0:1, :]).reshape(S, BT, 4 * H)

        # Hoist weights and pre-broadcast layer>0 biases ONCE.
        whh = [whh_ref[l] for l in range(L)]                    # (H, 4H) each
        wihr = [wihr_ref[l] for l in range(L - 1)] if has_rest else []
        b_bc = [jnp.broadcast_to(b_all[l:l + 1, :], (BT, 4 * H))
                for l in range(1, L)]
        wfc = wfc_ref[...]
        bfc = bfc_ref[...]

        def step(gin_t, h, c):
            # Issue ALL h_{t-1}-dependent recurrent gemms first so the MXU
            # drain of layers 1..L-1 overlaps the layer-0 gate math.
            rec = [jnp.dot(h[l], whh[l], preferred_element_type=jnp.float32)
                   for l in range(L)]
            h0, c0 = gate_update(gin_t + rec[0], c[0])
            new_h, new_c = [h0], [c0]
            inp = h0
            for l in range(1, L):
                gates = (rec[l]
                         + jnp.dot(inp, wihr[l - 1],
                                   preferred_element_type=jnp.float32)
                         + b_bc[l - 1])
                hl, cl = gate_update(gates, c[l])
                new_h.append(hl)
                new_c.append(cl)
                inp = hl
            return new_h, new_c, inp

        def fc_store(start, hs2d, ck):
            # hs2d: (ck*BT, H). Lane-dense store (V is a multiple of 128).
            logits = (jnp.dot(hs2d, wfc, preferred_element_type=jnp.float32)
                      + bfc)
            out_ref[pl.ds(start, ck), :, :] = logits.reshape(ck, BT, V)

        if has_init:
            h = [h0_ref[l] for l in range(L)]
            c = [c0_ref[l] for l in range(L)]
        else:
            h = [jnp.zeros((BT, H), jnp.float32) for _ in range(L)]
            c = [jnp.zeros((BT, H), jnp.float32) for _ in range(L)]

        if not use_fori:
            # Small S: fully unrolled time loop, fc every _FC_CHUNK steps so
            # the live top-h / logits footprint stays bounded.
            chunk, chunk_start = [], 0
            for t in range(S):
                h, c, top = step(gin0[t], h, c)
                chunk.append(top)
                if len(chunk) == _FC_CHUNK or t == S - 1:
                    fc_store(chunk_start, jnp.concatenate(chunk, axis=0),
                             len(chunk))
                    chunk_start += len(chunk)
                    chunk = []
        else:
            # Large S: bound vreg pressure with fori_loop; top-layer h goes
            # to VMEM scratch; chunked fc afterwards.
            gin_ref[...] = gin0

            def body(t, carry):
                h_st, c_st = carry
                hl = [h_st[l] for l in range(L)]
                cl = [c_st[l] for l in range(L)]
                hl, cl, top = step(gin_ref[t], hl, cl)
                hs_ref[t] = top
                return (jnp.stack(hl), jnp.stack(cl))

            h_st, c_st = lax.fori_loop(0, S, body,
                                       (jnp.stack(h), jnp.stack(c)),
                                       unroll=4)
            h = [h_st[l] for l in range(L)]
            c = [c_st[l] for l in range(L)]
            for cs in range(0, S, _FC_CHUNK):
                ck = min(_FC_CHUNK, S - cs)
                hs2d = hs_ref[pl.ds(cs, ck), :, :].reshape(ck * BT, H)
                fc_store(cs, hs2d, ck)

        # Final-state writeback: exactly one store per ref.
        hn_ref[...] = jnp.stack(h)
        cn_ref[...] = jnp.stack(c)

    return kernel


def generator_forward(x, y, z, params, g_hidden=None):
    """Mirrors Generator.forward(x, y, z, g_hidden).

    x: (B, S, n_embed), y: (B, S, y_dim), z: (B, n_z).
    Returns (output (B, S, V), (h_n, c_n) each (L, B, H)).
    """
    B, S, _ = x.shape
    n_z = z.shape[-1]
    L = params["n_layers"]
    H = params["hidden"]
    V = params["wfc"].shape[1]
    D_in = x.shape[2] + y.shape[2] + n_z

    n_bt = pl.cdiv(B, _BT)        # batch tiles (parallel grid axis)
    Bp = n_bt * _BT

    # T.cat([z]*n_seq, 1).view(B, S, n_z)  <=>  tile z across the seq axis.
    z_rep = jnp.broadcast_to(z[:, None, :], (B, S, n_z))
    xin = jnp.concatenate([x, y, z_rep], axis=2).astype(jnp.float32)
    xin_t = jnp.transpose(xin, (1, 0, 2))                     # (S, B, D_in)
    if Bp != B:
        xin_t = jnp.pad(xin_t, ((0, 0), (0, Bp - B), (0, 0)))

    has_init = g_hidden is not None
    has_rest = L > 1
    use_fori = S > _UNROLL_MAX

    inputs = [xin_t, params["wih0"], params["whh"]]
    in_specs = [
        pl.BlockSpec((S, _BT, D_in), lambda i: (0, i, 0)),
        pl.BlockSpec((D_in, 4 * H), lambda i: (0, 0)),
        pl.BlockSpec((L, H, 4 * H), lambda i: (0, 0, 0)),
    ]
    if has_rest:
        inputs.append(params["wihr"])
        in_specs.append(pl.BlockSpec((L - 1, H, 4 * H), lambda i: (0, 0, 0)))
    inputs += [params["b"], params["wfc"], params["bfc"]]
    in_specs += [
        pl.BlockSpec((L, 4 * H), lambda i: (0, 0)),
        pl.BlockSpec((H, V), lambda i: (0, 0)),
        pl.BlockSpec((1, V), lambda i: (0, 0)),
    ]
    if has_init:
        h0, c0 = g_hidden
        h0 = jnp.pad(h0.astype(jnp.float32), ((0, 0), (0, Bp - B), (0, 0)))
        c0 = jnp.pad(c0.astype(jnp.float32), ((0, 0), (0, Bp - B), (0, 0)))
        inputs += [h0, c0]
        in_specs += [pl.BlockSpec((L, _BT, H), lambda i: (0, i, 0)),
                     pl.BlockSpec((L, _BT, H), lambda i: (0, i, 0))]

    scratch_shapes = []
    if use_fori:
        scratch_shapes = [pltpu.VMEM((S, _BT, 4 * H), jnp.float32),
                          pltpu.VMEM((S, _BT, H), jnp.float32)]

    kern = _make_kernel(S, _BT, L, H, D_in, V, has_init, has_rest, use_fori)

    out_p, h_n, c_n = pl.pallas_call(
        kern,
        out_shape=(
            jax.ShapeDtypeStruct((S, Bp, V), jnp.float32),
            jax.ShapeDtypeStruct((L, Bp, H), jnp.float32),
            jax.ShapeDtypeStruct((L, Bp, H), jnp.float32),
        ),
        grid_spec=pltpu.PrefetchScalarGridSpec(
            num_scalar_prefetch=0,
            grid=(n_bt,),
            in_specs=in_specs,
            out_specs=[
                pl.BlockSpec((S, _BT, V), lambda i: (0, i, 0)),
                pl.BlockSpec((L, _BT, H), lambda i: (0, i, 0)),
                pl.BlockSpec((L, _BT, H), lambda i: (0, i, 0)),
            ],
            scratch_shapes=scratch_shapes,
        ),
        compiler_params=pltpu.CompilerParams(
            dimension_semantics=("parallel",),     # batch tiles are independent
            vmem_limit_bytes=32 * 1024 * 1024),
    )(*inputs)

    # TODO(synk): at large S keep the consumer time-major (or store batch-
    # leading per chunk in-kernel) to avoid this extra HBM round trip.
    output = jnp.transpose(out_p[:, :B, :], (1, 0, 2))        # back to (B,S,V)
    return output, (h_n[:, :B, :], c_n[:, :B, :])


def init_params(key, feature_dim, n_z, hidden, n_layers, vocab):
    """Deterministic synthetic params matching nn.LSTM / nn.Linear shapes & init scale."""
    D_in = feature_dim + n_z
    k = 1.0 / np.sqrt(hidden)
    keys = jax.random.split(key, 4 * n_layers + 2)
    wih_list, whh_list, b_list = [], [], []
    idx = 0
    for l in range(n_layers):
        in_dim = D_in if l == 0 else hidden
        w_ih = jax.random.uniform(keys[idx], (4 * hidden, in_dim), minval=-k, maxval=k); idx += 1
        w_hh = jax.random.uniform(keys[idx], (4 * hidden, hidden), minval=-k, maxval=k); idx += 1
        b_ih = jax.random.uniform(keys[idx], (4 * hidden,), minval=-k, maxval=k); idx += 1
        b_hh = jax.random.uniform(keys[idx], (4 * hidden,), minval=-k, maxval=k); idx += 1
        wih_list.append(w_ih)
        whh_list.append(w_hh)
        b_list.append(b_ih + b_hh)     # LSTM adds both biases; fold them
    w_fc = jax.random.uniform(keys[idx], (vocab, hidden), minval=-k, maxval=k); idx += 1
    b_fc = jax.random.uniform(keys[idx], (vocab,), minval=-k, maxval=k)

    params = {
        "n_layers": n_layers,
        "hidden": hidden,
        "wih0": wih_list[0].T.astype(jnp.float32),                    # (D_in, 4H)
        "whh": jnp.stack([w.T for w in whh_list]).astype(jnp.float32),  # (L, H, 4H)
        "b": jnp.stack(b_list).astype(jnp.float32),                   # (L, 4H)
        "wfc": w_fc.T.astype(jnp.float32),                            # (H, V)
        "bfc": b_fc[None, :].astype(jnp.float32),                     # (1, V)
    }
    if n_layers > 1:
        params["wihr"] = jnp.stack(
            [wih_list[l].T for l in range(1, n_layers)]).astype(jnp.float32)  # (L-1, H, 4H)
    return params


def generator_ref(x, y, z, params, g_hidden=None):
    """Pure-JAX reference (same math as torch LSTM + Linear) for validation."""
    B, S, _ = x.shape
    n_z = z.shape[-1]
    L, H = params["n_layers"], params["hidden"]
    z_rep = jnp.broadcast_to(z[:, None, :], (B, S, n_z))
    xin = jnp.concatenate([x, y, z_rep], axis=2).astype(jnp.float32)
    if g_hidden is None:
        h = jnp.zeros((L, B, H), jnp.float32)
        c = jnp.zeros((L, B, H), jnp.float32)
    else:
        h, c = g_hidden
    outs = []
    for t in range(S):
        inp = xin[:, t, :]
        new_h, new_c = [], []
        for l in range(L):
            w_in = params["wih0"] if l == 0 else params["wihr"][l - 1]
            gates = inp @ w_in + h[l] @ params["whh"][l] + params["b"][l]
            i_g = jax.nn.sigmoid(gates[:, :H])
            f_g = jax.nn.sigmoid(gates[:, H:2 * H])
            g_g = jnp.tanh(gates[:, 2 * H:3 * H])
            o_g = jax.nn.sigmoid(gates[:, 3 * H:])
            c_l = f_g * c[l] + i_g * g_g
            h_l = o_g * jnp.tanh(c_l)
            new_h.append(h_l)
            new_c.append(c_l)
            inp = h_l
        h, c = jnp.stack(new_h), jnp.stack(new_c)
        outs.append(inp @ params["wfc"] + params["bfc"][0])
    return jnp.stack(outs, axis=1), (h, c)


if __name__ == "__main__":
    # Small shapes consistent with the module:
    #   opt.feature_dim = n_embed + y_dim = 28, opt.n_z = 4  -> LSTM input 32
    #   opt.z_dim (hidden) = 32, opt.n_layers_G = 2, opt.max_words = 124 -> fc out 128
    B, S = 2, 8
    n_embed, y_dim, n_z = 20, 8, 4
    feature_dim = n_embed + y_dim
    H, L = 32, 2
    max_words = 124
    V = max_words + 4

    key = jax.random.PRNGKey(0)
    kx, ky, kz, kp = jax.random.split(key, 4)
    x = jax.random.normal(kx, (B, S, n_embed), dtype=jnp.float32)
    y = jax.random.normal(ky, (B, S, y_dim), dtype=jnp.float32)
    z = jax.random.normal(kz, (B, n_z), dtype=jnp.float32)
    params = init_params(kp, feature_dim, n_z, H, L, V)

    # Path 1: g_hidden is None (init_hidden -> zeros).
    out, (h_n, c_n) = generator_forward(x, y, z, params)
    jax.block_until_ready(out)
    jax.block_until_ready(h_n)
    jax.block_until_ready(c_n)

    out_ref, (h_ref, c_ref) = generator_ref(x, y, z, params)
    assert np.allclose(np.asarray(out), np.asarray(out_ref), atol=1e-4, rtol=1e-4)
    assert np.allclose(np.asarray(h_n), np.asarray(h_ref), atol=1e-4, rtol=1e-4)
    assert np.allclose(np.asarray(c_n), np.asarray(c_ref), atol=1e-4, rtol=1e-4)

    # Path 2: carry state (g_hidden provided).
    out2, (h2, c2) = generator_forward(x, y, z, params, g_hidden=(h_n, c_n))
    jax.block_until_ready(out2)
    out2_ref, (h2_ref, c2_ref) = generator_ref(x, y, z, params, g_hidden=(h_ref, c_ref))
    assert np.allclose(np.asarray(out2), np.asarray(out2_ref), atol=1e-4, rtol=1e-4)
    assert np.allclose(np.asarray(h2), np.asarray(h2_ref), atol=1e-4, rtol=1e-4)
    assert np.allclose(np.asarray(c2), np.asarray(c2_ref), atol=1e-4, rtol=1e-4)

    print("KERNEL_OK")
</pallas_src>

<mosaic_0001>
module attributes {stable_mosaic.version = 11 : i64} {
  func.func @kernel(%arg0: i32, %arg1: memref<8x8x32xf32, #tpu.memory_space<vmem>>, %arg2: memref<32x128xf32, #tpu.memory_space<vmem>>, %arg3: memref<2x32x128xf32, #tpu.memory_space<vmem>>, %arg4: memref<1x32x128xf32, #tpu.memory_space<vmem>>, %arg5: memref<2x128xf32, #tpu.memory_space<vmem>>, %arg6: memref<32x128xf32, #tpu.memory_space<vmem>>, %arg7: memref<1x128xf32, #tpu.memory_space<vmem>>, %arg8: memref<8x8x128xf32, #tpu.memory_space<vmem>>, %arg9: memref<2x8x32xf32, #tpu.memory_space<vmem>>, %arg10: memref<2x8x32xf32, #tpu.memory_space<vmem>>) attributes {dimension_semantics = [#tpu.dimension_semantics<parallel>], iteration_bounds = array<i64: 1>, scalar_prefetch = 0 : i64, scratch_operands = 0 : i64, tpu.core_type = #tpu.core_type<tc>, window_params = [{transform_indices = @transform_0, window_bounds = array<i64: 8, 8, 32>}, {pipeline_mode = #tpu.pipeline_mode<synchronous>, transform_indices = @transform_1, window_bounds = array<i64: 32, 128>}, {pipeline_mode = #tpu.pipeline_mode<synchronous>, transform_indices = @transform_2, window_bounds = array<i64: 2, 32, 128>}, {pipeline_mode = #tpu.pipeline_mode<synchronous>, transform_indices = @transform_3, window_bounds = array<i64: 1, 32, 128>}, {pipeline_mode = #tpu.pipeline_mode<synchronous>, transform_indices = @transform_4, window_bounds = array<i64: 2, 128>}, {pipeline_mode = #tpu.pipeline_mode<synchronous>, transform_indices = @transform_5, window_bounds = array<i64: 32, 128>}, {pipeline_mode = #tpu.pipeline_mode<synchronous>, transform_indices = @transform_6, window_bounds = array<i64: 1, 128>}, {transform_indices = @transform_7, window_bounds = array<i64: 8, 8, 128>}, {transform_indices = @transform_8, window_bounds = array<i64: 2, 8, 32>}, {transform_indices = @transform_9, window_bounds = array<i64: 2, 8, 32>}]} {
    %c0 = arith.constant 0 : index
    %c0_0 = arith.constant 0 : index
    %0 = vector.load %arg5[%c0, %c0_0] : memref<2x128xf32, #tpu.memory_space<vmem>>, vector<2x128xf32>
    %c0_1 = arith.constant 0 : index
    %c0_2 = arith.constant 0 : index
    %c0_3 = arith.constant 0 : index
    %1 = vector.load %arg1[%c0_1, %c0_2, %c0_3] : memref<8x8x32xf32, #tpu.memory_space<vmem>>, vector<8x8x32xf32>
    %2 = vector.shape_cast %1 : vector<8x8x32xf32> to vector<64x32xf32>
    %c0_4 = arith.constant 0 : index
    %c0_5 = arith.constant 0 : index
    %3 = vector.load %arg2[%c0_4, %c0_5] : memref<32x128xf32, #tpu.memory_space<vmem>>, vector<32x128xf32>
    %cst = arith.constant dense<0.000000e+00> : vector<64x128xf32>
    %4 = tpu.matmul %2, %3, %cst {dimension_numbers = #tpu.dot_dimension_numbers<[1], [0], [0], [1], [0, 0, 1, 1], [], []>} : vector<64x32xf32>, vector<32x128xf32>, vector<64x128xf32> -> vector<64x128xf32>
    %5 = vector.extract_strided_slice %0 {offsets = [0, 0], sizes = [1, 128], strides = [1, 1]} : vector<2x128xf32> to vector<1x128xf32>
    %6 = vector.broadcast %5 : vector<1x128xf32> to vector<64x128xf32>
    %7 = arith.addf %4, %6 : vector<64x128xf32>
    %8 = vector.shape_cast %7 : vector<64x128xf32> to vector<8x8x128xf32>
    %c0_6 = arith.constant 0 : index
    %c0_7 = arith.constant 0 : index
    %c0_8 = arith.constant 0 : index
    %9 = vector.load %arg3[%c0_6, %c0_7, %c0_8] : memref<2x32x128xf32, #tpu.memory_space<vmem>>, vector<1x32x128xf32>
    %10 = vector.shape_cast %9 : vector<1x32x128xf32> to vector<32x128xf32>
    %c1 = arith.constant 1 : index
    %c0_9 = arith.constant 0 : index
    %c0_10 = arith.constant 0 : index
    %11 = vector.load %arg3[%c1, %c0_9, %c0_10] : memref<2x32x128xf32, #tpu.memory_space<vmem>>, vector<1x32x128xf32>
    %12 = vector.shape_cast %11 : vector<1x32x128xf32> to vector<32x128xf32>
    %c0_11 = arith.constant 0 : index
    %c0_12 = arith.constant 0 : index
    %c0_13 = arith.constant 0 : index
    %13 = vector.load %arg4[%c0_11, %c0_12, %c0_13] : memref<1x32x128xf32, #tpu.memory_space<vmem>>, vector<1x32x128xf32>
    %14 = vector.shape_cast %13 : vector<1x32x128xf32> to vector<32x128xf32>
    %15 = vector.extract_strided_slice %0 {offsets = [1, 0], sizes = [1, 128], strides = [1, 1]} : vector<2x128xf32> to vector<1x128xf32>
    %16 = vector.shape_cast %15 : vector<1x128xf32> to vector<1x128xf32>
    %17 = vector.broadcast %16 : vector<1x128xf32> to vector<8x128xf32>
    %c0_14 = arith.constant 0 : index
    %c0_15 = arith.constant 0 : index
    %18 = vector.load %arg6[%c0_14, %c0_15] : memref<32x128xf32, #tpu.memory_space<vmem>>, vector<32x128xf32>
    %c0_16 = arith.constant 0 : index
    %c0_17 = arith.constant 0 : index
    %19 = vector.load %arg7[%c0_16, %c0_17] : memref<1x128xf32, #tpu.memory_space<vmem>>, vector<1x128xf32>
    %cst_18 = arith.constant 0.000000e+00 : f32
    %20 = vector.broadcast %cst_18 : f32 to vector<8x32xf32>
    %cst_19 = arith.constant 0.000000e+00 : f32
    %21 = vector.broadcast %cst_19 : f32 to vector<8x32xf32>
    %cst_20 = arith.constant 0.000000e+00 : f32
    %22 = vector.broadcast %cst_20 : f32 to vector<8x32xf32>
    %cst_21 = arith.constant 0.000000e+00 : f32
    %23 = vector.broadcast %cst_21 : f32 to vector<8x32xf32>
    %24 = vector.extract_strided_slice %8 {offsets = [0, 0, 0], sizes = [1, 8, 128], strides = [1, 1, 1]} : vector<8x8x128xf32> to vector<1x8x128xf32>
    %25 = vector.shape_cast %24 : vector<1x8x128xf32> to vector<8x128xf32>
    %cst_22 = arith.constant dense<0.000000e+00> : vector<8x128xf32>
    %26 = tpu.matmul %20, %10, %cst_22 {dimension_numbers = #tpu.dot_dimension_numbers<[1], [0], [0], [1], [0, 0, 1, 1], [], []>} : vector<8x32xf32>, vector<32x128xf32>, vector<8x128xf32> -> vector<8x128xf32>
    %cst_23 = arith.constant dense<0.000000e+00> : vector<8x128xf32>
    %27 = tpu.matmul %21, %12, %cst_23 {dimension_numbers = #tpu.dot_dimension_numbers<[1], [0], [0], [1], [0, 0, 1, 1], [], []>} : vector<8x32xf32>, vector<32x128xf32>, vector<8x128xf32> -> vector<8x128xf32>
    %28 = arith.addf %25, %26 : vector<8x128xf32>
    %29 = arith.negf %28 : vector<8x128xf32>
    %30 = math.exp %29 : vector<8x128xf32>
    %cst_24 = arith.constant 1.000000e+00 : f32
    %31 = vector.broadcast %cst_24 : f32 to vector<8x128xf32>
    %32 = arith.addf %31, %30 : vector<8x128xf32>
    %33 = arith.divf %31, %32 : vector<8x128xf32>
    %34 = vector.extract_strided_slice %33 {offsets = [0, 0], sizes = [8, 32], strides = [1, 1]} : vector<8x128xf32> to vector<8x32xf32>
    %35 = vector.extract_strided_slice %33 {offsets = [0, 32], sizes = [8, 32], strides = [1, 1]} : vector<8x128xf32> to vector<8x32xf32>
    %36 = vector.extract_strided_slice %33 {offsets = [0, 96], sizes = [8, 32], strides = [1, 1]} : vector<8x128xf32> to vector<8x32xf32>
    %37 = vector.extract_strided_slice %28 {offsets = [0, 64], sizes = [8, 32], strides = [1, 1]} : vector<8x128xf32> to vector<8x32xf32>
    %38 = math.tanh %37 : vector<8x32xf32>
    %39 = arith.mulf %35, %22 : vector<8x32xf32>
    %40 = arith.mulf %34, %38 : vector<8x32xf32>
    %41 = arith.addf %39, %40 : vector<8x32xf32>
    %42 = math.tanh %41 : vector<8x32xf32>
    %43 = arith.mulf %36, %42 : vector<8x32xf32>
    %cst_25 = arith.constant dense<0.000000e+00> : vector<8x128xf32>
    %44 = tpu.matmul %43, %14, %cst_25 {dimension_numbers = #tpu.dot_dimension_numbers<[1], [0], [0], [1], [0, 0, 1, 1], [], []>} : vector<8x32xf32>, vector<32x128xf32>, vector<8x128xf32> -> vector<8x128xf32>
    %45 = arith.addf %27, %44 : vector<8x128xf32>
    %46 = arith.addf %45, %17 : vector<8x128xf32>
    %47 = arith.negf %46 : vector<8x128xf32>
    %48 = math.exp %47 : vector<8x128xf32>
    %cst_26 = arith.constant 1.000000e+00 : f32
    %49 = vector.broadcast %cst_26 : f32 to vector<8x128xf32>
    %50 = arith.addf %49, %48 : vector<8x128xf32>
    %51 = arith.divf %49, %50 : vector<8x128xf32>
    %52 = vector.extract_strided_slice %51 {offsets = [0, 0], sizes = [8, 32], strides = [1, 1]} : vector<8x128xf32> to vector<8x32xf32>
    %53 = vector.extract_strided_slice %51 {offsets = [0, 32], sizes = [8, 32], strides = [1, 1]} : vector<8x128xf32> to vector<8x32xf32>
    %54 = vector.extract_strided_slice %51 {offsets = [0, 96], sizes = [8, 32], strides = [1, 1]} : vector<8x128xf32> to vector<8x32xf32>
    %55 = vector.extract_strided_slice %46 {offsets = [0, 64], sizes = [8, 32], strides = [1, 1]} : vector<8x128xf32> to vector<8x32xf32>
    %56 = math.tanh %55 : vector<8x32xf32>
    %57 = arith.mulf %53, %23 : vector<8x32xf32>
    %58 = arith.mulf %52, %56 : vector<8x32xf32>
    %59 = arith.addf %57, %58 : vector<8x32xf32>
    %60 = math.tanh %59 : vector<8x32xf32>
    %61 = arith.mulf %54, %60 : vector<8x32xf32>
    %62 = vector.extract_strided_slice %8 {offsets = [1, 0, 0], sizes = [1, 8, 128], strides = [1, 1, 1]} : vector<8x8x128xf32> to vector<1x8x128xf32>
    %63 = vector.shape_cast %62 : vector<1x8x128xf32> to vector<8x128xf32>
    %cst_27 = arith.constant dense<0.000000e+00> : vector<8x128xf32>
    %64 = tpu.matmul %43, %10, %cst_27 {dimension_numbers = #tpu.dot_dimension_numbers<[1], [0], [0], [1], [0, 0, 1, 1], [], []>} : vector<8x32xf32>, vector<32x128xf32>, vector<8x128xf32> -> vector<8x128xf32>
    %cst_28 = arith.constant dense<0.000000e+00> : vector<8x128xf32>
    %65 = tpu.matmul %61, %12, %cst_28 {dimension_numbers = #tpu.dot_dimension_numbers<[1], [0], [0], [1], [0, 0, 1, 1], [], []>} : vector<8x32xf32>, vector<32x128xf32>, vector<8x128xf32> -> vector<8x128xf32>
    %66 = arith.addf %63, %64 : vector<8x128xf32>
    %67 = arith.negf %66 : vector<8x128xf32>
    %68 = math.exp %67 : vector<8x128xf32>
    %cst_29 = arith.constant 1.000000e+00 : f32
    %69 = vector.broadcast %cst_29 : f32 to vector<8x128xf32>
    %70 = arith.addf %69, %68 : vector<8x128xf32>
    %71 = arith.divf %69, %70 : vector<8x128xf32>
    %72 = vector.extract_strided_slice %71 {offsets = [0, 0], sizes = [8, 32], strides = [1, 1]} : vector<8x128xf32> to vector<8x32xf32>
    %73 = vector.extract_strided_slice %71 {offsets = [0, 32], sizes = [8, 32], strides = [1, 1]} : vector<8x128xf32> to vector<8x32xf32>
    %74 = vector.extract_strided_slice %71 {offsets = [0, 96], sizes = [8, 32], strides = [1, 1]} : vector<8x128xf32> to vector<8x32xf32>
    %75 = vector.extract_strided_slice %66 {offsets = [0, 64], sizes = [8, 32], strides = [1, 1]} : vector<8x128xf32> to vector<8x32xf32>
    %76 = math.tanh %75 : vector<8x32xf32>
    %77 = arith.mulf %73, %41 : vector<8x32xf32>
    %78 = arith.mulf %72, %76 : vector<8x32xf32>
    %79 = arith.addf %77, %78 : vector<8x32xf32>
    %80 = math.tanh %79 : vector<8x32xf32>
    %81 = arith.mulf %74, %80 : vector<8x32xf32>
    %cst_30 = arith.constant dense<0.000000e+00> : vector<8x128xf32>
    %82 = tpu.matmul %81, %14, %cst_30 {dimension_numbers = #tpu.dot_dimension_numbers<[1], [0], [0], [1], [0, 0, 1, 1], [], []>} : vector<8x32xf32>, vector<32x128xf32>, vector<8x128xf32> -> vector<8x128xf32>
    %83 = arith.addf %65, %82 : vector<8x128xf32>
    %84 = arith.addf %83, %17 : vector<8x128xf32>
    %85 = arith.negf %84 : vector<8x128xf32>
    %86 = math.exp %85 : vector<8x128xf32>
    %cst_31 = arith.constant 1.000000e+00 : f32
    %87 = vector.broadcast %cst_31 : f32 to vector<8x128xf32>
    %88 = arith.addf %87, %86 : vector<8x128xf32>
    %89 = arith.divf %87, %88 : vector<8x128xf32>
    %90 = vector.extract_strided_slice %89 {offsets = [0, 0], sizes = [8, 32], strides = [1, 1]} : vector<8x128xf32> to vector<8x32xf32>
    %91 = vector.extract_strided_slice %89 {offsets = [0, 32], sizes = [8, 32], strides = [1, 1]} : vector<8x128xf32> to vector<8x32xf32>
    %92 = vector.extract_strided_slice %89 {offsets = [0, 96], sizes = [8, 32], strides = [1, 1]} : vector<8x128xf32> to vector<8x32xf32>
    %93 = vector.extract_strided_slice %84 {offsets = [0, 64], sizes = [8, 32], strides = [1, 1]} : vector<8x128xf32> to vector<8x32xf32>
    %94 = math.tanh %93 : vector<8x32xf32>
    %95 = arith.mulf %91, %59 : vector<8x32xf32>
    %96 = arith.mulf %90, %94 : vector<8x32xf32>
    %97 = arith.addf %95, %96 : vector<8x32xf32>
    %98 = math.tanh %97 : vector<8x32xf32>
    %99 = arith.mulf %92, %98 : vector<8x32xf32>
    %100 = vector.extract_strided_slice %8 {offsets = [2, 0, 0], sizes = [1, 8, 128], strides = [1, 1, 1]} : vector<8x8x128xf32> to vector<1x8x128xf32>
    %101 = vector.shape_cast %100 : vector<1x8x128xf32> to vector<8x128xf32>
    %cst_32 = arith.constant dense<0.000000e+00> : vector<8x128xf32>
    %102 = tpu.matmul %81, %10, %cst_32 {dimension_numbers = #tpu.dot_dimension_numbers<[1], [0], [0], [1], [0, 0, 1, 1], [], []>} : vector<8x32xf32>, vector<32x128xf32>, vector<8x128xf32> -> vector<8x128xf32>
    %cst_33 = arith.constant dense<0.000000e+00> : vector<8x128xf32>
    %103 = tpu.matmul %99, %12, %cst_33 {dimension_numbers = #tpu.dot_dimension_numbers<[1], [0], [0], [1], [0, 0, 1, 1], [], []>} : vector<8x32xf32>, vector<32x128xf32>, vector<8x128xf32> -> vector<8x128xf32>
    %104 = arith.addf %101, %102 : vector<8x128xf32>
    %105 = arith.negf %104 : vector<8x128xf32>
    %106 = math.exp %105 : vector<8x128xf32>
    %cst_34 = arith.constant 1.000000e+00 : f32
    %107 = vector.broadcast %cst_34 : f32 to vector<8x128xf32>
    %108 = arith.addf %107, %106 : vector<8x128xf32>
    %109 = arith.divf %107, %108 : vector<8x128xf32>
    %110 = vector.extract_strided_slice %109 {offsets = [0, 0], sizes = [8, 32], strides = [1, 1]} : vector<8x128xf32> to vector<8x32xf32>
    %111 = vector.extract_strided_slice %109 {offsets = [0, 32], sizes = [8, 32], strides = [1, 1]} : vector<8x128xf32> to vector<8x32xf32>
    %112 = vector.extract_strided_slice %109 {offsets = [0, 96], sizes = [8, 32], strides = [1, 1]} : vector<8x128xf32> to vector<8x32xf32>
    %113 = vector.extract_strided_slice %104 {offsets = [0, 64], sizes = [8, 32], strides = [1, 1]} : vector<8x128xf32> to vector<8x32xf32>
    %114 = math.tanh %113 : vector<8x32xf32>
    %115 = arith.mulf %111, %79 : vector<8x32xf32>
    %116 = arith.mulf %110, %114 : vector<8x32xf32>
    %117 = arith.addf %115, %116 : vector<8x32xf32>
    %118 = math.tanh %117 : vector<8x32xf32>
    %119 = arith.mulf %112, %118 : vector<8x32xf32>
    %cst_35 = arith.constant dense<0.000000e+00> : vector<8x128xf32>
    %120 = tpu.matmul %119, %14, %cst_35 {dimension_numbers = #tpu.dot_dimension_numbers<[1], [0], [0], [1], [0, 0, 1, 1], [], []>} : vector<8x32xf32>, vector<32x128xf32>, vector<8x128xf32> -> vector<8x128xf32>
    %121 = arith.addf %103, %120 : vector<8x128xf32>
    %122 = arith.addf %121, %17 : vector<8x128xf32>
    %123 = arith.negf %122 : vector<8x128xf32>
    %124 = math.exp %123 : vector<8x128xf32>
    %cst_36 = arith.constant 1.000000e+00 : f32
    %125 = vector.broadcast %cst_36 : f32 to vector<8x128xf32>
    %126 = arith.addf %125, %124 : vector<8x128xf32>
    %127 = arith.divf %125, %126 : vector<8x128xf32>
    %128 = vector.extract_strided_slice %127 {offsets = [0, 0], sizes = [8, 32], strides = [1, 1]} : vector<8x128xf32> to vector<8x32xf32>
    %129 = vector.extract_strided_slice %127 {offsets = [0, 32], sizes = [8, 32], strides = [1, 1]} : vector<8x128xf32> to vector<8x32xf32>
    %130 = vector.extract_strided_slice %127 {offsets = [0, 96], sizes = [8, 32], strides = [1, 1]} : vector<8x128xf32> to vector<8x32xf32>
    %131 = vector.extract_strided_slice %122 {offsets = [0, 64], sizes = [8, 32], strides = [1, 1]} : vector<8x128xf32> to vector<8x32xf32>
    %132 = math.tanh %131 : vector<8x32xf32>
    %133 = arith.mulf %129, %97 : vector<8x32xf32>
    %134 = arith.mulf %128, %132 : vector<8x32xf32>
    %135 = arith.addf %133, %134 : vector<8x32xf32>
    %136 = math.tanh %135 : vector<8x32xf32>
    %137 = arith.mulf %130, %136 : vector<8x32xf32>
    %138 = vector.extract_strided_slice %8 {offsets = [3, 0, 0], sizes = [1, 8, 128], strides = [1, 1, 1]} : vector<8x8x128xf32> to vector<1x8x128xf32>
    %139 = vector.shape_cast %138 : vector<1x8x128xf32> to vector<8x128xf32>
    %cst_37 = arith.constant dense<0.000000e+00> : vector<8x128xf32>
    %140 = tpu.matmul %119, %10, %cst_37 {dimension_numbers = #tpu.dot_dimension_numbers<[1], [0], [0], [1], [0, 0, 1, 1], [], []>} : vector<8x32xf32>, vector<32x128xf32>, vector<8x128xf32> -> vector<8x128xf32>
    %cst_38 = arith.constant dense<0.000000e+00> : vector<8x128xf32>
    %141 = tpu.matmul %137, %12, %cst_38 {dimension_numbers = #tpu.dot_dimension_numbers<[1], [0], [0], [1], [0, 0, 1, 1], [], []>} : vector<8x32xf32>, vector<32x128xf32>, vector<8x128xf32> -> vector<8x128xf32>
    %142 = arith.addf %139, %140 : vector<8x128xf32>
    %143 = arith.negf %142 : vector<8x128xf32>
    %144 = math.exp %143 : vector<8x128xf32>
    %cst_39 = arith.constant 1.000000e+00 : f32
    %145 = vector.broadcast %cst_39 : f32 to vector<8x128xf32>
    %146 = arith.addf %145, %144 : vector<8x128xf32>
    %147 = arith.divf %145, %146 : vector<8x128xf32>
    %148 = vector.extract_strided_slice %147 {offsets = [0, 0], sizes = [8, 32], strides = [1, 1]} : vector<8x128xf32> to vector<8x32xf32>
    %149 = vector.extract_strided_slice %147 {offsets = [0, 32], sizes = [8, 32], strides = [1, 1]} : vector<8x128xf32> to vector<8x32xf32>
    %150 = vector.extract_strided_slice %147 {offsets = [0, 96], sizes = [8, 32], strides = [1, 1]} : vector<8x128xf32> to vector<8x32xf32>
    %151 = vector.extract_strided_slice %142 {offsets = [0, 64], sizes = [8, 32], strides = [1, 1]} : vector<8x128xf32> to vector<8x32xf32>
    %152 = math.tanh %151 : vector<8x32xf32>
    %153 = arith.mulf %149, %117 : vector<8x32xf32>
    %154 = arith.mulf %148, %152 : vector<8x32xf32>
    %155 = arith.addf %153, %154 : vector<8x32xf32>
    %156 = math.tanh %155 : vector<8x32xf32>
    %157 = arith.mulf %150, %156 : vector<8x32xf32>
    %cst_40 = arith.constant dense<0.000000e+00> : vector<8x128xf32>
    %158 = tpu.matmul %157, %14, %cst_40 {dimension_numbers = #tpu.dot_dimension_numbers<[1], [0], [0], [1], [0, 0, 1, 1], [], []>} : vector<8x32xf32>, vector<32x128xf32>, vector<8x128xf32> -> vector<8x128xf32>
    %159 = arith.addf %141, %158 : vector<8x128xf32>
    %160 = arith.addf %159, %17 : vector<8x128xf32>
    %161 = arith.negf %160 : vector<8x128xf32>
    %162 = math.exp %161 : vector<8x128xf32>
    %cst_41 = arith.constant 1.000000e+00 : f32
    %163 = vector.broadcast %cst_41 : f32 to vector<8x128xf32>
    %164 = arith.addf %163, %162 : vector<8x128xf32>
    %165 = arith.divf %163, %164 : vector<8x128xf32>
    %166 = vector.extract_strided_slice %165 {offsets = [0, 0], sizes = [8, 32], strides = [1, 1]} : vector<8x128xf32> to vector<8x32xf32>
    %167 = vector.extract_strided_slice %165 {offsets = [0, 32], sizes = [8, 32], strides = [1, 1]} : vector<8x128xf32> to vector<8x32xf32>
    %168 = vector.extract_strided_slice %165 {offsets = [0, 96], sizes = [8, 32], strides = [1, 1]} : vector<8x128xf32> to vector<8x32xf32>
    %169 = vector.extract_strided_slice %160 {offsets = [0, 64], sizes = [8, 32], strides = [1, 1]} : vector<8x128xf32> to vector<8x32xf32>
    %170 = math.tanh %169 : vector<8x32xf32>
    %171 = arith.mulf %167, %135 : vector<8x32xf32>
    %172 = arith.mulf %166, %170 : vector<8x32xf32>
    %173 = arith.addf %171, %172 : vector<8x32xf32>
    %174 = math.tanh %173 : vector<8x32xf32>
    %175 = arith.mulf %168, %174 : vector<8x32xf32>
    %176 = vector.extract_strided_slice %8 {offsets = [4, 0, 0], sizes = [1, 8, 128], strides = [1, 1, 1]} : vector<8x8x128xf32> to vector<1x8x128xf32>
    %177 = vector.shape_cast %176 : vector<1x8x128xf32> to vector<8x128xf32>
    %cst_42 = arith.constant dense<0.000000e+00> : vector<8x128xf32>
    %178 = tpu.matmul %157, %10, %cst_42 {dimension_numbers = #tpu.dot_dimension_numbers<[1], [0], [0], [1], [0, 0, 1, 1], [], []>} : vector<8x32xf32>, vector<32x128xf32>, vector<8x128xf32> -> vector<8x128xf32>
    %cst_43 = arith.constant dense<0.000000e+00> : vector<8x128xf32>
    %179 = tpu.matmul %175, %12, %cst_43 {dimension_numbers = #tpu.dot_dimension_numbers<[1], [0], [0], [1], [0, 0, 1, 1], [], []>} : vector<8x32xf32>, vector<32x128xf32>, vector<8x128xf32> -> vector<8x128xf32>
    %180 = arith.addf %177, %178 : vector<8x128xf32>
    %181 = arith.negf %180 : vector<8x128xf32>
    %182 = math.exp %181 : vector<8x128xf32>
    %cst_44 = arith.constant 1.000000e+00 : f32
    %183 = vector.broadcast %cst_44 : f32 to vector<8x128xf32>
    %184 = arith.addf %183, %182 : vector<8x128xf32>
    %185 = arith.divf %183, %184 : vector<8x128xf32>
    %186 = vector.extract_strided_slice %185 {offsets = [0, 0], sizes = [8, 32], strides = [1, 1]} : vector<8x128xf32> to vector<8x32xf32>
    %187 = vector.extract_strided_slice %185 {offsets = [0, 32], sizes = [8, 32], strides = [1, 1]} : vector<8x128xf32> to vector<8x32xf32>
    %188 = vector.extract_strided_slice %185 {offsets = [0, 96], sizes = [8, 32], strides = [1, 1]} : vector<8x128xf32> to vector<8x32xf32>
    %189 = vector.extract_strided_slice %180 {offsets = [0, 64], sizes = [8, 32], strides = [1, 1]} : vector<8x128xf32> to vector<8x32xf32>
    %190 = math.tanh %189 : vector<8x32xf32>
    %191 = arith.mulf %187, %155 : vector<8x32xf32>
    %192 = arith.mulf %186, %190 : vector<8x32xf32>
    %193 = arith.addf %191, %192 : vector<8x32xf32>
    %194 = math.tanh %193 : vector<8x32xf32>
    %195 = arith.mulf %188, %194 : vector<8x32xf32>
    %cst_45 = arith.constant dense<0.000000e+00> : vector<8x128xf32>
    %196 = tpu.matmul %195, %14, %cst_45 {dimension_numbers = #tpu.dot_dimension_numbers<[1], [0], [0], [1], [0, 0, 1, 1], [], []>} : vector<8x32xf32>, vector<32x128xf32>, vector<8x128xf32> -> vector<8x128xf32>
    %197 = arith.addf %179, %196 : vector<8x128xf32>
    %198 = arith.addf %197, %17 : vector<8x128xf32>
    %199 = arith.negf %198 : vector<8x128xf32>
    %200 = math.exp %199 : vector<8x128xf32>
    %cst_46 = arith.constant 1.000000e+00 : f32
    %201 = vector.broadcast %cst_46 : f32 to vector<8x128xf32>
    %202 = arith.addf %201, %200 : vector<8x128xf32>
    %203 = arith.divf %201, %202 : vector<8x128xf32>
    %204 = vector.extract_strided_slice %203 {offsets = [0, 0], sizes = [8, 32], strides = [1, 1]} : vector<8x128xf32> to vector<8x32xf32>
    %205 = vector.extract_strided_slice %203 {offsets = [0, 32], sizes = [8, 32], strides = [1, 1]} : vector<8x128xf32> to vector<8x32xf32>
    %206 = vector.extract_strided_slice %203 {offsets = [0, 96], sizes = [8, 32], strides = [1, 1]} : vector<8x128xf32> to vector<8x32xf32>
    %207 = vector.extract_strided_slice %198 {offsets = [0, 64], sizes = [8, 32], strides = [1, 1]} : vector<8x128xf32> to vector<8x32xf32>
    %208 = math.tanh %207 : vector<8x32xf32>
    %209 = arith.mulf %205, %173 : vector<8x32xf32>
    %210 = arith.mulf %204, %208 : vector<8x32xf32>
    %211 = arith.addf %209, %210 : vector<8x32xf32>
    %212 = math.tanh %211 : vector<8x32xf32>
    %213 = arith.mulf %206, %212 : vector<8x32xf32>
    %214 = vector.extract_strided_slice %8 {offsets = [5, 0, 0], sizes = [1, 8, 128], strides = [1, 1, 1]} : vector<8x8x128xf32> to vector<1x8x128xf32>
    %215 = vector.shape_cast %214 : vector<1x8x128xf32> to vector<8x128xf32>
    %cst_47 = arith.constant dense<0.000000e+00> : vector<8x128xf32>
    %216 = tpu.matmul %195, %10, %cst_47 {dimension_numbers = #tpu.dot_dimension_numbers<[1], [0], [0], [1], [0, 0, 1, 1], [], []>} : vector<8x32xf32>, vector<32x128xf32>, vector<8x128xf32> -> vector<8x128xf32>
    %cst_48 = arith.constant dense<0.000000e+00> : vector<8x128xf32>
    %217 = tpu.matmul %213, %12, %cst_48 {dimension_numbers = #tpu.dot_dimension_numbers<[1], [0], [0], [1], [0, 0, 1, 1], [], []>} : vector<8x32xf32>, vector<32x128xf32>, vector<8x128xf32> -> vector<8x128xf32>
    %218 = arith.addf %215, %216 : vector<8x128xf32>
    %219 = arith.negf %218 : vector<8x128xf32>
    %220 = math.exp %219 : vector<8x128xf32>
    %cst_49 = arith.constant 1.000000e+00 : f32
    %221 = vector.broadcast %cst_49 : f32 to vector<8x128xf32>
    %222 = arith.addf %221, %220 : vector<8x128xf32>
    %223 = arith.divf %221, %222 : vector<8x128xf32>
    %224 = vector.extract_strided_slice %223 {offsets = [0, 0], sizes = [8, 32], strides = [1, 1]} : vector<8x128xf32> to vector<8x32xf32>
    %225 = vector.extract_strided_slice %223 {offsets = [0, 32], sizes = [8, 32], strides = [1, 1]} : vector<8x128xf32> to vector<8x32xf32>
    %226 = vector.extract_strided_slice %223 {offsets = [0, 96], sizes = [8, 32], strides = [1, 1]} : vector<8x128xf32> to vector<8x32xf32>
    %227 = vector.extract_strided_slice %218 {offsets = [0, 64], sizes = [8, 32], strides = [1, 1]} : vector<8x128xf32> to vector<8x32xf32>
    %228 = math.tanh %227 : vector<8x32xf32>
    %229 = arith.mulf %225, %193 : vector<8x32xf32>
    %230 = arith.mulf %224, %228 : vector<8x32xf32>
    %231 = arith.addf %229, %230 : vector<8x32xf32>
    %232 = math.tanh %231 : vector<8x32xf32>
    %233 = arith.mulf %226, %232 : vector<8x32xf32>
    %cst_50 = arith.constant dense<0.000000e+00> : vector<8x128xf32>
    %234 = tpu.matmul %233, %14, %cst_50 {dimension_numbers = #tpu.dot_dimension_numbers<[1], [0], [0], [1], [0, 0, 1, 1], [], []>} : vector<8x32xf32>, vector<32x128xf32>, vector<8x128xf32> -> vector<8x128xf32>
    %235 = arith.addf %217, %234 : vector<8x128xf32>
    %236 = arith.addf %235, %17 : vector<8x128xf32>
    %237 = arith.negf %236 : vector<8x128xf32>
    %238 = math.exp %237 : vector<8x128xf32>
    %cst_51 = arith.constant 1.000000e+00 : f32
    %239 = vector.broadcast %cst_51 : f32 to vector<8x128xf32>
    %240 = arith.addf %239, %238 : vector<8x128xf32>
    %241 = arith.divf %239, %240 : vector<8x128xf32>
    %242 = vector.extract_strided_slice %241 {offsets = [0, 0], sizes = [8, 32], strides = [1, 1]} : vector<8x128xf32> to vector<8x32xf32>
    %243 = vector.extract_strided_slice %241 {offsets = [0, 32], sizes = [8, 32], strides = [1, 1]} : vector<8x128xf32> to vector<8x32xf32>
    %244 = vector.extract_strided_slice %241 {offsets = [0, 96], sizes = [8, 32], strides = [1, 1]} : vector<8x128xf32> to vector<8x32xf32>
    %245 = vector.extract_strided_slice %236 {offsets = [0, 64], sizes = [8, 32], strides = [1, 1]} : vector<8x128xf32> to vector<8x32xf32>
    %246 = math.tanh %245 : vector<8x32xf32>
    %247 = arith.mulf %243, %211 : vector<8x32xf32>
    %248 = arith.mulf %242, %246 : vector<8x32xf32>
    %249 = arith.addf %247, %248 : vector<8x32xf32>
    %250 = math.tanh %249 : vector<8x32xf32>
    %251 = arith.mulf %244, %250 : vector<8x32xf32>
    %252 = vector.extract_strided_slice %8 {offsets = [6, 0, 0], sizes = [1, 8, 128], strides = [1, 1, 1]} : vector<8x8x128xf32> to vector<1x8x128xf32>
    %253 = vector.shape_cast %252 : vector<1x8x128xf32> to vector<8x128xf32>
    %cst_52 = arith.constant dense<0.000000e+00> : vector<8x128xf32>
    %254 = tpu.matmul %233, %10, %cst_52 {dimension_numbers = #tpu.dot_dimension_numbers<[1], [0], [0], [1], [0, 0, 1, 1], [], []>} : vector<8x32xf32>, vector<32x128xf32>, vector<8x128xf32> -> vector<8x128xf32>
    %cst_53 = arith.constant dense<0.000000e+00> : vector<8x128xf32>
    %255 = tpu.matmul %251, %12, %cst_53 {dimension_numbers = #tpu.dot_dimension_numbers<[1], [0], [0], [1], [0, 0, 1, 1], [], []>} : vector<8x32xf32>, vector<32x128xf32>, vector<8x128xf32> -> vector<8x128xf32>
    %256 = arith.addf %253, %254 : vector<8x128xf32>
    %257 = arith.negf %256 : vector<8x128xf32>
    %258 = math.exp %257 : vector<8x128xf32>
    %cst_54 = arith.constant 1.000000e+00 : f32
    %259 = vector.broadcast %cst_54 : f32 to vector<8x128xf32>
    %260 = arith.addf %259, %258 : vector<8x128xf32>
    %261 = arith.divf %259, %260 : vector<8x128xf32>
    %262 = vector.extract_strided_slice %261 {offsets = [0, 0], sizes = [8, 32], strides = [1, 1]} : vector<8x128xf32> to vector<8x32xf32>
    %263 = vector.extract_strided_slice %261 {offsets = [0, 32], sizes = [8, 32], strides = [1, 1]} : vector<8x128xf32> to vector<8x32xf32>
    %264 = vector.extract_strided_slice %261 {offsets = [0, 96], sizes = [8, 32], strides = [1, 1]} : vector<8x128xf32> to vector<8x32xf32>
    %265 = vector.extract_strided_slice %256 {offsets = [0, 64], sizes = [8, 32], strides = [1, 1]} : vector<8x128xf32> to vector<8x32xf32>
    %266 = math.tanh %265 : vector<8x32xf32>
    %267 = arith.mulf %263, %231 : vector<8x32xf32>
    %268 = arith.mulf %262, %266 : vector<8x32xf32>
    %269 = arith.addf %267, %268 : vector<8x32xf32>
    %270 = math.tanh %269 : vector<8x32xf32>
    %271 = arith.mulf %264, %270 : vector<8x32xf32>
    %cst_55 = arith.constant dense<0.000000e+00> : vector<8x128xf32>
    %272 = tpu.matmul %271, %14, %cst_55 {dimension_numbers = #tpu.dot_dimension_numbers<[1], [0], [0], [1], [0, 0, 1, 1], [], []>} : vector<8x32xf32>, vector<32x128xf32>, vector<8x128xf32> -> vector<8x128xf32>
    %273 = arith.addf %255, %272 : vector<8x128xf32>
    %274 = arith.addf %273, %17 : vector<8x128xf32>
    %275 = arith.negf %274 : vector<8x128xf32>
    %276 = math.exp %275 : vector<8x128xf32>
    %cst_56 = arith.constant 1.000000e+00 : f32
    %277 = vector.broadcast %cst_56 : f32 to vector<8x128xf32>
    %278 = arith.addf %277, %276 : vector<8x128xf32>
    %279 = arith.divf %277, %278 : vector<8x128xf32>
    %280 = vector.extract_strided_slice %279 {offsets = [0, 0], sizes = [8, 32], strides = [1, 1]} : vector<8x128xf32> to vector<8x32xf32>
    %281 = vector.extract_strided_slice %279 {offsets = [0, 32], sizes = [8, 32], strides = [1, 1]} : vector<8x128xf32> to vector<8x32xf32>
    %282 = vector.extract_strided_slice %279 {offsets = [0, 96], sizes = [8, 32], strides = [1, 1]} : vector<8x128xf32> to vector<8x32xf32>
    %283 = vector.extract_strided_slice %274 {offsets = [0, 64], sizes = [8, 32], strides = [1, 1]} : vector<8x128xf32> to vector<8x32xf32>
    %284 = math.tanh %283 : vector<8x32xf32>
    %285 = arith.mulf %281, %249 : vector<8x32xf32>
    %286 = arith.mulf %280, %284 : vector<8x32xf32>
    %287 = arith.addf %285, %286 : vector<8x32xf32>
    %288 = math.tanh %287 : vector<8x32xf32>
    %289 = arith.mulf %282, %288 : vector<8x32xf32>
    %290 = vector.extract_strided_slice %8 {offsets = [7, 0, 0], sizes = [1, 8, 128], strides = [1, 1, 1]} : vector<8x8x128xf32> to vector<1x8x128xf32>
    %291 = vector.shape_cast %290 : vector<1x8x128xf32> to vector<8x128xf32>
    %cst_57 = arith.constant dense<0.000000e+00> : vector<8x128xf32>
    %292 = tpu.matmul %271, %10, %cst_57 {dimension_numbers = #tpu.dot_dimension_numbers<[1], [0], [0], [1], [0, 0, 1, 1], [], []>} : vector<8x32xf32>, vector<32x128xf32>, vector<8x128xf32> -> vector<8x128xf32>
    %cst_58 = arith.constant dense<0.000000e+00> : vector<8x128xf32>
    %293 = tpu.matmul %289, %12, %cst_58 {dimension_numbers = #tpu.dot_dimension_numbers<[1], [0], [0], [1], [0, 0, 1, 1], [], []>} : vector<8x32xf32>, vector<32x128xf32>, vector<8x128xf32> -> vector<8x128xf32>
    %294 = arith.addf %291, %292 : vector<8x128xf32>
    %295 = arith.negf %294 : vector<8x128xf32>
    %296 = math.exp %295 : vector<8x128xf32>
    %cst_59 = arith.constant 1.000000e+00 : f32
    %297 = vector.broadcast %cst_59 : f32 to vector<8x128xf32>
    %298 = arith.addf %297, %296 : vector<8x128xf32>
    %299 = arith.divf %297, %298 : vector<8x128xf32>
    %300 = vector.extract_strided_slice %299 {offsets = [0, 0], sizes = [8, 32], strides = [1, 1]} : vector<8x128xf32> to vector<8x32xf32>
    %301 = vector.extract_strided_slice %299 {offsets = [0, 32], sizes = [8, 32], strides = [1, 1]} : vector<8x128xf32> to vector<8x32xf32>
    %302 = vector.extract_strided_slice %299 {offsets = [0, 96], sizes = [8, 32], strides = [1, 1]} : vector<8x128xf32> to vector<8x32xf32>
    %303 = vector.extract_strided_slice %294 {offsets = [0, 64], sizes = [8, 32], strides = [1, 1]} : vector<8x128xf32> to vector<8x32xf32>
    %304 = math.tanh %303 : vector<8x32xf32>
    %305 = arith.mulf %301, %269 : vector<8x32xf32>
    %306 = arith.mulf %300, %304 : vector<8x32xf32>
    %307 = arith.addf %305, %306 : vector<8x32xf32>
    %308 = math.tanh %307 : vector<8x32xf32>
    %309 = arith.mulf %302, %308 : vector<8x32xf32>
    %cst_60 = arith.constant dense<0.000000e+00> : vector<8x128xf32>
    %310 = tpu.matmul %309, %14, %cst_60 {dimension_numbers = #tpu.dot_dimension_numbers<[1], [0], [0], [1], [0, 0, 1, 1], [], []>} : vector<8x32xf32>, vector<32x128xf32>, vector<8x128xf32> -> vector<8x128xf32>
    %311 = arith.addf %293, %310 : vector<8x128xf32>
    %312 = arith.addf %311, %17 : vector<8x128xf32>
    %313 = arith.negf %312 : vector<8x128xf32>
    %314 = math.exp %313 : vector<8x128xf32>
    %cst_61 = arith.constant 1.000000e+00 : f32
    %315 = vector.broadcast %cst_61 : f32 to vector<8x128xf32>
    %316 = arith.addf %315, %314 : vector<8x128xf32>
    %317 = arith.divf %315, %316 : vector<8x128xf32>
    %318 = vector.extract_strided_slice %317 {offsets = [0, 0], sizes = [8, 32], strides = [1, 1]} : vector<8x128xf32> to vector<8x32xf32>
    %319 = vector.extract_strided_slice %317 {offsets = [0, 32], sizes = [8, 32], strides = [1, 1]} : vector<8x128xf32> to vector<8x32xf32>
    %320 = vector.extract_strided_slice %317 {offsets = [0, 96], sizes = [8, 32], strides = [1, 1]} : vector<8x128xf32> to vector<8x32xf32>
    %321 = vector.extract_strided_slice %312 {offsets = [0, 64], sizes = [8, 32], strides = [1, 1]} : vector<8x128xf32> to vector<8x32xf32>
    %322 = math.tanh %321 : vector<8x32xf32>
    %323 = arith.mulf %319, %287 : vector<8x32xf32>
    %324 = arith.mulf %318, %322 : vector<8x32xf32>
    %325 = arith.addf %323, %324 : vector<8x32xf32>
    %326 = math.tanh %325 : vector<8x32xf32>
    %327 = arith.mulf %320, %326 : vector<8x32xf32>
    %328 = tpu.concatenate %61, %99, %137, %175, %213, %251, %289, %327 in 0 : vector<8x32xf32>, vector<8x32xf32>, vector<8x32xf32>, vector<8x32xf32>, vector<8x32xf32>, vector<8x32xf32>, vector<8x32xf32>, vector<8x32xf32> -> vector<64x32xf32>
    %cst_62 = arith.constant dense<0.000000e+00> : vector<64x128xf32>
    %329 = tpu.matmul %328, %18, %cst_62 {dimension_numbers = #tpu.dot_dimension_numbers<[1], [0], [0], [1], [0, 0, 1, 1], [], []>} : vector<64x32xf32>, vector<32x128xf32>, vector<64x128xf32> -> vector<64x128xf32>
    %330 = vector.broadcast %19 : vector<1x128xf32> to vector<64x128xf32>
    %331 = arith.addf %329, %330 : vector<64x128xf32>
    %332 = vector.shape_cast %331 : vector<64x128xf32> to vector<8x8x128xf32>
    %c0_63 = arith.constant 0 : index
    %c0_64 = arith.constant 0 : index
    %c0_65 = arith.constant 0 : index
    %333 = vector.load %arg8[%c0_63, %c0_64, %c0_65] : memref<8x8x128xf32, #tpu.memory_space<vmem>>, vector<8x8x128xf32>
    tpu.vector_store %arg8[%c0_63, %c0_64, %c0_65], %332 {strides = array<i32>} : memref<8x8x128xf32, #tpu.memory_space<vmem>>, vector<8x8x128xf32>,
    %334 = vector.shape_cast %309 : vector<8x32xf32> to vector<1x8x32xf32>
    %335 = vector.shape_cast %327 : vector<8x32xf32> to vector<1x8x32xf32>
    %336 = tpu.concatenate %334, %335 in 0 : vector<1x8x32xf32>, vector<1x8x32xf32> -> vector<2x8x32xf32>
    %c0_66 = arith.constant 0 : index
    %c0_67 = arith.constant 0 : index
    %c0_68 = arith.constant 0 : index
    %337 = vector.load %arg9[%c0_66, %c0_67, %c0_68] : memref<2x8x32xf32, #tpu.memory_space<vmem>>, vector<2x8x32xf32>
    tpu.vector_store %arg9[%c0_66, %c0_67, %c0_68], %336 {strides = array<i32>} : memref<2x8x32xf32, #tpu.memory_space<vmem>>, vector<2x8x32xf32>,
    %338 = vector.shape_cast %307 : vector<8x32xf32> to vector<1x8x32xf32>
    %339 = vector.shape_cast %325 : vector<8x32xf32> to vector<1x8x32xf32>
    %340 = tpu.concatenate %338, %339 in 0 : vector<1x8x32xf32>, vector<1x8x32xf32> -> vector<2x8x32xf32>
    %c0_69 = arith.constant 0 : index
    %c0_70 = arith.constant 0 : index
    %c0_71 = arith.constant 0 : index
    %341 = vector.load %arg10[%c0_69, %c0_70, %c0_71] : memref<2x8x32xf32, #tpu.memory_space<vmem>>, vector<2x8x32xf32>
    tpu.vector_store %arg10[%c0_69, %c0_70, %c0_71], %340 {strides = array<i32>} : memref<2x8x32xf32, #tpu.memory_space<vmem>>, vector<2x8x32xf32>,
    return
  }
  func.func @transform_0(%arg0: i32) -> (i32, i32, i32) {
    %c0_i32 = arith.constant 0 : i32
    %c0_i32_0 = arith.constant 0 : i32
    %c0_i32_1 = arith.constant 0 : i32
    return %c0_i32, %arg0, %c0_i32_0 : i32, i32, i32
  }
  func.func @transform_1(%arg0: i32) -> (i32, i32) {
    %c0_i32 = arith.constant 0 : i32
    %c0_i32_0 = arith.constant 0 : i32
    %c0_i32_1 = arith.constant 0 : i32
    return %c0_i32, %c0_i32_0 : i32, i32
  }
  func.func @transform_2(%arg0: i32) -> (i32, i32, i32) {
    %c0_i32 = arith.constant 0 : i32
    %c0_i32_0 = arith.constant 0 : i32
    %c0_i32_1 = arith.constant 0 : i32
    %c0_i32_2 = arith.constant 0 : i32
    return %c0_i32, %c0_i32_0, %c0_i32_1 : i32, i32, i32
  }
  func.func @transform_3(%arg0: i32) -> (i32, i32, i32) {
    %c0_i32 = arith.constant 0 : i32
    %c0_i32_0 = arith.constant 0 : i32
    %c0_i32_1 = arith.constant 0 : i32
    %c0_i32_2 = arith.constant 0 : i32
    return %c0_i32, %c0_i32_0, %c0_i32_1 : i32, i32, i32
  }
  func.func @transform_4(%arg0: i32) -> (i32, i32) {
    %c0_i32 = arith.constant 0 : i32
    %c0_i32_0 = arith.constant 0 : i32
    %c0_i32_1 = arith.constant 0 : i32
    return %c0_i32, %c0_i32_0 : i32, i32
  }
  func.func @transform_5(%arg0: i32) -> (i32, i32) {
    %c0_i32 = arith.constant 0 : i32
    %c0_i32_0 = arith.constant 0 : i32
    %c0_i32_1 = arith.constant 0 : i32
    return %c0_i32, %c0_i32_0 : i32, i32
  }
  func.func @transform_6(%arg0: i32) -> (i32, i32) {
    %c0_i32 = arith.constant 0 : i32
    %c0_i32_0 = arith.constant 0 : i32
    %c0_i32_1 = arith.constant 0 : i32
    return %c0_i32, %c0_i32_0 : i32, i32
  }
  func.func @transform_7(%arg0: i32) -> (i32, i32, i32) {
    %c0_i32 = arith.constant 0 : i32
    %c0_i32_0 = arith.constant 0 : i32
    %c0_i32_1 = arith.constant 0 : i32
    return %c0_i32, %arg0, %c0_i32_0 : i32, i32, i32
  }
  func.func @transform_8(%arg0: i32) -> (i32, i32, i32) {
    %c0_i32 = arith.constant 0 : i32
    %c0_i32_0 = arith.constant 0 : i32
    %c0_i32_1 = arith.constant 0 : i32
    return %c0_i32, %arg0, %c0_i32_0 : i32, i32, i32
  }
  func.func @transform_9(%arg0: i32) -> (i32, i32, i32) {
    %c0_i32 = arith.constant 0 : i32
    %c0_i32_0 = arith.constant 0 : i32
    %c0_i32_1 = arith.constant 0 : i32
    return %c0_i32, %arg0, %c0_i32_0 : i32, i32, i32
  }
}

</mosaic_0001>

<llo_original>
// kernel: tpu_custom_call.1
$region0: #{tpu_custom_call.1}
  #allocation0 [shape = 'u32[]', space=smem, size = 0x4, offset = 0x4, fixed_abs, tag = 'smem constant byte address 0x4 - core index']
  #allocation1 [shape = 'u32[144,128]{1,0:T(1,128)}', space=vmem, size = 0x12000, scoped, tag = 'internal scratch']
  %s0 = inlined_call_operand.hbm [shape: f32[8,8,32], index: 0, kind: input, shape index: {}]
  %s1 = inlined_call_operand.hbm [shape: f32[32,128], index: 1, kind: input, shape index: {}]
  %s2 = inlined_call_operand.hbm [shape: f32[2,32,128], index: 2, kind: input, shape index: {}]
  %s3 = inlined_call_operand.hbm [shape: f32[1,32,128], index: 3, kind: input, shape index: {}]
  %s4 = inlined_call_operand.vmem [shape: f32[2,128], index: 4, kind: input, shape index: {}]
  %s5 = inlined_call_operand.hbm [shape: f32[32,128], index: 5, kind: input, shape index: {}]
  %s6 = inlined_call_operand.vmem [shape: f32[1,128], index: 6, kind: input, shape index: {}]
  %s7 = inlined_call_operand.hbm [shape: f32[8,8,128], index: 7, kind: output, shape index: {0}]
  %s8 = inlined_call_operand.hbm [shape: f32[2,8,32], index: 8, kind: output, shape index: {1}]
  %s9 = inlined_call_operand.hbm [shape: f32[2,8,32], index: 9, kind: output, shape index: {2}]
  %10 = xla_tuple %s7, %s8, %s9
  %s11 = sld [smem:[#allocation0]]
  $region74: #{tpu_custom_call.1} parent=0
    _
  %s13 = ssub.s32 1, %s11
  %s14 = scalar_select 0, %s13, %s11
  $region1: #{tpu_custom_call.1} parent=0
    #allocation2 [shape = 'u8[32768]{0}', space=vmem, size = 0x8000, scoped, tag = 'input window, operand 0, single buffered']
    #allocation3 [shape = 's32[1]{0}', space=sflag, size = 0x4, scoped, tag = 'scoped memory for tpu_custom_call.1']
    #allocation4 [shape = 's32[1]{0}', space=sflag, size = 0x4, scoped, tag = 'scoped memory for tpu_custom_call.1']
    #allocation5 [shape = 'u8[16384]{0}', space=vmem, size = 0x4000, scoped, tag = 'input window, operand 1, single buffered']
    #allocation6 [shape = 's32[1]{0}', space=sflag, size = 0x4, scoped, tag = 'scoped memory for tpu_custom_call.1']
    #allocation7 [shape = 'u8[32768]{0}', space=vmem, size = 0x8000, scoped, tag = 'input window, operand 2, single buffered']
    #allocation8 [shape = 'u8[16384]{0}', space=vmem, size = 0x4000, scoped, tag = 'input window, operand 3, single buffered']
    #allocation9 [shape = 's32[1]{0}', space=sflag, size = 0x4, scoped, tag = 'scoped memory for tpu_custom_call.1']
    #allocation10 [shape = 'u8[16384]{0}', space=vmem, size = 0x4000, scoped, tag = 'input window, operand 5, single buffered']
    #allocation11 [shape = 'u8[32768]{0}', space=vmem, size = 0x8000, scoped, tag = 'output window, operand 0, single buffered']
    #allocation12 [shape = 'u8[8192]{0}', space=vmem, size = 0x2000, scoped, tag = 'output window, operand 1, single buffered']
    #allocation13 [shape = 's32[1]{0}', space=sflag, size = 0x4, scoped, tag = 'scoped memory for tpu_custom_call.1']
    #allocation14 [shape = 'u8[8192]{0}', space=vmem, size = 0x2000, scoped, tag = 'output window, operand 2, single buffered']
    %15 = vsyncpa [#allocation3], 0
    %16 = vsyncpa [#allocation6], 0
    %17 = vsyncpa [#allocation9], 0
    %18 = vsyncpa [#allocation4], 0
    %19 = vsyncpa [#allocation13], 0
    // Predicated region
    $region2: #{tpu_custom_call.1} parent=1 // pred_check
      _
    $region3: #{tpu_custom_call.1} parent=1 // pred_check_branch
      %21 = sbr.rel (0) target = $region5
    $region4: #{tpu_custom_call.1} parent=1 // pred_region
      %s23 = ssub.s32 1024, 1024
      %24 = vsyncadd [#allocation3], %s23
      %s25 = sshll.u32 [#allocation2], 4
      %s26 = int_to_ptr.vmem [resolvable:$true] %s25
      %31 = dma.hbm_to_vmem [thread:$0]  %s0, 1024, %s26, [#allocation3], 128, 128, 8
    $region5: #{tpu_custom_call.1} parent=1 // pred_fallthru
      _
    // Predicated region
    $region6: #{tpu_custom_call.1} parent=1 // pred_check
      _
    $region7: #{tpu_custom_call.1} parent=1 // pred_check_branch
      %33 = sbr.rel (0) target = $region9
    $region8: #{tpu_custom_call.1} parent=1 // pred_region
      %s35 = ssub.s32 512, 512
      %36 = vsyncadd [#allocation6], %s35
      %s37 = sshll.u32 [#allocation5], 4
      %s38 = int_to_ptr.vmem [resolvable:$true] %s37
      %43 = dma.hbm_to_vmem [thread:$0]  %s1, 512, %s38, [#allocation6], 128, 128, 8
    $region9: #{tpu_custom_call.1} parent=1 // pred_fallthru
      _
    // Predicated region
    $region10: #{tpu_custom_call.1} parent=1 // pred_check
      _
    $region11: #{tpu_custom_call.1} parent=1 // pred_check_branch
      %45 = sbr.rel (0) target = $region13
    $region12: #{tpu_custom_call.1} parent=1 // pred_region
      %s47 = ssub.s32 1024, 1024
      %48 = vsyncadd [#allocation6], %s47
      %s49 = sshll.u32 [#allocation7], 4
      %s50 = int_to_ptr.vmem [resolvable:$true] %s49
      %55 = dma.hbm_to_vmem [thread:$0]  %s2, 1024, %s50, [#allocation6], 128, 128, 8
    $region13: #{tpu_custom_call.1} parent=1 // pred_fallthru
      _
    // Predicated region
    $region14: #{tpu_custom_call.1} parent=1 // pred_check
      _
    $region15: #{tpu_custom_call.1} parent=1 // pred_check_branch
      %57 = sbr.rel (0) target = $region17
    $region16: #{tpu_custom_call.1} parent=1 // pred_region
      %s59 = ssub.s32 512, 512
      %60 = vsyncadd [#allocation9], %s59
      %s61 = sshll.u32 [#allocation8], 4
      %s62 = int_to_ptr.vmem [resolvable:$true] %s61
      %67 = dma.hbm_to_vmem [thread:$0]  %s3, 512, %s62, [#allocation9], 128, 128, 8
    $region17: #{tpu_custom_call.1} parent=1 // pred_fallthru
      _
    // Predicated region
    $region18: #{tpu_custom_call.1} parent=1 // pred_check
      _
    $region19: #{tpu_custom_call.1} parent=1 // pred_check_branch
      %69 = sbr.rel (0) target = $region21
    $region20: #{tpu_custom_call.1} parent=1 // pred_region
      _
    $region21: #{tpu_custom_call.1} parent=1 // pred_fallthru
      _
    // Predicated region
    $region22: #{tpu_custom_call.1} parent=1 // pred_check
      _
    $region23: #{tpu_custom_call.1} parent=1 // pred_check_branch
      %71 = sbr.rel (0) target = $region25
    $region24: #{tpu_custom_call.1} parent=1 // pred_region
      %s73 = ssub.s32 512, 512
      %74 = vsyncadd [#allocation9], %s73
      %s75 = sshll.u32 [#allocation10], 4
      %s76 = int_to_ptr.vmem [resolvable:$true] %s75
      %81 = dma.hbm_to_vmem [thread:$0]  %s5, 512, %s76, [#allocation9], 128, 128, 8
    $region25: #{tpu_custom_call.1} parent=1 // pred_fallthru
      _
    // Predicated region
    $region26: #{tpu_custom_call.1} parent=1 // pred_check
      _
    $region27: #{tpu_custom_call.1} parent=1 // pred_check_branch
      %83 = sbr.rel (0) target = $region29
    $region28: #{tpu_custom_call.1} parent=1 // pred_region
      _
    $region29: #{tpu_custom_call.1} parent=1 // pred_fallthru
      _
    // Predicated region
    $region30: #{tpu_custom_call.1} parent=1 // pred_check
      _
    $region31: #{tpu_custom_call.1} parent=1 // pred_check_branch
      %85 = sbr.rel (0) target = $region33
    $region32: #{tpu_custom_call.1} parent=1 // pred_region
      %86 = dma.done [#allocation3], 1024
    $region33: #{tpu_custom_call.1} parent=1 // pred_fallthru
      _
    // Predicated region
    $region34: #{tpu_custom_call.1} parent=1 // pred_check
      _
    $region35: #{tpu_custom_call.1} parent=1 // pred_check_branch
      %88 = sbr.rel (0) target = $region37
    $region36: #{tpu_custom_call.1} parent=1 // pred_region
      %89 = dma.done [#allocation6], 512
    $region37: #{tpu_custom_call.1} parent=1 // pred_fallthru
      _
    // Predicated region
    $region38: #{tpu_custom_call.1} parent=1 // pred_check
      _
    $region39: #{tpu_custom_call.1} parent=1 // pred_check_branch
      %91 = sbr.rel (0) target = $region41
    $region40: #{tpu_custom_call.1} parent=1 // pred_region
      %92 = dma.done [#allocation6], 1024
    $region41: #{tpu_custom_call.1} parent=1 // pred_fallthru
      _
    // Predicated region
    $region42: #{tpu_custom_call.1} parent=1 // pred_check
      _
    $region43: #{tpu_custom_call.1} parent=1 // pred_check_branch
      %94 = sbr.rel (0) target = $region45
    $region44: #{tpu_custom_call.1} parent=1 // pred_region
      %95 = dma.done [#allocation9], 512
    $region45: #{tpu_custom_call.1} parent=1 // pred_fallthru
      _
    // Predicated region
    $region46: #{tpu_custom_call.1} parent=1 // pred_check
      _
    $region47: #{tpu_custom_call.1} parent=1 // pred_check_branch
      %97 = sbr.rel (0) target = $region49
    $region48: #{tpu_custom_call.1} parent=1 // pred_region
      %98 = dma.done [#allocation9], 512
    $region49: #{tpu_custom_call.1} parent=1 // pred_fallthru
      _
    %v99 = vld [vmem:[%s4] sm:$0x3]
    %v100 = vld [vmem:[#allocation2] sm:$0xff]
    %v101 = vld [vmem:[#allocation2 + $0x8] sm:$0xff]
    %v102 = vld [vmem:[#allocation2 + $0x10] sm:$0xff]
    %v103 = vld [vmem:[#allocation2 + $0x18] sm:$0xff]
    %v104 = vld [vmem:[#allocation2 + $0x20] sm:$0xff]
    %v105 = vld [vmem:[#allocation2 + $0x28] sm:$0xff]
    %v106 = vld [vmem:[#allocation2 + $0x30] sm:$0xff]
    %v107 = vld [vmem:[#allocation2 + $0x38] sm:$0xff]
    %v108 = vld [vmem:[#allocation5] sm:$0xff]
    %v109 = vld [vmem:[#allocation5 + $0x8] sm:$0xff]
    %v110 = vld [vmem:[#allocation5 + $0x10] sm:$0xff]
    %v111 = vld [vmem:[#allocation5 + $0x18] sm:$0xff]
    %v112 = vlaneseq
    %v113 = vshrl.u32 %v112, 7
    %v114 = vsub.s32 0, %v113
    %v115 = vrot.slane %v99, %v114
    %vm116 = vcmask 261120
    %v118 = vsel %vm116, %v100, 0
    %v121 = vsel %vm116, %v101, 0
    %v124 = vsel %vm116, %v102, 0
    %v127 = vsel %vm116, %v103, 0
    %v130 = vsel %vm116, %v104, 0
    %v133 = vsel %vm116, %v105, 0
    %v136 = vsel %vm116, %v106, 0
    %v139 = vsel %vm116, %v107, 0
    %141 = vmatprep.subr.mxu0 0.0
    %142 = vmatpush1.msra.mxu0 0.0
    %143 = vmatprep.subr.mxu0 0.0
    %144 = vmatpush1.msra.mxu0 0.0
    %145 = vmatprep.subr.mxu0 0.0
    %146 = vmatpush1.msra.mxu0 0.0
    %147 = vmatprep.subr.mxu0 0.0
    %148 = vmatpush1.msra.mxu0 0.0
    %149 = vmatprep.subr.mxu0 0.0
    %150 = vmatpush1.msra.mxu0 0.0
    %151 = vmatprep.subr.mxu0 0.0
    %152 = vmatpush1.msra.mxu0 0.0
    %153 = vmatprep.subr.mxu0 0.0
    %154 = vmatpush1.msra.mxu0 0.0
    %155 = vmatprep.subr.mxu0 0.0
    %156 = vmatpush1.msra.mxu0 0.0
    %157 = vmatprep.subr.mxu0 0.0
    %158 = vmatpush1.msra.mxu0 0.0
    %159 = vmatprep.subr.mxu0 0.0
    %160 = vmatpush1.msra.mxu0 0.0
    %161 = vmatprep.subr.mxu0 0.0
    %162 = vmatpush1.msra.mxu0 0.0
    %163 = vmatprep.subr.mxu0 0.0
    %164 = vmatpush1.msra.mxu0 0.0
    %165 = vmatprep.subr.mxu0 0.0
    %166 = vmatpush1.msra.mxu0 %v111
    %167 = vmatprep.subr.mxu0 0.0
    %168 = vmatpush1.msra.mxu0 %v110
    %169 = vmatprep.subr.mxu0 0.0
    %170 = vmatpush1.msra.mxu0 %v109
    %171 = vmatprep.subr.mxu0 0.0
    %172 = vmatpush1.msra.mxu0 %v108
    %173 = vmatprep.subr.mxu0 0.0
    %174 = vmatpush2.msra.mxu0 0.0
    %175 = vmatprep.subr.mxu0 0.0
    %176 = vmatpush2.msra.mxu0 0.0
    %177 = vmatprep.subr.mxu0 0.0
    %178 = vmatpush2.msra.mxu0 0.0
    %179 = vmatprep.subr.mxu0 0.0
    %180 = vmatpush2.msra.mxu0 0.0
    %181 = vmatprep.subr.mxu0 0.0
    %182 = vmatpush2.msra.mxu0 0.0
    %183 = vmatprep.subr.mxu0 0.0
    %184 = vmatpush2.msra.mxu0 0.0
    %185 = vmatprep.subr.mxu0 0.0
    %186 = vmatpush2.msra.mxu0 0.0
    %187 = vmatprep.subr.mxu0 0.0
    %188 = vmatpush2.msra.mxu0 0.0
    %189 = vmatprep.subr.mxu0 0.0
    %190 = vmatpush2.msra.mxu0 0.0
    %191 = vmatprep.subr.mxu0 0.0
    %192 = vmatpush2.msra.mxu0 0.0
    %193 = vmatprep.subr.mxu0 0.0
    %194 = vmatpush2.msra.mxu0 0.0
    %195 = vmatprep.subr.mxu0 0.0
    %196 = vmatpush2.msra.mxu0 0.0
    %197 = vmatprep.subr.mxu0 0.0
    %198 = vmatpush2.msra.mxu0 0.0
    %199 = vmatprep.subr.mxu0 0.0
    %200 = vmatpush2.msra.mxu0 0.0
    %201 = vmatprep.subr.mxu0 0.0
    %202 = vmatpush2.msra.mxu0 0.0
    %203 = vmatprep.subr.mxu0 0.0
    %204 = vmatpush2.msra.mxu0 0.0
    %205 = vmatprep.mubr.f32.mxu0 0.0
    %206 = vmatmul.mubr.f32.gmra.mxu0 %v118
    %v207 = vpop.f32.mrf.mxu0
    %v208 = vadd.f32 %v115, %v207
    %v209 = vpop.f32.mrf.mxu0
    %210 = vmatprep.mubr.f32.mxu0 0.0
    %211 = vmatmul.mubr.f32.gmra.mxu0 %v121
    %v212 = vpop.f32.mrf.mxu0
    %v213 = vadd.f32 %v115, %v212
    %v214 = vpop.f32.mrf.mxu0
    %215 = vmatprep.mubr.f32.mxu0 0.0
    %216 = vmatmul.mubr.f32.gmra.mxu0 %v124
    %v217 = vpop.f32.mrf.mxu0
    %v218 = vadd.f32 %v115, %v217
    %v219 = vpop.f32.mrf.mxu0
    %220 = vmatprep.mubr.f32.mxu0 0.0
    %221 = vmatmul.mubr.f32.gmra.mxu0 %v127
    %v222 = vpop.f32.mrf.mxu0
    %v223 = vadd.f32 %v115, %v222
    %v224 = vpop.f32.mrf.mxu0
    %225 = vmatprep.mubr.f32.mxu0 0.0
    %226 = vmatmul.mubr.f32.gmra.mxu0 %v130
    %v227 = vpop.f32.mrf.mxu0
    %v228 = vadd.f32 %v115, %v227
    %v229 = vpop.f32.mrf.mxu0
    %230 = vmatprep.mubr.f32.mxu0 0.0
    %231 = vmatmul.mubr.f32.gmra.mxu0 %v133
    %v232 = vpop.f32.mrf.mxu0
    %v233 = vadd.f32 %v115, %v232
    %v234 = vpop.f32.mrf.mxu0
    %235 = vmatprep.mubr.f32.mxu0 0.0
    %236 = vmatmul.mubr.f32.gmra.mxu0 %v136
    %v237 = vpop.f32.mrf.mxu0
    %v238 = vadd.f32 %v115, %v237
    %v239 = vpop.f32.mrf.mxu0
    %240 = vmatprep.mubr.f32.mxu0 0.0
    %241 = vmatmul.mubr.f32.gmra.mxu0 %v139
    %v242 = vpop.f32.mrf.mxu0
    %v243 = vadd.f32 %v115, %v242
    %v244 = vpop.f32.mrf.mxu0
    %245 = vdwg.mxu0
    %v246 = vld [vmem:[#allocation7] sm:$0xff]
    %v247 = vld [vmem:[#allocation7 + $0x8] sm:$0xff]
    %v248 = vld [vmem:[#allocation7 + $0x10] sm:$0xff]
    %v249 = vld [vmem:[#allocation7 + $0x18] sm:$0xff]
    %s250 = scalar_lea.vmem [#allocation7], 32
    %v251 = vld [vmem:[%s250] sm:$0xff]
    %v252 = vld [vmem:[%s250 + $0x8] sm:$0xff]
    %v253 = vld [vmem:[%s250 + $0x10] sm:$0xff]
    %v254 = vld [vmem:[%s250 + $0x18] sm:$0xff]
    %v255 = vld [vmem:[#allocation8] sm:$0xff]
    %v256 = vld [vmem:[#allocation8 + $0x8] sm:$0xff]
    %v257 = vld [vmem:[#allocation8 + $0x10] sm:$0xff]
    %v258 = vld [vmem:[#allocation8 + $0x18] sm:$0xff]
    %v259 = vlaneseq
    %v260 = vshrl.u32 %v259, 7
    %v261 = vsub.s32 1, %v260
    %v262 = vrot.slane %v99, %v261
    %v263 = vld [vmem:[#allocation10] sm:$0xff]
    %v264 = vld [vmem:[#allocation10 + $0x8] sm:$0xff]
    %v265 = vld [vmem:[#allocation10 + $0x10] sm:$0xff]
    %v266 = vld [vmem:[#allocation10 + $0x18] sm:$0xff]
    %v267 = vld [vmem:[%s6] sm:$0x1]
    %v269 = vsel %vm116, 0.0, 0
    %271 = vmatprep.subr.mxu0 0.0
    %272 = vmatpush1.msra.mxu0 0.0
    %273 = vmatprep.subr.mxu0 0.0
    %274 = vmatpush1.msra.mxu0 0.0
    %275 = vmatprep.subr.mxu0 0.0
    %276 = vmatpush1.msra.mxu0 0.0
    %277 = vmatprep.subr.mxu0 0.0
    %278 = vmatpush1.msra.mxu0 0.0
    %279 = vmatprep.subr.mxu0 0.0
    %280 = vmatpush1.msra.mxu0 0.0
    %281 = vmatprep.subr.mxu0 0.0
    %282 = vmatpush1.msra.mxu0 0.0
    %283 = vmatprep.subr.mxu0 0.0
    %284 = vmatpush1.msra.mxu0 0.0
    %285 = vmatprep.subr.mxu0 0.0
    %286 = vmatpush1.msra.mxu0 0.0
    %287 = vmatprep.subr.mxu0 0.0
    %288 = vmatpush1.msra.mxu0 0.0
    %289 = vmatprep.subr.mxu0 0.0
    %290 = vmatpush1.msra.mxu0 0.0
    %291 = vmatprep.subr.mxu0 0.0
    %292 = vmatpush1.msra.mxu0 0.0
    %293 = vmatprep.subr.mxu0 0.0
    %294 = vmatpush1.msra.mxu0 0.0
    %295 = vmatprep.subr.mxu0 0.0
    %296 = vmatpush1.msra.mxu0 %v249
    %297 = vmatprep.subr.mxu0 0.0
    %298 = vmatpush1.msra.mxu0 %v248
    %299 = vmatprep.subr.mxu0 0.0
    %300 = vmatpush1.msra.mxu0 %v247
    %301 = vmatprep.subr.mxu0 0.0
    %302 = vmatpush1.msra.mxu0 %v246
    %303 = vmatprep.subr.mxu0 0.0
    %304 = vmatpush2.msra.mxu0 0.0
    %305 = vmatprep.subr.mxu0 0.0
    %306 = vmatpush2.msra.mxu0 0.0
    %307 = vmatprep.subr.mxu0 0.0
    %308 = vmatpush2.msra.mxu0 0.0
    %309 = vmatprep.subr.mxu0 0.0
    %310 = vmatpush2.msra.mxu0 0.0
    %311 = vmatprep.subr.mxu0 0.0
    %312 = vmatpush2.msra.mxu0 0.0
    %313 = vmatprep.subr.mxu0 0.0
    %314 = vmatpush2.msra.mxu0 0.0
    %315 = vmatprep.subr.mxu0 0.0
    %316 = vmatpush2.msra.mxu0 0.0
    %317 = vmatprep.subr.mxu0 0.0
    %318 = vmatpush2.msra.mxu0 0.0
    %319 = vmatprep.subr.mxu0 0.0
    %320 = vmatpush2.msra.mxu0 0.0
    %321 = vmatprep.subr.mxu0 0.0
    %322 = vmatpush2.msra.mxu0 0.0
    %323 = vmatprep.subr.mxu0 0.0
    %324 = vmatpush2.msra.mxu0 0.0
    %325 = vmatprep.subr.mxu0 0.0
    %326 = vmatpush2.msra.mxu0 0.0
    %327 = vmatprep.subr.mxu0 0.0
    %328 = vmatpush2.msra.mxu0 0.0
    %329 = vmatprep.subr.mxu0 0.0
    %330 = vmatpush2.msra.mxu0 0.0
    %331 = vmatprep.subr.mxu0 0.0
    %332 = vmatpush2.msra.mxu0 0.0
    %333 = vmatprep.subr.mxu0 0.0
    %334 = vmatpush2.msra.mxu0 0.0
    %335 = vmatprep.mubr.f32.mxu0 0.0
    %336 = vmatmul.mubr.f32.gmra.mxu0 %v269
    %v337 = vpop.f32.mrf.mxu0
    %v338 = vadd.f32 0.0, %v337
    %v339 = vpop.f32.mrf.mxu0
    %340 = vdwg.mxu0
    %v341 = vadd.f32 %v208, %v338
    %v342 = vxor.u32 %v341, 2147483648
    %v343 = vmul.f32 %v342, 1.442695
    %v344 = vpow.pop %v343
    %v345 = vadd.f32 %v344, 1.0
    %v346 = vrcp.pop %v345
    %v347 = vmul.f32 1.0, %v346
    %v348 = vtanh.pop %v341
    %v349 = vmul.f32 %v347, 0.0
    %351 = vrot.lane.b32.xlu0 %v348, 64
    %v352 = vpop.permute.xlu0 %351
    %v354 = vmul.f32 %v347, %v352
    %356 = vrot.lane.b32.xlu0 %v354, 32
    %v357 = vpop.permute.xlu0 %356
    %v359 = vadd.f32 %v349, %v357
    %v360 = vtanh.pop %v359
    %362 = vrot.lane.b32.xlu0 %v360, 64
    %v363 = vpop.permute.xlu0 %362
    %v365 = vmul.f32 %v347, %v363
    %367 = vrot.lane.b32.xlu0 %v365, 32
    %v368 = vpop.permute.xlu0 %367
    %v369 = vsel %vm116, %v368, 0
    %371 = vmatprep.subr.mxu0 0.0
    %372 = vmatpush1.msra.mxu0 0.0
    %373 = vmatprep.subr.mxu0 0.0
    %374 = vmatpush1.msra.mxu0 0.0
    %375 = vmatprep.subr.mxu0 0.0
    %376 = vmatpush1.msra.mxu0 0.0
    %377 = vmatprep.subr.mxu0 0.0
    %378 = vmatpush1.msra.mxu0 0.0
    %379 = vmatprep.subr.mxu0 0.0
    %380 = vmatpush1.msra.mxu0 0.0
    %381 = vmatprep.subr.mxu0 0.0
    %382 = vmatpush1.msra.mxu0 0.0
    %383 = vmatprep.subr.mxu0 0.0
    %384 = vmatpush1.msra.mxu0 0.0
    %385 = vmatprep.subr.mxu0 0.0
    %386 = vmatpush1.msra.mxu0 0.0
    %387 = vmatprep.subr.mxu0 0.0
    %388 = vmatpush1.msra.mxu0 0.0
    %389 = vmatprep.subr.mxu0 0.0
    %390 = vmatpush1.msra.mxu0 0.0
    %391 = vmatprep.subr.mxu0 0.0
    %392 = vmatpush1.msra.mxu0 0.0
    %393 = vmatprep.subr.mxu0 0.0
    %394 = vmatpush1.msra.mxu0 0.0
    %395 = vmatprep.subr.mxu0 0.0
    %396 = vmatpush1.msra.mxu0 %v258
    %397 = vmatprep.subr.mxu0 0.0
    %398 = vmatpush1.msra.mxu0 %v257
    %399 = vmatprep.subr.mxu0 0.0
    %400 = vmatpush1.msra.mxu0 %v256
    %401 = vmatprep.subr.mxu0 0.0
    %402 = vmatpush1.msra.mxu0 %v255
    %403 = vmatprep.subr.mxu0 0.0
    %404 = vmatpush2.msra.mxu0 0.0
    %405 = vmatprep.subr.mxu0 0.0
    %406 = vmatpush2.msra.mxu0 0.0
    %407 = vmatprep.subr.mxu0 0.0
    %408 = vmatpush2.msra.mxu0 0.0
    %409 = vmatprep.subr.mxu0 0.0
    %410 = vmatpush2.msra.mxu0 0.0
    %411 = vmatprep.subr.mxu0 0.0
    %412 = vmatpush2.msra.mxu0 0.0
    %413 = vmatprep.subr.mxu0 0.0
    %414 = vmatpush2.msra.mxu0 0.0
    %415 = vmatprep.subr.mxu0 0.0
    %416 = vmatpush2.msra.mxu0 0.0
    %417 = vmatprep.subr.mxu0 0.0
    %418 = vmatpush2.msra.mxu0 0.0
    %419 = vmatprep.subr.mxu0 0.0
    %420 = vmatpush2.msra.mxu0 0.0
    %421 = vmatprep.subr.mxu0 0.0
    %422 = vmatpush2.msra.mxu0 0.0
    %423 = vmatprep.subr.mxu0 0.0
    %424 = vmatpush2.msra.mxu0 0.0
    %425 = vmatprep.subr.mxu0 0.0
    %426 = vmatpush2.msra.mxu0 0.0
    %427 = vmatprep.subr.mxu0 0.0
    %428 = vmatpush2.msra.mxu0 0.0
    %429 = vmatprep.subr.mxu0 0.0
    %430 = vmatpush2.msra.mxu0 0.0
    %431 = vmatprep.subr.mxu0 0.0
    %432 = vmatpush2.msra.mxu0 0.0
    %433 = vmatprep.subr.mxu0 0.0
    %434 = vmatpush2.msra.mxu0 0.0
    %435 = vmatprep.mubr.f32.mxu0 0.0
    %436 = vmatmul.mubr.f32.gmra.mxu0 %v369
    %v437 = vpop.f32.mrf.mxu0
    %v438 = vadd.f32 0.0, %v437
    %v439 = vpop.f32.mrf.mxu0
    %440 = vdwg.mxu0
    %441 = vmatprep.subr.mxu0 0.0
    %442 = vmatpush1.msra.mxu0 0.0
    %443 = vmatprep.subr.mxu0 0.0
    %444 = vmatpush1.msra.mxu0 0.0
    %445 = vmatprep.subr.mxu0 0.0
    %446 = vmatpush1.msra.mxu0 0.0
    %447 = vmatprep.subr.mxu0 0.0
    %448 = vmatpush1.msra.mxu0 0.0
    %449 = vmatprep.subr.mxu0 0.0
    %450 = vmatpush1.msra.mxu0 0.0
    %451 = vmatprep.subr.mxu0 0.0
    %452 = vmatpush1.msra.mxu0 0.0
    %453 = vmatprep.subr.mxu0 0.0
    %454 = vmatpush1.msra.mxu0 0.0
    %455 = vmatprep.subr.mxu0 0.0
    %456 = vmatpush1.msra.mxu0 0.0
    %457 = vmatprep.subr.mxu0 0.0
    %458 = vmatpush1.msra.mxu0 0.0
    %459 = vmatprep.subr.mxu0 0.0
    %460 = vmatpush1.msra.mxu0 0.0
    %461 = vmatprep.subr.mxu0 0.0
    %462 = vmatpush1.msra.mxu0 0.0
    %463 = vmatprep.subr.mxu0 0.0
    %464 = vmatpush1.msra.mxu0 0.0
    %465 = vmatprep.subr.mxu0 0.0
    %466 = vmatpush1.msra.mxu0 %v254
    %467 = vmatprep.subr.mxu0 0.0
    %468 = vmatpush1.msra.mxu0 %v253
    %469 = vmatprep.subr.mxu0 0.0
    %470 = vmatpush1.msra.mxu0 %v252
    %471 = vmatprep.subr.mxu0 0.0
    %472 = vmatpush1.msra.mxu0 %v251
    %473 = vmatprep.subr.mxu0 0.0
    %474 = vmatpush2.msra.mxu0 0.0
    %475 = vmatprep.subr.mxu0 0.0
    %476 = vmatpush2.msra.mxu0 0.0
    %477 = vmatprep.subr.mxu0 0.0
    %478 = vmatpush2.msra.mxu0 0.0
    %479 = vmatprep.subr.mxu0 0.0
    %480 = vmatpush2.msra.mxu0 0.0
    %481 = vmatprep.subr.mxu0 0.0
    %482 = vmatpush2.msra.mxu0 0.0
    %483 = vmatprep.subr.mxu0 0.0
    %484 = vmatpush2.msra.mxu0 0.0
    %485 = vmatprep.subr.mxu0 0.0
    %486 = vmatpush2.msra.mxu0 0.0
    %487 = vmatprep.subr.mxu0 0.0
    %488 = vmatpush2.msra.mxu0 0.0
    %489 = vmatprep.subr.mxu0 0.0
    %490 = vmatpush2.msra.mxu0 0.0
    %491 = vmatprep.subr.mxu0 0.0
    %492 = vmatpush2.msra.mxu0 0.0
    %493 = vmatprep.subr.mxu0 0.0
    %494 = vmatpush2.msra.mxu0 0.0
    %495 = vmatprep.subr.mxu0 0.0
    %496 = vmatpush2.msra.mxu0 0.0
    %497 = vmatprep.subr.mxu0 0.0
    %498 = vmatpush2.msra.mxu0 0.0
    %499 = vmatprep.subr.mxu0 0.0
    %500 = vmatpush2.msra.mxu0 0.0
    %501 = vmatprep.subr.mxu0 0.0
    %502 = vmatpush2.msra.mxu0 0.0
    %503 = vmatprep.subr.mxu0 0.0
    %504 = vmatpush2.msra.mxu0 0.0
    %505 = vmatprep.mubr.f32.mxu0 0.0
    %506 = vmatmul.mubr.f32.gmra.mxu0 %v269
    %v507 = vpop.f32.mrf.mxu0
    %v508 = vadd.f32 %v438, %v507
    %v509 = vpop.f32.mrf.mxu0
    %510 = vdwg.mxu0
    %v511 = vadd.f32 %v508, %v262
    %v512 = vxor.u32 %v511, 2147483648
    %v513 = vmul.f32 %v512, 1.442695
    %v514 = vpow.pop %v513
    %v515 = vadd.f32 %v514, 1.0
    %v516 = vrcp.pop %v515
    %v517 = vmul.f32 1.0, %v516
    %v518 = vtanh.pop %v511
    %v519 = vmul.f32 %v517, 0.0
    %521 = vrot.lane.b32.xlu0 %v518, 64
    %v522 = vpop.permute.xlu0 %521
    %v524 = vmul.f32 %v517, %v522
    %526 = vrot.lane.b32.xlu0 %v524, 32
    %v527 = vpop.permute.xlu0 %526
    %v529 = vadd.f32 %v519, %v527
    %v530 = vtanh.pop %v529
    %532 = vrot.lane.b32.xlu0 %v530, 64
    %v533 = vpop.permute.xlu0 %532
    %v535 = vmul.f32 %v517, %v533
    %536 = vmatprep.subr.mxu0 0.0
    %537 = vmatpush1.msra.mxu0 0.0
    %538 = vmatprep.subr.mxu0 0.0
    %539 = vmatpush1.msra.mxu0 0.0
    %540 = vmatprep.subr.mxu0 0.0
    %541 = vmatpush1.msra.mxu0 0.0
    %542 = vmatprep.subr.mxu0 0.0
    %543 = vmatpush1.msra.mxu0 0.0
    %544 = vmatprep.subr.mxu0 0.0
    %545 = vmatpush1.msra.mxu0 0.0
    %546 = vmatprep.subr.mxu0 0.0
    %547 = vmatpush1.msra.mxu0 0.0
    %548 = vmatprep.subr.mxu0 0.0
    %549 = vmatpush1.msra.mxu0 0.0
    %550 = vmatprep.subr.mxu0 0.0
    %551 = vmatpush1.msra.mxu0 0.0
    %552 = vmatprep.subr.mxu0 0.0
    %553 = vmatpush1.msra.mxu0 0.0
    %554 = vmatprep.subr.mxu0 0.0
    %555 = vmatpush1.msra.mxu0 0.0
    %556 = vmatprep.subr.mxu0 0.0
    %557 = vmatpush1.msra.mxu0 0.0
    %558 = vmatprep.subr.mxu0 0.0
    %559 = vmatpush1.msra.mxu0 0.0
    %560 = vmatprep.subr.mxu0 0.0
    %561 = vmatpush1.msra.mxu0 %v249
    %562 = vmatprep.subr.mxu0 0.0
    %563 = vmatpush1.msra.mxu0 %v248
    %564 = vmatprep.subr.mxu0 0.0
    %565 = vmatpush1.msra.mxu0 %v247
    %566 = vmatprep.subr.mxu0 0.0
    %567 = vmatpush1.msra.mxu0 %v246
    %568 = vmatprep.subr.mxu0 0.0
    %569 = vmatpush2.msra.mxu0 0.0
    %570 = vmatprep.subr.mxu0 0.0
    %571 = vmatpush2.msra.mxu0 0.0
    %572 = vmatprep.subr.mxu0 0.0
    %573 = vmatpush2.msra.mxu0 0.0
    %574 = vmatprep.subr.mxu0 0.0
    %575 = vmatpush2.msra.mxu0 0.0
    %576 = vmatprep.subr.mxu0 0.0
    %577 = vmatpush2.msra.mxu0 0.0
    %578 = vmatprep.subr.mxu0 0.0
    %579 = vmatpush2.msra.mxu0 0.0
    %580 = vmatprep.subr.mxu0 0.0
    %581 = vmatpush2.msra.mxu0 0.0
    %582 = vmatprep.subr.mxu0 0.0
    %583 = vmatpush2.msra.mxu0 0.0
    %584 = vmatprep.subr.mxu0 0.0
    %585 = vmatpush2.msra.mxu0 0.0
    %586 = vmatprep.subr.mxu0 0.0
    %587 = vmatpush2.msra.mxu0 0.0
    %588 = vmatprep.subr.mxu0 0.0
    %589 = vmatpush2.msra.mxu0 0.0
    %590 = vmatprep.subr.mxu0 0.0
    %591 = vmatpush2.msra.mxu0 0.0
    %592 = vmatprep.subr.mxu0 0.0
    %593 = vmatpush2.msra.mxu0 0.0
    %594 = vmatprep.subr.mxu0 0.0
    %595 = vmatpush2.msra.mxu0 0.0
    %596 = vmatprep.subr.mxu0 0.0
    %597 = vmatpush2.msra.mxu0 0.0
    %598 = vmatprep.subr.mxu0 0.0
    %599 = vmatpush2.msra.mxu0 0.0
    %600 = vmatprep.mubr.f32.mxu0 0.0
    %601 = vmatmul.mubr.f32.gmra.mxu0 %v369
    %v602 = vpop.f32.mrf.mxu0
    %v603 = vadd.f32 0.0, %v602
    %v604 = vpop.f32.mrf.mxu0
    %605 = vdwg.mxu0
    %v606 = vadd.f32 %v213, %v603
    %v607 = vxor.u32 %v606, 2147483648
    %v608 = vmul.f32 %v607, 1.442695
    %v609 = vpow.pop %v608
    %v610 = vadd.f32 %v609, 1.0
    %v611 = vrcp.pop %v610
    %v612 = vmul.f32 1.0, %v611
    %v613 = vtanh.pop %v606
    %v614 = vmul.f32 %v612, %v359
    %616 = vrot.lane.b32.xlu0 %v613, 64
    %v617 = vpop.permute.xlu0 %616
    %v619 = vmul.f32 %v612, %v617
    %621 = vrot.lane.b32.xlu0 %v619, 32
    %v622 = vpop.permute.xlu0 %621
    %v624 = vadd.f32 %v614, %v622
    %v625 = vtanh.pop %v624
    %627 = vrot.lane.b32.xlu0 %v625, 64
    %v628 = vpop.permute.xlu0 %627
    %v630 = vmul.f32 %v612, %v628
    %632 = vrot.lane.b32.xlu0 %v630, 32
    %v633 = vpop.permute.xlu0 %632
    %v634 = vsel %vm116, %v633, 0
    %636 = vmatprep.subr.mxu0 0.0
    %637 = vmatpush1.msra.mxu0 0.0
    %638 = vmatprep.subr.mxu0 0.0
    %639 = vmatpush1.msra.mxu0 0.0
    %640 = vmatprep.subr.mxu0 0.0
    %641 = vmatpush1.msra.mxu0 0.0
    %642 = vmatprep.subr.mxu0 0.0
    %643 = vmatpush1.msra.mxu0 0.0
    %644 = vmatprep.subr.mxu0 0.0
    %645 = vmatpush1.msra.mxu0 0.0
    %646 = vmatprep.subr.mxu0 0.0
    %647 = vmatpush1.msra.mxu0 0.0
    %648 = vmatprep.subr.mxu0 0.0
    %649 = vmatpush1.msra.mxu0 0.0
    %650 = vmatprep.subr.mxu0 0.0
    %651 = vmatpush1.msra.mxu0 0.0
    %652 = vmatprep.subr.mxu0 0.0
    %653 = vmatpush1.msra.mxu0 0.0
    %654 = vmatprep.subr.mxu0 0.0
    %655 = vmatpush1.msra.mxu0 0.0
    %656 = vmatprep.subr.mxu0 0.0
    %657 = vmatpush1.msra.mxu0 0.0
    %658 = vmatprep.subr.mxu0 0.0
    %659 = vmatpush1.msra.mxu0 0.0
    %660 = vmatprep.subr.mxu0 0.0
    %661 = vmatpush1.msra.mxu0 %v258
    %662 = vmatprep.subr.mxu0 0.0
    %663 = vmatpush1.msra.mxu0 %v257
    %664 = vmatprep.subr.mxu0 0.0
    %665 = vmatpush1.msra.mxu0 %v256
    %666 = vmatprep.subr.mxu0 0.0
    %667 = vmatpush1.msra.mxu0 %v255
    %668 = vmatprep.subr.mxu0 0.0
    %669 = vmatpush2.msra.mxu0 0.0
    %670 = vmatprep.subr.mxu0 0.0
    %671 = vmatpush2.msra.mxu0 0.0
    %672 = vmatprep.subr.mxu0 0.0
    %673 = vmatpush2.msra.mxu0 0.0
    %674 = vmatprep.subr.mxu0 0.0
    %675 = vmatpush2.msra.mxu0 0.0
    %676 = vmatprep.subr.mxu0 0.0
    %677 = vmatpush2.msra.mxu0 0.0
    %678 = vmatprep.subr.mxu0 0.0
    %679 = vmatpush2.msra.mxu0 0.0
    %680 = vmatprep.subr.mxu0 0.0
    %681 = vmatpush2.msra.mxu0 0.0
    %682 = vmatprep.subr.mxu0 0.0
    %683 = vmatpush2.msra.mxu0 0.0
    %684 = vmatprep.subr.mxu0 0.0
    %685 = vmatpush2.msra.mxu0 0.0
    %686 = vmatprep.subr.mxu0 0.0
    %687 = vmatpush2.msra.mxu0 0.0
    %688 = vmatprep.subr.mxu0 0.0
    %689 = vmatpush2.msra.mxu0 0.0
    %690 = vmatprep.subr.mxu0 0.0
    %691 = vmatpush2.msra.mxu0 0.0
    %692 = vmatprep.subr.mxu0 0.0
    %693 = vmatpush2.msra.mxu0 0.0
    %694 = vmatprep.subr.mxu0 0.0
    %695 = vmatpush2.msra.mxu0 0.0
    %696 = vmatprep.subr.mxu0 0.0
    %697 = vmatpush2.msra.mxu0 0.0
    %698 = vmatprep.subr.mxu0 0.0
    %699 = vmatpush2.msra.mxu0 0.0
    %700 = vmatprep.mubr.f32.mxu0 0.0
    %701 = vmatmul.mubr.f32.gmra.mxu0 %v634
    %v702 = vpop.f32.mrf.mxu0
    %v703 = vadd.f32 0.0, %v702
    %v704 = vpop.f32.mrf.mxu0
    %705 = vdwg.mxu0
    %707 = vrot.lane.b32.xlu0 %v535, 32
    %v708 = vpop.permute.xlu0 %707
    %v709 = vsel %vm116, %v708, 0
    %711 = vmatprep.subr.mxu0 0.0
    %712 = vmatpush1.msra.mxu0 0.0
    %713 = vmatprep.subr.mxu0 0.0
    %714 = vmatpush1.msra.mxu0 0.0
    %715 = vmatprep.subr.mxu0 0.0
    %716 = vmatpush1.msra.mxu0 0.0
    %717 = vmatprep.subr.mxu0 0.0
    %718 = vmatpush1.msra.mxu0 0.0
    %719 = vmatprep.subr.mxu0 0.0
    %720 = vmatpush1.msra.mxu0 0.0
    %721 = vmatprep.subr.mxu0 0.0
    %722 = vmatpush1.msra.mxu0 0.0
    %723 = vmatprep.subr.mxu0 0.0
    %724 = vmatpush1.msra.mxu0 0.0
    %725 = vmatprep.subr.mxu0 0.0
    %726 = vmatpush1.msra.mxu0 0.0
    %727 = vmatprep.subr.mxu0 0.0
    %728 = vmatpush1.msra.mxu0 0.0
    %729 = vmatprep.subr.mxu0 0.0
    %730 = vmatpush1.msra.mxu0 0.0
    %731 = vmatprep.subr.mxu0 0.0
    %732 = vmatpush1.msra.mxu0 0.0
    %733 = vmatprep.subr.mxu0 0.0
    %734 = vmatpush1.msra.mxu0 0.0
    %735 = vmatprep.subr.mxu0 0.0
    %736 = vmatpush1.msra.mxu0 %v254
    %737 = vmatprep.subr.mxu0 0.0
    %738 = vmatpush1.msra.mxu0 %v253
    %739 = vmatprep.subr.mxu0 0.0
    %740 = vmatpush1.msra.mxu0 %v252
    %741 = vmatprep.subr.mxu0 0.0
    %742 = vmatpush1.msra.mxu0 %v251
    %743 = vmatprep.subr.mxu0 0.0
    %744 = vmatpush2.msra.mxu0 0.0
    %745 = vmatprep.subr.mxu0 0.0
    %746 = vmatpush2.msra.mxu0 0.0
    %747 = vmatprep.subr.mxu0 0.0
    %748 = vmatpush2.msra.mxu0 0.0
    %749 = vmatprep.subr.mxu0 0.0
    %750 = vmatpush2.msra.mxu0 0.0
    %751 = vmatprep.subr.mxu0 0.0
    %752 = vmatpush2.msra.mxu0 0.0
    %753 = vmatprep.subr.mxu0 0.0
    %754 = vmatpush2.msra.mxu0 0.0
    %755 = vmatprep.subr.mxu0 0.0
    %756 = vmatpush2.msra.mxu0 0.0
    %757 = vmatprep.subr.mxu0 0.0
    %758 = vmatpush2.msra.mxu0 0.0
    %759 = vmatprep.subr.mxu0 0.0
    %760 = vmatpush2.msra.mxu0 0.0
    %761 = vmatprep.subr.mxu0 0.0
    %762 = vmatpush2.msra.mxu0 0.0
    %763 = vmatprep.subr.mxu0 0.0
    %764 = vmatpush2.msra.mxu0 0.0
    %765 = vmatprep.subr.mxu0 0.0
    %766 = vmatpush2.msra.mxu0 0.0
    %767 = vmatprep.subr.mxu0 0.0
    %768 = vmatpush2.msra.mxu0 0.0
    %769 = vmatprep.subr.mxu0 0.0
    %770 = vmatpush2.msra.mxu0 0.0
    %771 = vmatprep.subr.mxu0 0.0
    %772 = vmatpush2.msra.mxu0 0.0
    %773 = vmatprep.subr.mxu0 0.0
    %774 = vmatpush2.msra.mxu0 0.0
    %775 = vmatprep.mubr.f32.mxu0 0.0
    %776 = vmatmul.mubr.f32.gmra.mxu0 %v709
    %v777 = vpop.f32.mrf.mxu0
    %v778 = vadd.f32 %v703, %v777
    %v779 = vpop.f32.mrf.mxu0
    %780 = vdwg.mxu0
    %v781 = vadd.f32 %v778, %v262
    %v782 = vxor.u32 %v781, 2147483648
    %v783 = vmul.f32 %v782, 1.442695
    %v784 = vpow.pop %v783
    %v785 = vadd.f32 %v784, 1.0
    %v786 = vrcp.pop %v785
    %v787 = vmul.f32 1.0, %v786
    %v788 = vtanh.pop %v781
    %v789 = vmul.f32 %v787, %v529
    %791 = vrot.lane.b32.xlu0 %v788, 64
    %v792 = vpop.permute.xlu0 %791
    %v794 = vmul.f32 %v787, %v792
    %796 = vrot.lane.b32.xlu0 %v794, 32
    %v797 = vpop.permute.xlu0 %796
    %v799 = vadd.f32 %v789, %v797
    %v800 = vtanh.pop %v799
    %802 = vrot.lane.b32.xlu0 %v800, 64
    %v803 = vpop.permute.xlu0 %802
    %v805 = vmul.f32 %v787, %v803
    %806 = vmatprep.subr.mxu0 0.0
    %807 = vmatpush1.msra.mxu0 0.0
    %808 = vmatprep.subr.mxu0 0.0
    %809 = vmatpush1.msra.mxu0 0.0
    %810 = vmatprep.subr.mxu0 0.0
    %811 = vmatpush1.msra.mxu0 0.0
    %812 = vmatprep.subr.mxu0 0.0
    %813 = vmatpush1.msra.mxu0 0.0
    %814 = vmatprep.subr.mxu0 0.0
    %815 = vmatpush1.msra.mxu0 0.0
    %816 = vmatprep.subr.mxu0 0.0
    %817 = vmatpush1.msra.mxu0 0.0
    %818 = vmatprep.subr.mxu0 0.0
    %819 = vmatpush1.msra.mxu0 0.0
    %820 = vmatprep.subr.mxu0 0.0
    %821 = vmatpush1.msra.mxu0 0.0
    %822 = vmatprep.subr.mxu0 0.0
    %823 = vmatpush1.msra.mxu0 0.0
    %824 = vmatprep.subr.mxu0 0.0
    %825 = vmatpush1.msra.mxu0 0.0
    %826 = vmatprep.subr.mxu0 0.0
    %827 = vmatpush1.msra.mxu0 0.0
    %828 = vmatprep.subr.mxu0 0.0
    %829 = vmatpush1.msra.mxu0 0.0
    %830 = vmatprep.subr.mxu0 0.0
    %831 = vmatpush1.msra.mxu0 %v249
    %832 = vmatprep.subr.mxu0 0.0
    %833 = vmatpush1.msra.mxu0 %v248
    %834 = vmatprep.subr.mxu0 0.0
    %835 = vmatpush1.msra.mxu0 %v247
    %836 = vmatprep.subr.mxu0 0.0
    %837 = vmatpush1.msra.mxu0 %v246
    %838 = vmatprep.subr.mxu0 0.0
    %839 = vmatpush2.msra.mxu0 0.0
    %840 = vmatprep.subr.mxu0 0.0
    %841 = vmatpush2.msra.mxu0 0.0
    %842 = vmatprep.subr.mxu0 0.0
    %843 = vmatpush2.msra.mxu0 0.0
    %844 = vmatprep.subr.mxu0 0.0
    %845 = vmatpush2.msra.mxu0 0.0
    %846 = vmatprep.subr.mxu0 0.0
    %847 = vmatpush2.msra.mxu0 0.0
    %848 = vmatprep.subr.mxu0 0.0
    %849 = vmatpush2.msra.mxu0 0.0
    %850 = vmatprep.subr.mxu0 0.0
    %851 = vmatpush2.msra.mxu0 0.0
    %852 = vmatprep.subr.mxu0 0.0
    %853 = vmatpush2.msra.mxu0 0.0
    %854 = vmatprep.subr.mxu0 0.0
    %855 = vmatpush2.msra.mxu0 0.0
    %856 = vmatprep.subr.mxu0 0.0
    %857 = vmatpush2.msra.mxu0 0.0
    %858 = vmatprep.subr.mxu0 0.0
    %859 = vmatpush2.msra.mxu0 0.0
    %860 = vmatprep.subr.mxu0 0.0
    %861 = vmatpush2.msra.mxu0 0.0
    %862 = vmatprep.subr.mxu0 0.0
    %863 = vmatpush2.msra.mxu0 0.0
    %864 = vmatprep.subr.mxu0 0.0
    %865 = vmatpush2.msra.mxu0 0.0
    %866 = vmatprep.subr.mxu0 0.0
    %867 = vmatpush2.msra.mxu0 0.0
    %868 = vmatprep.subr.mxu0 0.0
    %869 = vmatpush2.msra.mxu0 0.0
    %870 = vmatprep.mubr.f32.mxu0 0.0
    %871 = vmatmul.mubr.f32.gmra.mxu0 %v634
    %v872 = vpop.f32.mrf.mxu0
    %v873 = vadd.f32 0.0, %v872
    %v874 = vpop.f32.mrf.mxu0
    %875 = vdwg.mxu0
    %v876 = vadd.f32 %v218, %v873
    %v877 = vxor.u32 %v876, 2147483648
    %v878 = vmul.f32 %v877, 1.442695
    %v879 = vpow.pop %v878
    %v880 = vadd.f32 %v879, 1.0
    %v881 = vrcp.pop %v880
    %v882 = vmul.f32 1.0, %v881
    %v883 = vtanh.pop %v876
    %v884 = vmul.f32 %v882, %v624
    %886 = vrot.lane.b32.xlu0 %v883, 64
    %v887 = vpop.permute.xlu0 %886
    %v889 = vmul.f32 %v882, %v887
    %891 = vrot.lane.b32.xlu0 %v889, 32
    %v892 = vpop.permute.xlu0 %891
    %v894 = vadd.f32 %v884, %v892
    %v895 = vtanh.pop %v894
    %897 = vrot.lane.b32.xlu0 %v895, 64
    %v898 = vpop.permute.xlu0 %897
    %v900 = vmul.f32 %v882, %v898
    %902 = vrot.lane.b32.xlu0 %v900, 32
    %v903 = vpop.permute.xlu0 %902
    %v904 = vsel %vm116, %v903, 0
    %906 = vmatprep.subr.mxu0 0.0
    %907 = vmatpush1.msra.mxu0 0.0
    %908 = vmatprep.subr.mxu0 0.0
    %909 = vmatpush1.msra.mxu0 0.0
    %910 = vmatprep.subr.mxu0 0.0
    %911 = vmatpush1.msra.mxu0 0.0
    %912 = vmatprep.subr.mxu0 0.0
    %913 = vmatpush1.msra.mxu0 0.0
    %914 = vmatprep.subr.mxu0 0.0
    %915 = vmatpush1.msra.mxu0 0.0
    %916 = vmatprep.subr.mxu0 0.0
    %917 = vmatpush1.msra.mxu0 0.0
    %918 = vmatprep.subr.mxu0 0.0
    %919 = vmatpush1.msra.mxu0 0.0
    %920 = vmatprep.subr.mxu0 0.0
    %921 = vmatpush1.msra.mxu0 0.0
    %922 = vmatprep.subr.mxu0 0.0
    %923 = vmatpush1.msra.mxu0 0.0
    %924 = vmatprep.subr.mxu0 0.0
    %925 = vmatpush1.msra.mxu0 0.0
    %926 = vmatprep.subr.mxu0 0.0
    %927 = vmatpush1.msra.mxu0 0.0
    %928 = vmatprep.subr.mxu0 0.0
    %929 = vmatpush1.msra.mxu0 0.0
    %930 = vmatprep.subr.mxu0 0.0
    %931 = vmatpush1.msra.mxu0 %v258
    %932 = vmatprep.subr.mxu0 0.0
    %933 = vmatpush1.msra.mxu0 %v257
    %934 = vmatprep.subr.mxu0 0.0
    %935 = vmatpush1.msra.mxu0 %v256
    %936 = vmatprep.subr.mxu0 0.0
    %937 = vmatpush1.msra.mxu0 %v255
    %938 = vmatprep.subr.mxu0 0.0
    %939 = vmatpush2.msra.mxu0 0.0
    %940 = vmatprep.subr.mxu0 0.0
    %941 = vmatpush2.msra.mxu0 0.0
    %942 = vmatprep.subr.mxu0 0.0
    %943 = vmatpush2.msra.mxu0 0.0
    %944 = vmatprep.subr.mxu0 0.0
    %945 = vmatpush2.msra.mxu0 0.0
    %946 = vmatprep.subr.mxu0 0.0
    %947 = vmatpush2.msra.mxu0 0.0
    %948 = vmatprep.subr.mxu0 0.0
    %949 = vmatpush2.msra.mxu0 0.0
    %950 = vmatprep.subr.mxu0 0.0
    %951 = vmatpush2.msra.mxu0 0.0
    %952 = vmatprep.subr.mxu0 0.0
    %953 = vmatpush2.msra.mxu0 0.0
    %954 = vmatprep.subr.mxu0 0.0
    %955 = vmatpush2.msra.mxu0 0.0
    %956 = vmatprep.subr.mxu0 0.0
    %957 = vmatpush2.msra.mxu0 0.0
    %958 = vmatprep.subr.mxu0 0.0
    %959 = vmatpush2.msra.mxu0 0.0
    %960 = vmatprep.subr.mxu0 0.0
    %961 = vmatpush2.msra.mxu0 0.0
    %962 = vmatprep.subr.mxu0 0.0
    %963 = vmatpush2.msra.mxu0 0.0
    %964 = vmatprep.subr.mxu0 0.0
    %965 = vmatpush2.msra.mxu0 0.0
    %966 = vmatprep.subr.mxu0 0.0
    %967 = vmatpush2.msra.mxu0 0.0
    %968 = vmatprep.subr.mxu0 0.0
    %969 = vmatpush2.msra.mxu0 0.0
    %970 = vmatprep.mubr.f32.mxu0 0.0
    %971 = vmatmul.mubr.f32.gmra.mxu0 %v904
    %v972 = vpop.f32.mrf.mxu0
    %v973 = vadd.f32 0.0, %v972
    %v974 = vpop.f32.mrf.mxu0
    %975 = vdwg.mxu0
    %977 = vrot.lane.b32.xlu0 %v805, 32
    %v978 = vpop.permute.xlu0 %977
    %v979 = vsel %vm116, %v978, 0
    %981 = vmatprep.subr.mxu0 0.0
    %982 = vmatpush1.msra.mxu0 0.0
    %983 = vmatprep.subr.mxu0 0.0
    %984 = vmatpush1.msra.mxu0 0.0
    %985 = vmatprep.subr.mxu0 0.0
    %986 = vmatpush1.msra.mxu0 0.0
    %987 = vmatprep.subr.mxu0 0.0
    %988 = vmatpush1.msra.mxu0 0.0
    %989 = vmatprep.subr.mxu0 0.0
    %990 = vmatpush1.msra.mxu0 0.0
    %991 = vmatprep.subr.mxu0 0.0
    %992 = vmatpush1.msra.mxu0 0.0
    %993 = vmatprep.subr.mxu0 0.0
    %994 = vmatpush1.msra.mxu0 0.0
    %995 = vmatprep.subr.mxu0 0.0
    %996 = vmatpush1.msra.mxu0 0.0
    %997 = vmatprep.subr.mxu0 0.0
    %998 = vmatpush1.msra.mxu0 0.0
    %999 = vmatprep.subr.mxu0 0.0
    %1000 = vmatpush1.msra.mxu0 0.0
    %1001 = vmatprep.subr.mxu0 0.0
    %1002 = vmatpush1.msra.mxu0 0.0
    %1003 = vmatprep.subr.mxu0 0.0
    %1004 = vmatpush1.msra.mxu0 0.0
    %1005 = vmatprep.subr.mxu0 0.0
    %1006 = vmatpush1.msra.mxu0 %v254
    %1007 = vmatprep.subr.mxu0 0.0
    %1008 = vmatpush1.msra.mxu0 %v253
    %1009 = vmatprep.subr.mxu0 0.0
    %1010 = vmatpush1.msra.mxu0 %v252
    %1011 = vmatprep.subr.mxu0 0.0
    %1012 = vmatpush1.msra.mxu0 %v251
    %1013 = vmatprep.subr.mxu0 0.0
    %1014 = vmatpush2.msra.mxu0 0.0
    %1015 = vmatprep.subr.mxu0 0.0
    %1016 = vmatpush2.msra.mxu0 0.0
    %1017 = vmatprep.subr.mxu0 0.0
    %1018 = vmatpush2.msra.mxu0 0.0
    %1019 = vmatprep.subr.mxu0 0.0
    %1020 = vmatpush2.msra.mxu0 0.0
    %1021 = vmatprep.subr.mxu0 0.0
    %1022 = vmatpush2.msra.mxu0 0.0
    %1023 = vmatprep.subr.mxu0 0.0
    %1024 = vmatpush2.msra.mxu0 0.0
    %1025 = vmatprep.subr.mxu0 0.0
    %1026 = vmatpush2.msra.mxu0 0.0
    %1027 = vmatprep.subr.mxu0 0.0
    %1028 = vmatpush2.msra.mxu0 0.0
    %1029 = vmatprep.subr.mxu0 0.0
    %1030 = vmatpush2.msra.mxu0 0.0
    %1031 = vmatprep.subr.mxu0 0.0
    %1032 = vmatpush2.msra.mxu0 0.0
    %1033 = vmatprep.subr.mxu0 0.0
    %1034 = vmatpush2.msra.mxu0 0.0
    %1035 = vmatprep.subr.mxu0 0.0
    %1036 = vmatpush2.msra.mxu0 0.0
    %1037 = vmatprep.subr.mxu0 0.0
    %1038 = vmatpush2.msra.mxu0 0.0
    %1039 = vmatprep.subr.mxu0 0.0
    %1040 = vmatpush2.msra.mxu0 0.0
    %1041 = vmatprep.subr.mxu0 0.0
    %1042 = vmatpush2.msra.mxu0 0.0
    %1043 = vmatprep.subr.mxu0 0.0
    %1044 = vmatpush2.msra.mxu0 0.0
    %1045 = vmatprep.mubr.f32.mxu0 0.0
    %1046 = vmatmul.mubr.f32.gmra.mxu0 %v979
    %v1047 = vpop.f32.mrf.mxu0
    %v1048 = vadd.f32 %v973, %v1047
    %v1049 = vpop.f32.mrf.mxu0
    %1050 = vdwg.mxu0
    %v1051 = vadd.f32 %v1048, %v262
    %v1052 = vxor.u32 %v1051, 2147483648
    %v1053 = vmul.f32 %v1052, 1.442695
    %v1054 = vpow.pop %v1053
    %v1055 = vadd.f32 %v1054, 1.0
    %v1056 = vrcp.pop %v1055
    %v1057 = vmul.f32 1.0, %v1056
    %v1058 = vtanh.pop %v1051
    %v1059 = vmul.f32 %v1057, %v799
    %1061 = vrot.lane.b32.xlu0 %v1058, 64
    %v1062 = vpop.permute.xlu0 %1061
    %v1064 = vmul.f32 %v1057, %v1062
    %1066 = vrot.lane.b32.xlu0 %v1064, 32
    %v1067 = vpop.permute.xlu0 %1066
    %v1069 = vadd.f32 %v1059, %v1067
    %v1070 = vtanh.pop %v1069
    %1072 = vrot.lane.b32.xlu0 %v1070, 64
    %v1073 = vpop.permute.xlu0 %1072
    %v1075 = vmul.f32 %v1057, %v1073
    %1076 = vmatprep.subr.mxu0 0.0
    %1077 = vmatpush1.msra.mxu0 0.0
    %1078 = vmatprep.subr.mxu0 0.0
    %1079 = vmatpush1.msra.mxu0 0.0
    %1080 = vmatprep.subr.mxu0 0.0
    %1081 = vmatpush1.msra.mxu0 0.0
    %1082 = vmatprep.subr.mxu0 0.0
    %1083 = vmatpush1.msra.mxu0 0.0
    %1084 = vmatprep.subr.mxu0 0.0
    %1085 = vmatpush1.msra.mxu0 0.0
    %1086 = vmatprep.subr.mxu0 0.0
    %1087 = vmatpush1.msra.mxu0 0.0
    %1088 = vmatprep.subr.mxu0 0.0
    %1089 = vmatpush1.msra.mxu0 0.0
    %1090 = vmatprep.subr.mxu0 0.0
    %1091 = vmatpush1.msra.mxu0 0.0
    %1092 = vmatprep.subr.mxu0 0.0
    %1093 = vmatpush1.msra.mxu0 0.0
    %1094 = vmatprep.subr.mxu0 0.0
    %1095 = vmatpush1.msra.mxu0 0.0
    %1096 = vmatprep.subr.mxu0 0.0
    %1097 = vmatpush1.msra.mxu0 0.0
    %1098 = vmatprep.subr.mxu0 0.0
    %1099 = vmatpush1.msra.mxu0 0.0
    %1100 = vmatprep.subr.mxu0 0.0
    %1101 = vmatpush1.msra.mxu0 %v249
    %1102 = vmatprep.subr.mxu0 0.0
    %1103 = vmatpush1.msra.mxu0 %v248
    %1104 = vmatprep.subr.mxu0 0.0
    %1105 = vmatpush1.msra.mxu0 %v247
    %1106 = vmatprep.subr.mxu0 0.0
    %1107 = vmatpush1.msra.mxu0 %v246
    %1108 = vmatprep.subr.mxu0 0.0
    %1109 = vmatpush2.msra.mxu0 0.0
    %1110 = vmatprep.subr.mxu0 0.0
    %1111 = vmatpush2.msra.mxu0 0.0
    %1112 = vmatprep.subr.mxu0 0.0
    %1113 = vmatpush2.msra.mxu0 0.0
    %1114 = vmatprep.subr.mxu0 0.0
    %1115 = vmatpush2.msra.mxu0 0.0
    %1116 = vmatprep.subr.mxu0 0.0
    %1117 = vmatpush2.msra.mxu0 0.0
    %1118 = vmatprep.subr.mxu0 0.0
    %1119 = vmatpush2.msra.mxu0 0.0
    %1120 = vmatprep.subr.mxu0 0.0
    %1121 = vmatpush2.msra.mxu0 0.0
    %1122 = vmatprep.subr.mxu0 0.0
    %1123 = vmatpush2.msra.mxu0 0.0
    %1124 = vmatprep.subr.mxu0 0.0
    %1125 = vmatpush2.msra.mxu0 0.0
    %1126 = vmatprep.subr.mxu0 0.0
    %1127 = vmatpush2.msra.mxu0 0.0
    %1128 = vmatprep.subr.mxu0 0.0
    %1129 = vmatpush2.msra.mxu0 0.0
    %1130 = vmatprep.subr.mxu0 0.0
    %1131 = vmatpush2.msra.mxu0 0.0
    %1132 = vmatprep.subr.mxu0 0.0
    %1133 = vmatpush2.msra.mxu0 0.0
    %1134 = vmatprep.subr.mxu0 0.0
    %1135 = vmatpush2.msra.mxu0 0.0
    %1136 = vmatprep.subr.mxu0 0.0
    %1137 = vmatpush2.msra.mxu0 0.0
    %1138 = vmatprep.subr.mxu0 0.0
    %1139 = vmatpush2.msra.mxu0 0.0
    %1140 = vmatprep.mubr.f32.mxu0 0.0
    %1141 = vmatmul.mubr.f32.gmra.mxu0 %v904
    %v1142 = vpop.f32.mrf.mxu0
    %v1143 = vadd.f32 0.0, %v1142
    %v1144 = vpop.f32.mrf.mxu0
    %1145 = vdwg.mxu0
    %v1146 = vadd.f32 %v223, %v1143
    %v1147 = vxor.u32 %v1146, 2147483648
    %v1148 = vmul.f32 %v1147, 1.442695
    %v1149 = vpow.pop %v1148
    %v1150 = vadd.f32 %v1149, 1.0
    %v1151 = vrcp.pop %v1150
    %v1152 = vmul.f32 1.0, %v1151
    %v1153 = vtanh.pop %v1146
    %v1154 = vmul.f32 %v1152, %v894
    %1156 = vrot.lane.b32.xlu0 %v1153, 64
    %v1157 = vpop.permute.xlu0 %1156
    %v1159 = vmul.f32 %v1152, %v1157
    %1161 = vrot.lane.b32.xlu0 %v1159, 32
    %v1162 = vpop.permute.xlu0 %1161
    %v1164 = vadd.f32 %v1154, %v1162
    %v1165 = vtanh.pop %v1164
    %1167 = vrot.lane.b32.xlu0 %v1165, 64
    %v1168 = vpop.permute.xlu0 %1167
    %v1170 = vmul.f32 %v1152, %v1168
    %1172 = vrot.lane.b32.xlu0 %v1170, 32
    %v1173 = vpop.permute.xlu0 %1172
    %v1174 = vsel %vm116, %v1173, 0
    %1176 = vmatprep.subr.mxu0 0.0
    %1177 = vmatpush1.msra.mxu0 0.0
    %1178 = vmatprep.subr.mxu0 0.0
    %1179 = vmatpush1.msra.mxu0 0.0
    %1180 = vmatprep.subr.mxu0 0.0
    %1181 = vmatpush1.msra.mxu0 0.0
    %1182 = vmatprep.subr.mxu0 0.0
    %1183 = vmatpush1.msra.mxu0 0.0
    %1184 = vmatprep.subr.mxu0 0.0
    %1185 = vmatpush1.msra.mxu0 0.0
    %1186 = vmatprep.subr.mxu0 0.0
    %1187 = vmatpush1.msra.mxu0 0.0
    %1188 = vmatprep.subr.mxu0 0.0
    %1189 = vmatpush1.msra.mxu0 0.0
    %1190 = vmatprep.subr.mxu0 0.0
    %1191 = vmatpush1.msra.mxu0 0.0
    %1192 = vmatprep.subr.mxu0 0.0
    %1193 = vmatpush1.msra.mxu0 0.0
    %1194 = vmatprep.subr.mxu0 0.0
    %1195 = vmatpush1.msra.mxu0 0.0
    %1196 = vmatprep.subr.mxu0 0.0
    %1197 = vmatpush1.msra.mxu0 0.0
    %1198 = vmatprep.subr.mxu0 0.0
    %1199 = vmatpush1.msra.mxu0 0.0
    %1200 = vmatprep.subr.mxu0 0.0
    %1201 = vmatpush1.msra.mxu0 %v258
    %1202 = vmatprep.subr.mxu0 0.0
    %1203 = vmatpush1.msra.mxu0 %v257
    %1204 = vmatprep.subr.mxu0 0.0
    %1205 = vmatpush1.msra.mxu0 %v256
    %1206 = vmatprep.subr.mxu0 0.0
    %1207 = vmatpush1.msra.mxu0 %v255
    %1208 = vmatprep.subr.mxu0 0.0
    %1209 = vmatpush2.msra.mxu0 0.0
    %1210 = vmatprep.subr.mxu0 0.0
    %1211 = vmatpush2.msra.mxu0 0.0
    %1212 = vmatprep.subr.mxu0 0.0
    %1213 = vmatpush2.msra.mxu0 0.0
    %1214 = vmatprep.subr.mxu0 0.0
    %1215 = vmatpush2.msra.mxu0 0.0
    %1216 = vmatprep.subr.mxu0 0.0
    %1217 = vmatpush2.msra.mxu0 0.0
    %1218 = vmatprep.subr.mxu0 0.0
    %1219 = vmatpush2.msra.mxu0 0.0
    %1220 = vmatprep.subr.mxu0 0.0
    %1221 = vmatpush2.msra.mxu0 0.0
    %1222 = vmatprep.subr.mxu0 0.0
    %1223 = vmatpush2.msra.mxu0 0.0
    %1224 = vmatprep.subr.mxu0 0.0
    %1225 = vmatpush2.msra.mxu0 0.0
    %1226 = vmatprep.subr.mxu0 0.0
    %1227 = vmatpush2.msra.mxu0 0.0
    %1228 = vmatprep.subr.mxu0 0.0
    %1229 = vmatpush2.msra.mxu0 0.0
    %1230 = vmatprep.subr.mxu0 0.0
    %1231 = vmatpush2.msra.mxu0 0.0
    %1232 = vmatprep.subr.mxu0 0.0
    %1233 = vmatpush2.msra.mxu0 0.0
    %1234 = vmatprep.subr.mxu0 0.0
    %1235 = vmatpush2.msra.mxu0 0.0
    %1236 = vmatprep.subr.mxu0 0.0
    %1237 = vmatpush2.msra.mxu0 0.0
    %1238 = vmatprep.subr.mxu0 0.0
    %1239 = vmatpush2.msra.mxu0 0.0
    %1240 = vmatprep.mubr.f32.mxu0 0.0
    %1241 = vmatmul.mubr.f32.gmra.mxu0 %v1174
    %v1242 = vpop.f32.mrf.mxu0
    %v1243 = vadd.f32 0.0, %v1242
    %v1244 = vpop.f32.mrf.mxu0
    %1245 = vdwg.mxu0
    %1247 = vrot.lane.b32.xlu0 %v1075, 32
    %v1248 = vpop.permute.xlu0 %1247
    %v1249 = vsel %vm116, %v1248, 0
    %1251 = vmatprep.subr.mxu0 0.0
    %1252 = vmatpush1.msra.mxu0 0.0
    %1253 = vmatprep.subr.mxu0 0.0
    %1254 = vmatpush1.msra.mxu0 0.0
    %1255 = vmatprep.subr.mxu0 0.0
    %1256 = vmatpush1.msra.mxu0 0.0
    %1257 = vmatprep.subr.mxu0 0.0
    %1258 = vmatpush1.msra.mxu0 0.0
    %1259 = vmatprep.subr.mxu0 0.0
    %1260 = vmatpush1.msra.mxu0 0.0
    %1261 = vmatprep.subr.mxu0 0.0
    %1262 = vmatpush1.msra.mxu0 0.0
    %1263 = vmatprep.subr.mxu0 0.0
    %1264 = vmatpush1.msra.mxu0 0.0
    %1265 = vmatprep.subr.mxu0 0.0
    %1266 = vmatpush1.msra.mxu0 0.0
    %1267 = vmatprep.subr.mxu0 0.0
    %1268 = vmatpush1.msra.mxu0 0.0
    %1269 = vmatprep.subr.mxu0 0.0
    %1270 = vmatpush1.msra.mxu0 0.0
    %1271 = vmatprep.subr.mxu0 0.0
    %1272 = vmatpush1.msra.mxu0 0.0
    %1273 = vmatprep.subr.mxu0 0.0
    %1274 = vmatpush1.msra.mxu0 0.0
    %1275 = vmatprep.subr.mxu0 0.0
    %1276 = vmatpush1.msra.mxu0 %v254
    %1277 = vmatprep.subr.mxu0 0.0
    %1278 = vmatpush1.msra.mxu0 %v253
    %1279 = vmatprep.subr.mxu0 0.0
    %1280 = vmatpush1.msra.mxu0 %v252
    %1281 = vmatprep.subr.mxu0 0.0
    %1282 = vmatpush1.msra.mxu0 %v251
    %1283 = vmatprep.subr.mxu0 0.0
    %1284 = vmatpush2.msra.mxu0 0.0
    %1285 = vmatprep.subr.mxu0 0.0
    %1286 = vmatpush2.msra.mxu0 0.0
    %1287 = vmatprep.subr.mxu0 0.0
    %1288 = vmatpush2.msra.mxu0 0.0
    %1289 = vmatprep.subr.mxu0 0.0
    %1290 = vmatpush2.msra.mxu0 0.0
    %1291 = vmatprep.subr.mxu0 0.0
    %1292 = vmatpush2.msra.mxu0 0.0
    %1293 = vmatprep.subr.mxu0 0.0
    %1294 = vmatpush2.msra.mxu0 0.0
    %1295 = vmatprep.subr.mxu0 0.0
    %1296 = vmatpush2.msra.mxu0 0.0
    %1297 = vmatprep.subr.mxu0 0.0
    %1298 = vmatpush2.msra.mxu0 0.0
    %1299 = vmatprep.subr.mxu0 0.0
    %1300 = vmatpush2.msra.mxu0 0.0
    %1301 = vmatprep.subr.mxu0 0.0
    %1302 = vmatpush2.msra.mxu0 0.0
    %1303 = vmatprep.subr.mxu0 0.0
    %1304 = vmatpush2.msra.mxu0 0.0
    %1305 = vmatprep.subr.mxu0 0.0
    %1306 = vmatpush2.msra.mxu0 0.0
    %1307 = vmatprep.subr.mxu0 0.0
    %1308 = vmatpush2.msra.mxu0 0.0
    %1309 = vmatprep.subr.mxu0 0.0
    %1310 = vmatpush2.msra.mxu0 0.0
    %1311 = vmatprep.subr.mxu0 0.0
    %1312 = vmatpush2.msra.mxu0 0.0
    %1313 = vmatprep.subr.mxu0 0.0
    %1314 = vmatpush2.msra.mxu0 0.0
    %1315 = vmatprep.mubr.f32.mxu0 0.0
    %1316 = vmatmul.mubr.f32.gmra.mxu0 %v1249
    %v1317 = vpop.f32.mrf.mxu0
    %v1318 = vadd.f32 %v1243, %v1317
    %v1319 = vpop.f32.mrf.mxu0
    %1320 = vdwg.mxu0
    %v1321 = vadd.f32 %v1318, %v262
    %v1322 = vxor.u32 %v1321, 2147483648
    %v1323 = vmul.f32 %v1322, 1.442695
    %v1324 = vpow.pop %v1323
    %v1325 = vadd.f32 %v1324, 1.0
    %v1326 = vrcp.pop %v1325
    %v1327 = vmul.f32 1.0, %v1326
    %v1328 = vtanh.pop %v1321
    %v1329 = vmul.f32 %v1327, %v1069
    %1331 = vrot.lane.b32.xlu0 %v1328, 64
    %v1332 = vpop.permute.xlu0 %1331
    %v1334 = vmul.f32 %v1327, %v1332
    %1336 = vrot.lane.b32.xlu0 %v1334, 32
    %v1337 = vpop.permute.xlu0 %1336
    %v1339 = vadd.f32 %v1329, %v1337
    %v1340 = vtanh.pop %v1339
    %1342 = vrot.lane.b32.xlu0 %v1340, 64
    %v1343 = vpop.permute.xlu0 %1342
    %v1345 = vmul.f32 %v1327, %v1343
    %1346 = vmatprep.subr.mxu0 0.0
    %1347 = vmatpush1.msra.mxu0 0.0
    %1348 = vmatprep.subr.mxu0 0.0
    %1349 = vmatpush1.msra.mxu0 0.0
    %1350 = vmatprep.subr.mxu0 0.0
    %1351 = vmatpush1.msra.mxu0 0.0
    %1352 = vmatprep.subr.mxu0 0.0
    %1353 = vmatpush1.msra.mxu0 0.0
    %1354 = vmatprep.subr.mxu0 0.0
    %1355 = vmatpush1.msra.mxu0 0.0
    %1356 = vmatprep.subr.mxu0 0.0
    %1357 = vmatpush1.msra.mxu0 0.0
    %1358 = vmatprep.subr.mxu0 0.0
    %1359 = vmatpush1.msra.mxu0 0.0
    %1360 = vmatprep.subr.mxu0 0.0
    %1361 = vmatpush1.msra.mxu0 0.0
    %1362 = vmatprep.subr.mxu0 0.0
    %1363 = vmatpush1.msra.mxu0 0.0
    %1364 = vmatprep.subr.mxu0 0.0
    %1365 = vmatpush1.msra.mxu0 0.0
    %1366 = vmatprep.subr.mxu0 0.0
    %1367 = vmatpush1.msra.mxu0 0.0
    %1368 = vmatprep.subr.mxu0 0.0
    %1369 = vmatpush1.msra.mxu0 0.0
    %1370 = vmatprep.subr.mxu0 0.0
    %1371 = vmatpush1.msra.mxu0 %v249
    %1372 = vmatprep.subr.mxu0 0.0
    %1373 = vmatpush1.msra.mxu0 %v248
    %1374 = vmatprep.subr.mxu0 0.0
    %1375 = vmatpush1.msra.mxu0 %v247
    %1376 = vmatprep.subr.mxu0 0.0
    %1377 = vmatpush1.msra.mxu0 %v246
    %1378 = vmatprep.subr.mxu0 0.0
    %1379 = vmatpush2.msra.mxu0 0.0
    %1380 = vmatprep.subr.mxu0 0.0
    %1381 = vmatpush2.msra.mxu0 0.0
    %1382 = vmatprep.subr.mxu0 0.0
    %1383 = vmatpush2.msra.mxu0 0.0
    %1384 = vmatprep.subr.mxu0 0.0
    %1385 = vmatpush2.msra.mxu0 0.0
    %1386 = vmatprep.subr.mxu0 0.0
    %1387 = vmatpush2.msra.mxu0 0.0
    %1388 = vmatprep.subr.mxu0 0.0
    %1389 = vmatpush2.msra.mxu0 0.0
    %1390 = vmatprep.subr.mxu0 0.0
    %1391 = vmatpush2.msra.mxu0 0.0
    %1392 = vmatprep.subr.mxu0 0.0
    %1393 = vmatpush2.msra.mxu0 0.0
    %1394 = vmatprep.subr.mxu0 0.0
    %1395 = vmatpush2.msra.mxu0 0.0
    %1396 = vmatprep.subr.mxu0 0.0
    %1397 = vmatpush2.msra.mxu0 0.0
    %1398 = vmatprep.subr.mxu0 0.0
    %1399 = vmatpush2.msra.mxu0 0.0
    %1400 = vmatprep.subr.mxu0 0.0
    %1401 = vmatpush2.msra.mxu0 0.0
    %1402 = vmatprep.subr.mxu0 0.0
    %1403 = vmatpush2.msra.mxu0 0.0
    %1404 = vmatprep.subr.mxu0 0.0
    %1405 = vmatpush2.msra.mxu0 0.0
    %1406 = vmatprep.subr.mxu0 0.0
    %1407 = vmatpush2.msra.mxu0 0.0
    %1408 = vmatprep.subr.mxu0 0.0
    %1409 = vmatpush2.msra.mxu0 0.0
    %1410 = vmatprep.mubr.f32.mxu0 0.0
    %1411 = vmatmul.mubr.f32.gmra.mxu0 %v1174
    %v1412 = vpop.f32.mrf.mxu0
    %v1413 = vadd.f32 0.0, %v1412
    %v1414 = vpop.f32.mrf.mxu0
    %1415 = vdwg.mxu0
    %v1416 = vadd.f32 %v228, %v1413
    %v1417 = vxor.u32 %v1416, 2147483648
    %v1418 = vmul.f32 %v1417, 1.442695
    %v1419 = vpow.pop %v1418
    %v1420 = vadd.f32 %v1419, 1.0
    %v1421 = vrcp.pop %v1420
    %v1422 = vmul.f32 1.0, %v1421
    %v1423 = vtanh.pop %v1416
    %v1424 = vmul.f32 %v1422, %v1164
    %1426 = vrot.lane.b32.xlu0 %v1423, 64
    %v1427 = vpop.permute.xlu0 %1426
    %v1429 = vmul.f32 %v1422, %v1427
    %1431 = vrot.lane.b32.xlu0 %v1429, 32
    %v1432 = vpop.permute.xlu0 %1431
    %v1434 = vadd.f32 %v1424, %v1432
    %v1435 = vtanh.pop %v1434
    %1437 = vrot.lane.b32.xlu0 %v1435, 64
    %v1438 = vpop.permute.xlu0 %1437
    %v1440 = vmul.f32 %v1422, %v1438
    %1442 = vrot.lane.b32.xlu0 %v1440, 32
    %v1443 = vpop.permute.xlu0 %1442
    %v1444 = vsel %vm116, %v1443, 0
    %1446 = vmatprep.subr.mxu0 0.0
    %1447 = vmatpush1.msra.mxu0 0.0
    %1448 = vmatprep.subr.mxu0 0.0
    %1449 = vmatpush1.msra.mxu0 0.0
    %1450 = vmatprep.subr.mxu0 0.0
    %1451 = vmatpush1.msra.mxu0 0.0
    %1452 = vmatprep.subr.mxu0 0.0
    %1453 = vmatpush1.msra.mxu0 0.0
    %1454 = vmatprep.subr.mxu0 0.0
    %1455 = vmatpush1.msra.mxu0 0.0
    %1456 = vmatprep.subr.mxu0 0.0
    %1457 = vmatpush1.msra.mxu0 0.0
    %1458 = vmatprep.subr.mxu0 0.0
    %1459 = vmatpush1.msra.mxu0 0.0
    %1460 = vmatprep.subr.mxu0 0.0
    %1461 = vmatpush1.msra.mxu0 0.0
    %1462 = vmatprep.subr.mxu0 0.0
    %1463 = vmatpush1.msra.mxu0 0.0
    %1464 = vmatprep.subr.mxu0 0.0
    %1465 = vmatpush1.msra.mxu0 0.0
    %1466 = vmatprep.subr.mxu0 0.0
    %1467 = vmatpush1.msra.mxu0 0.0
    %1468 = vmatprep.subr.mxu0 0.0
    %1469 = vmatpush1.msra.mxu0 0.0
    %1470 = vmatprep.subr.mxu0 0.0
    %1471 = vmatpush1.msra.mxu0 %v258
    %1472 = vmatprep.subr.mxu0 0.0
    %1473 = vmatpush1.msra.mxu0 %v257
    %1474 = vmatprep.subr.mxu0 0.0
    %1475 = vmatpush1.msra.mxu0 %v256
    %1476 = vmatprep.subr.mxu0 0.0
    %1477 = vmatpush1.msra.mxu0 %v255
    %1478 = vmatprep.subr.mxu0 0.0
    %1479 = vmatpush2.msra.mxu0 0.0
    %1480 = vmatprep.subr.mxu0 0.0
    %1481 = vmatpush2.msra.mxu0 0.0
    %1482 = vmatprep.subr.mxu0 0.0
    %1483 = vmatpush2.msra.mxu0 0.0
    %1484 = vmatprep.subr.mxu0 0.0
    %1485 = vmatpush2.msra.mxu0 0.0
    %1486 = vmatprep.subr.mxu0 0.0
    %1487 = vmatpush2.msra.mxu0 0.0
    %1488 = vmatprep.subr.mxu0 0.0
    %1489 = vmatpush2.msra.mxu0 0.0
    %1490 = vmatprep.subr.mxu0 0.0
    %1491 = vmatpush2.msra.mxu0 0.0
    %1492 = vmatprep.subr.mxu0 0.0
    %1493 = vmatpush2.msra.mxu0 0.0
    %1494 = vmatprep.subr.mxu0 0.0
    %1495 = vmatpush2.msra.mxu0 0.0
    %1496 = vmatprep.subr.mxu0 0.0
    %1497 = vmatpush2.msra.mxu0 0.0
    %1498 = vmatprep.subr.mxu0 0.0
    %1499 = vmatpush2.msra.mxu0 0.0
    %1500 = vmatprep.subr.mxu0 0.0
    %1501 = vmatpush2.msra.mxu0 0.0
    %1502 = vmatprep.subr.mxu0 0.0
    %1503 = vmatpush2.msra.mxu0 0.0
    %1504 = vmatprep.subr.mxu0 0.0
    %1505 = vmatpush2.msra.mxu0 0.0
    %1506 = vmatprep.subr.mxu0 0.0
    %1507 = vmatpush2.msra.mxu0 0.0
    %1508 = vmatprep.subr.mxu0 0.0
    %1509 = vmatpush2.msra.mxu0 0.0
    %1510 = vmatprep.mubr.f32.mxu0 0.0
    %1511 = vmatmul.mubr.f32.gmra.mxu0 %v1444
    %v1512 = vpop.f32.mrf.mxu0
    %v1513 = vadd.f32 0.0, %v1512
    %v1514 = vpop.f32.mrf.mxu0
    %1515 = vdwg.mxu0
    %1517 = vrot.lane.b32.xlu0 %v1345, 32
    %v1518 = vpop.permute.xlu0 %1517
    %v1519 = vsel %vm116, %v1518, 0
    %1521 = vmatprep.subr.mxu0 0.0
    %1522 = vmatpush1.msra.mxu0 0.0
    %1523 = vmatprep.subr.mxu0 0.0
    %1524 = vmatpush1.msra.mxu0 0.0
    %1525 = vmatprep.subr.mxu0 0.0
    %1526 = vmatpush1.msra.mxu0 0.0
    %1527 = vmatprep.subr.mxu0 0.0
    %1528 = vmatpush1.msra.mxu0 0.0
    %1529 = vmatprep.subr.mxu0 0.0
    %1530 = vmatpush1.msra.mxu0 0.0
    %1531 = vmatprep.subr.mxu0 0.0
    %1532 = vmatpush1.msra.mxu0 0.0
    %1533 = vmatprep.subr.mxu0 0.0
    %1534 = vmatpush1.msra.mxu0 0.0
    %1535 = vmatprep.subr.mxu0 0.0
    %1536 = vmatpush1.msra.mxu0 0.0
    %1537 = vmatprep.subr.mxu0 0.0
    %1538 = vmatpush1.msra.mxu0 0.0
    %1539 = vmatprep.subr.mxu0 0.0
    %1540 = vmatpush1.msra.mxu0 0.0
    %1541 = vmatprep.subr.mxu0 0.0
    %1542 = vmatpush1.msra.mxu0 0.0
    %1543 = vmatprep.subr.mxu0 0.0
    %1544 = vmatpush1.msra.mxu0 0.0
    %1545 = vmatprep.subr.mxu0 0.0
    %1546 = vmatpush1.msra.mxu0 %v254
    %1547 = vmatprep.subr.mxu0 0.0
    %1548 = vmatpush1.msra.mxu0 %v253
    %1549 = vmatprep.subr.mxu0 0.0
    %1550 = vmatpush1.msra.mxu0 %v252
    %1551 = vmatprep.subr.mxu0 0.0
    %1552 = vmatpush1.msra.mxu0 %v251
    %1553 = vmatprep.subr.mxu0 0.0
    %1554 = vmatpush2.msra.mxu0 0.0
    %1555 = vmatprep.subr.mxu0 0.0
    %1556 = vmatpush2.msra.mxu0 0.0
    %1557 = vmatprep.subr.mxu0 0.0
    %1558 = vmatpush2.msra.mxu0 0.0
    %1559 = vmatprep.subr.mxu0 0.0
    %1560 = vmatpush2.msra.mxu0 0.0
    %1561 = vmatprep.subr.mxu0 0.0
    %1562 = vmatpush2.msra.mxu0 0.0
    %1563 = vmatprep.subr.mxu0 0.0
    %1564 = vmatpush2.msra.mxu0 0.0
    %1565 = vmatprep.subr.mxu0 0.0
    %1566 = vmatpush2.msra.mxu0 0.0
    %1567 = vmatprep.subr.mxu0 0.0
    %1568 = vmatpush2.msra.mxu0 0.0
    %1569 = vmatprep.subr.mxu0 0.0
    %1570 = vmatpush2.msra.mxu0 0.0
    %1571 = vmatprep.subr.mxu0 0.0
    %1572 = vmatpush2.msra.mxu0 0.0
    %1573 = vmatprep.subr.mxu0 0.0
    %1574 = vmatpush2.msra.mxu0 0.0
    %1575 = vmatprep.subr.mxu0 0.0
    %1576 = vmatpush2.msra.mxu0 0.0
    %1577 = vmatprep.subr.mxu0 0.0
    %1578 = vmatpush2.msra.mxu0 0.0
    %1579 = vmatprep.subr.mxu0 0.0
    %1580 = vmatpush2.msra.mxu0 0.0
    %1581 = vmatprep.subr.mxu0 0.0
    %1582 = vmatpush2.msra.mxu0 0.0
    %1583 = vmatprep.subr.mxu0 0.0
    %1584 = vmatpush2.msra.mxu0 0.0
    %1585 = vmatprep.mubr.f32.mxu0 0.0
    %1586 = vmatmul.mubr.f32.gmra.mxu0 %v1519
    %v1587 = vpop.f32.mrf.mxu0
    %v1588 = vadd.f32 %v1513, %v1587
    %v1589 = vpop.f32.mrf.mxu0
    %1590 = vdwg.mxu0
    %v1591 = vadd.f32 %v1588, %v262
    %v1592 = vxor.u32 %v1591, 2147483648
    %v1593 = vmul.f32 %v1592, 1.442695
    %v1594 = vpow.pop %v1593
    %v1595 = vadd.f32 %v1594, 1.0
    %v1596 = vrcp.pop %v1595
    %v1597 = vmul.f32 1.0, %v1596
    %v1598 = vtanh.pop %v1591
    %v1599 = vmul.f32 %v1597, %v1339
    %1601 = vrot.lane.b32.xlu0 %v1598, 64
    %v1602 = vpop.permute.xlu0 %1601
    %v1604 = vmul.f32 %v1597, %v1602
    %1606 = vrot.lane.b32.xlu0 %v1604, 32
    %v1607 = vpop.permute.xlu0 %1606
    %v1609 = vadd.f32 %v1599, %v1607
    %v1610 = vtanh.pop %v1609
    %1612 = vrot.lane.b32.xlu0 %v1610, 64
    %v1613 = vpop.permute.xlu0 %1612
    %v1615 = vmul.f32 %v1597, %v1613
    %1616 = vmatprep.subr.mxu0 0.0
    %1617 = vmatpush1.msra.mxu0 0.0
    %1618 = vmatprep.subr.mxu0 0.0
    %1619 = vmatpush1.msra.mxu0 0.0
    %1620 = vmatprep.subr.mxu0 0.0
    %1621 = vmatpush1.msra.mxu0 0.0
    %1622 = vmatprep.subr.mxu0 0.0
    %1623 = vmatpush1.msra.mxu0 0.0
    %1624 = vmatprep.subr.mxu0 0.0
    %1625 = vmatpush1.msra.mxu0 0.0
    %1626 = vmatprep.subr.mxu0 0.0
    %1627 = vmatpush1.msra.mxu0 0.0
    %1628 = vmatprep.subr.mxu0 0.0
    %1629 = vmatpush1.msra.mxu0 0.0
    %1630 = vmatprep.subr.mxu0 0.0
    %1631 = vmatpush1.msra.mxu0 0.0
    %1632 = vmatprep.subr.mxu0 0.0
    %1633 = vmatpush1.msra.mxu0 0.0
    %1634 = vmatprep.subr.mxu0 0.0
    %1635 = vmatpush1.msra.mxu0 0.0
    %1636 = vmatprep.subr.mxu0 0.0
    %1637 = vmatpush1.msra.mxu0 0.0
    %1638 = vmatprep.subr.mxu0 0.0
    %1639 = vmatpush1.msra.mxu0 0.0
    %1640 = vmatprep.subr.mxu0 0.0
    %1641 = vmatpush1.msra.mxu0 %v249
    %1642 = vmatprep.subr.mxu0 0.0
    %1643 = vmatpush1.msra.mxu0 %v248
    %1644 = vmatprep.subr.mxu0 0.0
    %1645 = vmatpush1.msra.mxu0 %v247
    %1646 = vmatprep.subr.mxu0 0.0
    %1647 = vmatpush1.msra.mxu0 %v246
    %1648 = vmatprep.subr.mxu0 0.0
    %1649 = vmatpush2.msra.mxu0 0.0
    %1650 = vmatprep.subr.mxu0 0.0
    %1651 = vmatpush2.msra.mxu0 0.0
    %1652 = vmatprep.subr.mxu0 0.0
    %1653 = vmatpush2.msra.mxu0 0.0
    %1654 = vmatprep.subr.mxu0 0.0
    %1655 = vmatpush2.msra.mxu0 0.0
    %1656 = vmatprep.subr.mxu0 0.0
    %1657 = vmatpush2.msra.mxu0 0.0
    %1658 = vmatprep.subr.mxu0 0.0
    %1659 = vmatpush2.msra.mxu0 0.0
    %1660 = vmatprep.subr.mxu0 0.0
    %1661 = vmatpush2.msra.mxu0 0.0
    %1662 = vmatprep.subr.mxu0 0.0
    %1663 = vmatpush2.msra.mxu0 0.0
    %1664 = vmatprep.subr.mxu0 0.0
    %1665 = vmatpush2.msra.mxu0 0.0
    %1666 = vmatprep.subr.mxu0 0.0
    %1667 = vmatpush2.msra.mxu0 0.0
    %1668 = vmatprep.subr.mxu0 0.0
    %1669 = vmatpush2.msra.mxu0 0.0
    %1670 = vmatprep.subr.mxu0 0.0
    %1671 = vmatpush2.msra.mxu0 0.0
    %1672 = vmatprep.subr.mxu0 0.0
    %1673 = vmatpush2.msra.mxu0 0.0
    %1674 = vmatprep.subr.mxu0 0.0
    %1675 = vmatpush2.msra.mxu0 0.0
    %1676 = vmatprep.subr.mxu0 0.0
    %1677 = vmatpush2.msra.mxu0 0.0
    %1678 = vmatprep.subr.mxu0 0.0
    %1679 = vmatpush2.msra.mxu0 0.0
    %1680 = vmatprep.mubr.f32.mxu0 0.0
    %1681 = vmatmul.mubr.f32.gmra.mxu0 %v1444
    %v1682 = vpop.f32.mrf.mxu0
    %v1683 = vadd.f32 0.0, %v1682
    %v1684 = vpop.f32.mrf.mxu0
    %1685 = vdwg.mxu0
    %v1686 = vadd.f32 %v233, %v1683
    %v1687 = vxor.u32 %v1686, 2147483648
    %v1688 = vmul.f32 %v1687, 1.442695
    %v1689 = vpow.pop %v1688
    %v1690 = vadd.f32 %v1689, 1.0
    %v1691 = vrcp.pop %v1690
    %v1692 = vmul.f32 1.0, %v1691
    %v1693 = vtanh.pop %v1686
    %v1694 = vmul.f32 %v1692, %v1434
    %1696 = vrot.lane.b32.xlu0 %v1693, 64
    %v1697 = vpop.permute.xlu0 %1696
    %v1699 = vmul.f32 %v1692, %v1697
    %1701 = vrot.lane.b32.xlu0 %v1699, 32
    %v1702 = vpop.permute.xlu0 %1701
    %v1704 = vadd.f32 %v1694, %v1702
    %v1705 = vtanh.pop %v1704
    %1707 = vrot.lane.b32.xlu0 %v1705, 64
    %v1708 = vpop.permute.xlu0 %1707
    %v1710 = vmul.f32 %v1692, %v1708
    %1712 = vrot.lane.b32.xlu0 %v1710, 32
    %v1713 = vpop.permute.xlu0 %1712
    %v1714 = vsel %vm116, %v1713, 0
    %1716 = vmatprep.subr.mxu0 0.0
    %1717 = vmatpush1.msra.mxu0 0.0
    %1718 = vmatprep.subr.mxu0 0.0
    %1719 = vmatpush1.msra.mxu0 0.0
    %1720 = vmatprep.subr.mxu0 0.0
    %1721 = vmatpush1.msra.mxu0 0.0
    %1722 = vmatprep.subr.mxu0 0.0
    %1723 = vmatpush1.msra.mxu0 0.0
    %1724 = vmatprep.subr.mxu0 0.0
    %1725 = vmatpush1.msra.mxu0 0.0
    %1726 = vmatprep.subr.mxu0 0.0
    %1727 = vmatpush1.msra.mxu0 0.0
    %1728 = vmatprep.subr.mxu0 0.0
    %1729 = vmatpush1.msra.mxu0 0.0
    %1730 = vmatprep.subr.mxu0 0.0
    %1731 = vmatpush1.msra.mxu0 0.0
    %1732 = vmatprep.subr.mxu0 0.0
    %1733 = vmatpush1.msra.mxu0 0.0
    %1734 = vmatprep.subr.mxu0 0.0
    %1735 = vmatpush1.msra.mxu0 0.0
    %1736 = vmatprep.subr.mxu0 0.0
    %1737 = vmatpush1.msra.mxu0 0.0
    %1738 = vmatprep.subr.mxu0 0.0
    %1739 = vmatpush1.msra.mxu0 0.0
    %1740 = vmatprep.subr.mxu0 0.0
    %1741 = vmatpush1.msra.mxu0 %v258
    %1742 = vmatprep.subr.mxu0 0.0
    %1743 = vmatpush1.msra.mxu0 %v257
    %1744 = vmatprep.subr.mxu0 0.0
    %1745 = vmatpush1.msra.mxu0 %v256
    %1746 = vmatprep.subr.mxu0 0.0
    %1747 = vmatpush1.msra.mxu0 %v255
    %1748 = vmatprep.subr.mxu0 0.0
    %1749 = vmatpush2.msra.mxu0 0.0
    %1750 = vmatprep.subr.mxu0 0.0
    %1751 = vmatpush2.msra.mxu0 0.0
    %1752 = vmatprep.subr.mxu0 0.0
    %1753 = vmatpush2.msra.mxu0 0.0
    %1754 = vmatprep.subr.mxu0 0.0
    %1755 = vmatpush2.msra.mxu0 0.0
    %1756 = vmatprep.subr.mxu0 0.0
    %1757 = vmatpush2.msra.mxu0 0.0
    %1758 = vmatprep.subr.mxu0 0.0
    %1759 = vmatpush2.msra.mxu0 0.0
    %1760 = vmatprep.subr.mxu0 0.0
    %1761 = vmatpush2.msra.mxu0 0.0
    %1762 = vmatprep.subr.mxu0 0.0
    %1763 = vmatpush2.msra.mxu0 0.0
    %1764 = vmatprep.subr.mxu0 0.0
    %1765 = vmatpush2.msra.mxu0 0.0
    %1766 = vmatprep.subr.mxu0 0.0
    %1767 = vmatpush2.msra.mxu0 0.0
    %1768 = vmatprep.subr.mxu0 0.0
    %1769 = vmatpush2.msra.mxu0 0.0
    %1770 = vmatprep.subr.mxu0 0.0
    %1771 = vmatpush2.msra.mxu0 0.0
    %1772 = vmatprep.subr.mxu0 0.0
    %1773 = vmatpush2.msra.mxu0 0.0
    %1774 = vmatprep.subr.mxu0 0.0
    %1775 = vmatpush2.msra.mxu0 0.0
    %1776 = vmatprep.subr.mxu0 0.0
    %1777 = vmatpush2.msra.mxu0 0.0
    %1778 = vmatprep.subr.mxu0 0.0
    %1779 = vmatpush2.msra.mxu0 0.0
    %1780 = vmatprep.mubr.f32.mxu0 0.0
    %1781 = vmatmul.mubr.f32.gmra.mxu0 %v1714
    %v1782 = vpop.f32.mrf.mxu0
    %v1783 = vadd.f32 0.0, %v1782
    %v1784 = vpop.f32.mrf.mxu0
    %1785 = vdwg.mxu0
    %1787 = vrot.lane.b32.xlu0 %v1615, 32
    %v1788 = vpop.permute.xlu0 %1787
    %v1789 = vsel %vm116, %v1788, 0
    %1791 = vmatprep.subr.mxu0 0.0
    %1792 = vmatpush1.msra.mxu0 0.0
    %1793 = vmatprep.subr.mxu0 0.0
    %1794 = vmatpush1.msra.mxu0 0.0
    %1795 = vmatprep.subr.mxu0 0.0
    %1796 = vmatpush1.msra.mxu0 0.0
    %1797 = vmatprep.subr.mxu0 0.0
    %1798 = vmatpush1.msra.mxu0 0.0
    %1799 = vmatprep.subr.mxu0 0.0
    %1800 = vmatpush1.msra.mxu0 0.0
    %1801 = vmatprep.subr.mxu0 0.0
    %1802 = vmatpush1.msra.mxu0 0.0
    %1803 = vmatprep.subr.mxu0 0.0
    %1804 = vmatpush1.msra.mxu0 0.0
    %1805 = vmatprep.subr.mxu0 0.0
    %1806 = vmatpush1.msra.mxu0 0.0
    %1807 = vmatprep.subr.mxu0 0.0
    %1808 = vmatpush1.msra.mxu0 0.0
    %1809 = vmatprep.subr.mxu0 0.0
    %1810 = vmatpush1.msra.mxu0 0.0
    %1811 = vmatprep.subr.mxu0 0.0
    %1812 = vmatpush1.msra.mxu0 0.0
    %1813 = vmatprep.subr.mxu0 0.0
    %1814 = vmatpush1.msra.mxu0 0.0
    %1815 = vmatprep.subr.mxu0 0.0
    %1816 = vmatpush1.msra.mxu0 %v254
    %1817 = vmatprep.subr.mxu0 0.0
    %1818 = vmatpush1.msra.mxu0 %v253
    %1819 = vmatprep.subr.mxu0 0.0
    %1820 = vmatpush1.msra.mxu0 %v252
    %1821 = vmatprep.subr.mxu0 0.0
    %1822 = vmatpush1.msra.mxu0 %v251
    %1823 = vmatprep.subr.mxu0 0.0
    %1824 = vmatpush2.msra.mxu0 0.0
    %1825 = vmatprep.subr.mxu0 0.0
    %1826 = vmatpush2.msra.mxu0 0.0
    %1827 = vmatprep.subr.mxu0 0.0
    %1828 = vmatpush2.msra.mxu0 0.0
    %1829 = vmatprep.subr.mxu0 0.0
    %1830 = vmatpush2.msra.mxu0 0.0
    %1831 = vmatprep.subr.mxu0 0.0
    %1832 = vmatpush2.msra.mxu0 0.0
    %1833 = vmatprep.subr.mxu0 0.0
    %1834 = vmatpush2.msra.mxu0 0.0
    %1835 = vmatprep.subr.mxu0 0.0
    %1836 = vmatpush2.msra.mxu0 0.0
    %1837 = vmatprep.subr.mxu0 0.0
    %1838 = vmatpush2.msra.mxu0 0.0
    %1839 = vmatprep.subr.mxu0 0.0
    %1840 = vmatpush2.msra.mxu0 0.0
    %1841 = vmatprep.subr.mxu0 0.0
    %1842 = vmatpush2.msra.mxu0 0.0
    %1843 = vmatprep.subr.mxu0 0.0
    %1844 = vmatpush2.msra.mxu0 0.0
    %1845 = vmatprep.subr.mxu0 0.0
    %1846 = vmatpush2.msra.mxu0 0.0
    %1847 = vmatprep.subr.mxu0 0.0
    %1848 = vmatpush2.msra.mxu0 0.0
    %1849 = vmatprep.subr.mxu0 0.0
    %1850 = vmatpush2.msra.mxu0 0.0
    %1851 = vmatprep.subr.mxu0 0.0
    %1852 = vmatpush2.msra.mxu0 0.0
    %1853 = vmatprep.subr.mxu0 0.0
    %1854 = vmatpush2.msra.mxu0 0.0
    %1855 = vmatprep.mubr.f32.mxu0 0.0
    %1856 = vmatmul.mubr.f32.gmra.mxu0 %v1789
    %v1857 = vpop.f32.mrf.mxu0
    %v1858 = vadd.f32 %v1783, %v1857
    %v1859 = vpop.f32.mrf.mxu0
    %1860 = vdwg.mxu0
    %v1861 = vadd.f32 %v1858, %v262
    %v1862 = vxor.u32 %v1861, 2147483648
    %v1863 = vmul.f32 %v1862, 1.442695
    %v1864 = vpow.pop %v1863
    %v1865 = vadd.f32 %v1864, 1.0
    %v1866 = vrcp.pop %v1865
    %v1867 = vmul.f32 1.0, %v1866
    %v1868 = vtanh.pop %v1861
    %v1869 = vmul.f32 %v1867, %v1609
    %1871 = vrot.lane.b32.xlu0 %v1868, 64
    %v1872 = vpop.permute.xlu0 %1871
    %v1874 = vmul.f32 %v1867, %v1872
    %1876 = vrot.lane.b32.xlu0 %v1874, 32
    %v1877 = vpop.permute.xlu0 %1876
    %v1879 = vadd.f32 %v1869, %v1877
    %v1880 = vtanh.pop %v1879
    %1882 = vrot.lane.b32.xlu0 %v1880, 64
    %v1883 = vpop.permute.xlu0 %1882
    %v1885 = vmul.f32 %v1867, %v1883
    %1886 = vmatprep.subr.mxu0 0.0
    %1887 = vmatpush1.msra.mxu0 0.0
    %1888 = vmatprep.subr.mxu0 0.0
    %1889 = vmatpush1.msra.mxu0 0.0
    %1890 = vmatprep.subr.mxu0 0.0
    %1891 = vmatpush1.msra.mxu0 0.0
    %1892 = vmatprep.subr.mxu0 0.0
    %1893 = vmatpush1.msra.mxu0 0.0
    %1894 = vmatprep.subr.mxu0 0.0
    %1895 = vmatpush1.msra.mxu0 0.0
    %1896 = vmatprep.subr.mxu0 0.0
    %1897 = vmatpush1.msra.mxu0 0.0
    %1898 = vmatprep.subr.mxu0 0.0
    %1899 = vmatpush1.msra.mxu0 0.0
    %1900 = vmatprep.subr.mxu0 0.0
    %1901 = vmatpush1.msra.mxu0 0.0
    %1902 = vmatprep.subr.mxu0 0.0
    %1903 = vmatpush1.msra.mxu0 0.0
    %1904 = vmatprep.subr.mxu0 0.0
    %1905 = vmatpush1.msra.mxu0 0.0
    %1906 = vmatprep.subr.mxu0 0.0
    %1907 = vmatpush1.msra.mxu0 0.0
    %1908 = vmatprep.subr.mxu0 0.0
    %1909 = vmatpush1.msra.mxu0 0.0
    %1910 = vmatprep.subr.mxu0 0.0
    %1911 = vmatpush1.msra.mxu0 %v249
    %1912 = vmatprep.subr.mxu0 0.0
    %1913 = vmatpush1.msra.mxu0 %v248
    %1914 = vmatprep.subr.mxu0 0.0
    %1915 = vmatpush1.msra.mxu0 %v247
    %1916 = vmatprep.subr.mxu0 0.0
    %1917 = vmatpush1.msra.mxu0 %v246
    %1918 = vmatprep.subr.mxu0 0.0
    %1919 = vmatpush2.msra.mxu0 0.0
    %1920 = vmatprep.subr.mxu0 0.0
    %1921 = vmatpush2.msra.mxu0 0.0
    %1922 = vmatprep.subr.mxu0 0.0
    %1923 = vmatpush2.msra.mxu0 0.0
    %1924 = vmatprep.subr.mxu0 0.0
    %1925 = vmatpush2.msra.mxu0 0.0
    %1926 = vmatprep.subr.mxu0 0.0
    %1927 = vmatpush2.msra.mxu0 0.0
    %1928 = vmatprep.subr.mxu0 0.0
    %1929 = vmatpush2.msra.mxu0 0.0
    %1930 = vmatprep.subr.mxu0 0.0
    %1931 = vmatpush2.msra.mxu0 0.0
    %1932 = vmatprep.subr.mxu0 0.0
    %1933 = vmatpush2.msra.mxu0 0.0
    %1934 = vmatprep.subr.mxu0 0.0
    %1935 = vmatpush2.msra.mxu0 0.0
    %1936 = vmatprep.subr.mxu0 0.0
    %1937 = vmatpush2.msra.mxu0 0.0
    %1938 = vmatprep.subr.mxu0 0.0
    %1939 = vmatpush2.msra.mxu0 0.0
    %1940 = vmatprep.subr.mxu0 0.0
    %1941 = vmatpush2.msra.mxu0 0.0
    %1942 = vmatprep.subr.mxu0 0.0
    %1943 = vmatpush2.msra.mxu0 0.0
    %1944 = vmatprep.subr.mxu0 0.0
    %1945 = vmatpush2.msra.mxu0 0.0
    %1946 = vmatprep.subr.mxu0 0.0
    %1947 = vmatpush2.msra.mxu0 0.0
    %1948 = vmatprep.subr.mxu0 0.0
    %1949 = vmatpush2.msra.mxu0 0.0
    %1950 = vmatprep.mubr.f32.mxu0 0.0
    %1951 = vmatmul.mubr.f32.gmra.mxu0 %v1714
    %v1952 = vpop.f32.mrf.mxu0
    %v1953 = vadd.f32 0.0, %v1952
    %v1954 = vpop.f32.mrf.mxu0
    %1955 = vdwg.mxu0
    %v1956 = vadd.f32 %v238, %v1953
    %v1957 = vxor.u32 %v1956, 2147483648
    %v1958 = vmul.f32 %v1957, 1.442695
    %v1959 = vpow.pop %v1958
    %v1960 = vadd.f32 %v1959, 1.0
    %v1961 = vrcp.pop %v1960
    %v1962 = vmul.f32 1.0, %v1961
    %v1963 = vtanh.pop %v1956
    %v1964 = vmul.f32 %v1962, %v1704
    %1966 = vrot.lane.b32.xlu0 %v1963, 64
    %v1967 = vpop.permute.xlu0 %1966
    %v1969 = vmul.f32 %v1962, %v1967
    %1971 = vrot.lane.b32.xlu0 %v1969, 32
    %v1972 = vpop.permute.xlu0 %1971
    %v1974 = vadd.f32 %v1964, %v1972
    %v1975 = vtanh.pop %v1974
    %1977 = vrot.lane.b32.xlu0 %v1975, 64
    %v1978 = vpop.permute.xlu0 %1977
    %v1980 = vmul.f32 %v1962, %v1978
    %1982 = vrot.lane.b32.xlu0 %v1980, 32
    %v1983 = vpop.permute.xlu0 %1982
    %v1984 = vsel %vm116, %v1983, 0
    %1986 = vmatprep.subr.mxu0 0.0
    %1987 = vmatpush1.msra.mxu0 0.0
    %1988 = vmatprep.subr.mxu0 0.0
    %1989 = vmatpush1.msra.mxu0 0.0
    %1990 = vmatprep.subr.mxu0 0.0
    %1991 = vmatpush1.msra.mxu0 0.0
    %1992 = vmatprep.subr.mxu0 0.0
    %1993 = vmatpush1.msra.mxu0 0.0
    %1994 = vmatprep.subr.mxu0 0.0
    %1995 = vmatpush1.msra.mxu0 0.0
    %1996 = vmatprep.subr.mxu0 0.0
    %1997 = vmatpush1.msra.mxu0 0.0
    %1998 = vmatprep.subr.mxu0 0.0
    %1999 = vmatpush1.msra.mxu0 0.0
    %2000 = vmatprep.subr.mxu0 0.0
    %2001 = vmatpush1.msra.mxu0 0.0
    %2002 = vmatprep.subr.mxu0 0.0
    %2003 = vmatpush1.msra.mxu0 0.0
    %2004 = vmatprep.subr.mxu0 0.0
    %2005 = vmatpush1.msra.mxu0 0.0
    %2006 = vmatprep.subr.mxu0 0.0
    %2007 = vmatpush1.msra.mxu0 0.0
    %2008 = vmatprep.subr.mxu0 0.0
    %2009 = vmatpush1.msra.mxu0 0.0
    %2010 = vmatprep.subr.mxu0 0.0
    %2011 = vmatpush1.msra.mxu0 %v258
    %2012 = vmatprep.subr.mxu0 0.0
    %2013 = vmatpush1.msra.mxu0 %v257
    %2014 = vmatprep.subr.mxu0 0.0
    %2015 = vmatpush1.msra.mxu0 %v256
    %2016 = vmatprep.subr.mxu0 0.0
    %2017 = vmatpush1.msra.mxu0 %v255
    %2018 = vmatprep.subr.mxu0 0.0
    %2019 = vmatpush2.msra.mxu0 0.0
    %2020 = vmatprep.subr.mxu0 0.0
    %2021 = vmatpush2.msra.mxu0 0.0
    %2022 = vmatprep.subr.mxu0 0.0
    %2023 = vmatpush2.msra.mxu0 0.0
    %2024 = vmatprep.subr.mxu0 0.0
    %2025 = vmatpush2.msra.mxu0 0.0
    %2026 = vmatprep.subr.mxu0 0.0
    %2027 = vmatpush2.msra.mxu0 0.0
    %2028 = vmatprep.subr.mxu0 0.0
    %2029 = vmatpush2.msra.mxu0 0.0
    %2030 = vmatprep.subr.mxu0 0.0
    %2031 = vmatpush2.msra.mxu0 0.0
    %2032 = vmatprep.subr.mxu0 0.0
    %2033 = vmatpush2.msra.mxu0 0.0
    %2034 = vmatprep.subr.mxu0 0.0
    %2035 = vmatpush2.msra.mxu0 0.0
    %2036 = vmatprep.subr.mxu0 0.0
    %2037 = vmatpush2.msra.mxu0 0.0
    %2038 = vmatprep.subr.mxu0 0.0
    %2039 = vmatpush2.msra.mxu0 0.0
    %2040 = vmatprep.subr.mxu0 0.0
    %2041 = vmatpush2.msra.mxu0 0.0
    %2042 = vmatprep.subr.mxu0 0.0
    %2043 = vmatpush2.msra.mxu0 0.0
    %2044 = vmatprep.subr.mxu0 0.0
    %2045 = vmatpush2.msra.mxu0 0.0
    %2046 = vmatprep.subr.mxu0 0.0
    %2047 = vmatpush2.msra.mxu0 0.0
    %2048 = vmatprep.subr.mxu0 0.0
    %2049 = vmatpush2.msra.mxu0 0.0
    %2050 = vmatprep.mubr.f32.mxu0 0.0
    %2051 = vmatmul.mubr.f32.gmra.mxu0 %v1984
    %v2052 = vpop.f32.mrf.mxu0
    %v2053 = vadd.f32 0.0, %v2052
    %v2054 = vpop.f32.mrf.mxu0
    %2055 = vdwg.mxu0
    %2057 = vrot.lane.b32.xlu0 %v1885, 32
    %v2058 = vpop.permute.xlu0 %2057
    %v2059 = vsel %vm116, %v2058, 0
    %2061 = vmatprep.subr.mxu0 0.0
    %2062 = vmatpush1.msra.mxu0 0.0
    %2063 = vmatprep.subr.mxu0 0.0
    %2064 = vmatpush1.msra.mxu0 0.0
    %2065 = vmatprep.subr.mxu0 0.0
    %2066 = vmatpush1.msra.mxu0 0.0
    %2067 = vmatprep.subr.mxu0 0.0
    %2068 = vmatpush1.msra.mxu0 0.0
    %2069 = vmatprep.subr.mxu0 0.0
    %2070 = vmatpush1.msra.mxu0 0.0
    %2071 = vmatprep.subr.mxu0 0.0
    %2072 = vmatpush1.msra.mxu0 0.0
    %2073 = vmatprep.subr.mxu0 0.0
    %2074 = vmatpush1.msra.mxu0 0.0
    %2075 = vmatprep.subr.mxu0 0.0
    %2076 = vmatpush1.msra.mxu0 0.0
    %2077 = vmatprep.subr.mxu0 0.0
    %2078 = vmatpush1.msra.mxu0 0.0
    %2079 = vmatprep.subr.mxu0 0.0
    %2080 = vmatpush1.msra.mxu0 0.0
    %2081 = vmatprep.subr.mxu0 0.0
    %2082 = vmatpush1.msra.mxu0 0.0
    %2083 = vmatprep.subr.mxu0 0.0
    %2084 = vmatpush1.msra.mxu0 0.0
    %2085 = vmatprep.subr.mxu0 0.0
    %2086 = vmatpush1.msra.mxu0 %v254
    %2087 = vmatprep.subr.mxu0 0.0
    %2088 = vmatpush1.msra.mxu0 %v253
    %2089 = vmatprep.subr.mxu0 0.0
    %2090 = vmatpush1.msra.mxu0 %v252
    %2091 = vmatprep.subr.mxu0 0.0
    %2092 = vmatpush1.msra.mxu0 %v251
    %2093 = vmatprep.subr.mxu0 0.0
    %2094 = vmatpush2.msra.mxu0 0.0
    %2095 = vmatprep.subr.mxu0 0.0
    %2096 = vmatpush2.msra.mxu0 0.0
    %2097 = vmatprep.subr.mxu0 0.0
    %2098 = vmatpush2.msra.mxu0 0.0
    %2099 = vmatprep.subr.mxu0 0.0
    %2100 = vmatpush2.msra.mxu0 0.0
    %2101 = vmatprep.subr.mxu0 0.0
    %2102 = vmatpush2.msra.mxu0 0.0
    %2103 = vmatprep.subr.mxu0 0.0
    %2104 = vmatpush2.msra.mxu0 0.0
    %2105 = vmatprep.subr.mxu0 0.0
    %2106 = vmatpush2.msra.mxu0 0.0
    %2107 = vmatprep.subr.mxu0 0.0
    %2108 = vmatpush2.msra.mxu0 0.0
    %2109 = vmatprep.subr.mxu0 0.0
    %2110 = vmatpush2.msra.mxu0 0.0
    %2111 = vmatprep.subr.mxu0 0.0
    %2112 = vmatpush2.msra.mxu0 0.0
    %2113 = vmatprep.subr.mxu0 0.0
    %2114 = vmatpush2.msra.mxu0 0.0
    %2115 = vmatprep.subr.mxu0 0.0
    %2116 = vmatpush2.msra.mxu0 0.0
    %2117 = vmatprep.subr.mxu0 0.0
    %2118 = vmatpush2.msra.mxu0 0.0
    %2119 = vmatprep.subr.mxu0 0.0
    %2120 = vmatpush2.msra.mxu0 0.0
    %2121 = vmatprep.subr.mxu0 0.0
    %2122 = vmatpush2.msra.mxu0 0.0
    %2123 = vmatprep.subr.mxu0 0.0
    %2124 = vmatpush2.msra.mxu0 0.0
    %2125 = vmatprep.mubr.f32.mxu0 0.0
    %2126 = vmatmul.mubr.f32.gmra.mxu0 %v2059
    %v2127 = vpop.f32.mrf.mxu0
    %v2128 = vadd.f32 %v2053, %v2127
    %v2129 = vpop.f32.mrf.mxu0
    %2130 = vdwg.mxu0
    %v2131 = vadd.f32 %v2128, %v262
    %v2132 = vxor.u32 %v2131, 2147483648
    %v2133 = vmul.f32 %v2132, 1.442695
    %v2134 = vpow.pop %v2133
    %v2135 = vadd.f32 %v2134, 1.0
    %v2136 = vrcp.pop %v2135
    %v2137 = vmul.f32 1.0, %v2136
    %v2138 = vtanh.pop %v2131
    %v2139 = vmul.f32 %v2137, %v1879
    %2141 = vrot.lane.b32.xlu0 %v2138, 64
    %v2142 = vpop.permute.xlu0 %2141
    %v2144 = vmul.f32 %v2137, %v2142
    %2146 = vrot.lane.b32.xlu0 %v2144, 32
    %v2147 = vpop.permute.xlu0 %2146
    %v2149 = vadd.f32 %v2139, %v2147
    %v2150 = vtanh.pop %v2149
    %2152 = vrot.lane.b32.xlu0 %v2150, 64
    %v2153 = vpop.permute.xlu0 %2152
    %v2155 = vmul.f32 %v2137, %v2153
    %2156 = vmatprep.subr.mxu0 0.0
    %2157 = vmatpush1.msra.mxu0 0.0
    %2158 = vmatprep.subr.mxu0 0.0
    %2159 = vmatpush1.msra.mxu0 0.0
    %2160 = vmatprep.subr.mxu0 0.0
    %2161 = vmatpush1.msra.mxu0 0.0
    %2162 = vmatprep.subr.mxu0 0.0
    %2163 = vmatpush1.msra.mxu0 0.0
    %2164 = vmatprep.subr.mxu0 0.0
    %2165 = vmatpush1.msra.mxu0 0.0
    %2166 = vmatprep.subr.mxu0 0.0
    %2167 = vmatpush1.msra.mxu0 0.0
    %2168 = vmatprep.subr.mxu0 0.0
    %2169 = vmatpush1.msra.mxu0 0.0
    %2170 = vmatprep.subr.mxu0 0.0
    %2171 = vmatpush1.msra.mxu0 0.0
    %2172 = vmatprep.subr.mxu0 0.0
    %2173 = vmatpush1.msra.mxu0 0.0
    %2174 = vmatprep.subr.mxu0 0.0
    %2175 = vmatpush1.msra.mxu0 0.0
    %2176 = vmatprep.subr.mxu0 0.0
    %2177 = vmatpush1.msra.mxu0 0.0
    %2178 = vmatprep.subr.mxu0 0.0
    %2179 = vmatpush1.msra.mxu0 0.0
    %2180 = vmatprep.subr.mxu0 0.0
    %2181 = vmatpush1.msra.mxu0 %v249
    %2182 = vmatprep.subr.mxu0 0.0
    %2183 = vmatpush1.msra.mxu0 %v248
    %2184 = vmatprep.subr.mxu0 0.0
    %2185 = vmatpush1.msra.mxu0 %v247
    %2186 = vmatprep.subr.mxu0 0.0
    %2187 = vmatpush1.msra.mxu0 %v246
    %2188 = vmatprep.subr.mxu0 0.0
    %2189 = vmatpush2.msra.mxu0 0.0
    %2190 = vmatprep.subr.mxu0 0.0
    %2191 = vmatpush2.msra.mxu0 0.0
    %2192 = vmatprep.subr.mxu0 0.0
    %2193 = vmatpush2.msra.mxu0 0.0
    %2194 = vmatprep.subr.mxu0 0.0
    %2195 = vmatpush2.msra.mxu0 0.0
    %2196 = vmatprep.subr.mxu0 0.0
    %2197 = vmatpush2.msra.mxu0 0.0
    %2198 = vmatprep.subr.mxu0 0.0
    %2199 = vmatpush2.msra.mxu0 0.0
    %2200 = vmatprep.subr.mxu0 0.0
    %2201 = vmatpush2.msra.mxu0 0.0
    %2202 = vmatprep.subr.mxu0 0.0
    %2203 = vmatpush2.msra.mxu0 0.0
    %2204 = vmatprep.subr.mxu0 0.0
    %2205 = vmatpush2.msra.mxu0 0.0
    %2206 = vmatprep.subr.mxu0 0.0
    %2207 = vmatpush2.msra.mxu0 0.0
    %2208 = vmatprep.subr.mxu0 0.0
    %2209 = vmatpush2.msra.mxu0 0.0
    %2210 = vmatprep.subr.mxu0 0.0
    %2211 = vmatpush2.msra.mxu0 0.0
    %2212 = vmatprep.subr.mxu0 0.0
    %2213 = vmatpush2.msra.mxu0 0.0
    %2214 = vmatprep.subr.mxu0 0.0
    %2215 = vmatpush2.msra.mxu0 0.0
    %2216 = vmatprep.subr.mxu0 0.0
    %2217 = vmatpush2.msra.mxu0 0.0
    %2218 = vmatprep.subr.mxu0 0.0
    %2219 = vmatpush2.msra.mxu0 0.0
    %2220 = vmatprep.mubr.f32.mxu0 0.0
    %2221 = vmatmul.mubr.f32.gmra.mxu0 %v1984
    %v2222 = vpop.f32.mrf.mxu0
    %v2223 = vadd.f32 0.0, %v2222
    %v2224 = vpop.f32.mrf.mxu0
    %2225 = vdwg.mxu0
    %v2226 = vadd.f32 %v243, %v2223
    %v2227 = vxor.u32 %v2226, 2147483648
    %v2228 = vmul.f32 %v2227, 1.442695
    %v2229 = vpow.pop %v2228
    %v2230 = vadd.f32 %v2229, 1.0
    %v2231 = vrcp.pop %v2230
    %v2232 = vmul.f32 1.0, %v2231
    %v2233 = vtanh.pop %v2226
    %v2234 = vmul.f32 %v2232, %v1974
    %2236 = vrot.lane.b32.xlu0 %v2233, 64
    %v2237 = vpop.permute.xlu0 %2236
    %v2239 = vmul.f32 %v2232, %v2237
    %2241 = vrot.lane.b32.xlu0 %v2239, 32
    %v2242 = vpop.permute.xlu0 %2241
    %v2244 = vadd.f32 %v2234, %v2242
    %v2245 = vtanh.pop %v2244
    %2247 = vrot.lane.b32.xlu0 %v2245, 64
    %v2248 = vpop.permute.xlu0 %2247
    %v2250 = vmul.f32 %v2232, %v2248
    %2252 = vrot.lane.b32.xlu0 %v2250, 32
    %v2253 = vpop.permute.xlu0 %2252
    %v2254 = vsel %vm116, %v2253, 0
    %2256 = vmatprep.subr.mxu0 0.0
    %2257 = vmatpush1.msra.mxu0 0.0
    %2258 = vmatprep.subr.mxu0 0.0
    %2259 = vmatpush1.msra.mxu0 0.0
    %2260 = vmatprep.subr.mxu0 0.0
    %2261 = vmatpush1.msra.mxu0 0.0
    %2262 = vmatprep.subr.mxu0 0.0
    %2263 = vmatpush1.msra.mxu0 0.0
    %2264 = vmatprep.subr.mxu0 0.0
    %2265 = vmatpush1.msra.mxu0 0.0
    %2266 = vmatprep.subr.mxu0 0.0
    %2267 = vmatpush1.msra.mxu0 0.0
    %2268 = vmatprep.subr.mxu0 0.0
    %2269 = vmatpush1.msra.mxu0 0.0
    %2270 = vmatprep.subr.mxu0 0.0
    %2271 = vmatpush1.msra.mxu0 0.0
    %2272 = vmatprep.subr.mxu0 0.0
    %2273 = vmatpush1.msra.mxu0 0.0
    %2274 = vmatprep.subr.mxu0 0.0
    %2275 = vmatpush1.msra.mxu0 0.0
    %2276 = vmatprep.subr.mxu0 0.0
    %2277 = vmatpush1.msra.mxu0 0.0
    %2278 = vmatprep.subr.mxu0 0.0
    %2279 = vmatpush1.msra.mxu0 0.0
    %2280 = vmatprep.subr.mxu0 0.0
    %2281 = vmatpush1.msra.mxu0 %v258
    %2282 = vmatprep.subr.mxu0 0.0
    %2283 = vmatpush1.msra.mxu0 %v257
    %2284 = vmatprep.subr.mxu0 0.0
    %2285 = vmatpush1.msra.mxu0 %v256
    %2286 = vmatprep.subr.mxu0 0.0
    %2287 = vmatpush1.msra.mxu0 %v255
    %2288 = vmatprep.subr.mxu0 0.0
    %2289 = vmatpush2.msra.mxu0 0.0
    %2290 = vmatprep.subr.mxu0 0.0
    %2291 = vmatpush2.msra.mxu0 0.0
    %2292 = vmatprep.subr.mxu0 0.0
    %2293 = vmatpush2.msra.mxu0 0.0
    %2294 = vmatprep.subr.mxu0 0.0
    %2295 = vmatpush2.msra.mxu0 0.0
    %2296 = vmatprep.subr.mxu0 0.0
    %2297 = vmatpush2.msra.mxu0 0.0
    %2298 = vmatprep.subr.mxu0 0.0
    %2299 = vmatpush2.msra.mxu0 0.0
    %2300 = vmatprep.subr.mxu0 0.0
    %2301 = vmatpush2.msra.mxu0 0.0
    %2302 = vmatprep.subr.mxu0 0.0
    %2303 = vmatpush2.msra.mxu0 0.0
    %2304 = vmatprep.subr.mxu0 0.0
    %2305 = vmatpush2.msra.mxu0 0.0
    %2306 = vmatprep.subr.mxu0 0.0
    %2307 = vmatpush2.msra.mxu0 0.0
    %2308 = vmatprep.subr.mxu0 0.0
    %2309 = vmatpush2.msra.mxu0 0.0
    %2310 = vmatprep.subr.mxu0 0.0
    %2311 = vmatpush2.msra.mxu0 0.0
    %2312 = vmatprep.subr.mxu0 0.0
    %2313 = vmatpush2.msra.mxu0 0.0
    %2314 = vmatprep.subr.mxu0 0.0
    %2315 = vmatpush2.msra.mxu0 0.0
    %2316 = vmatprep.subr.mxu0 0.0
    %2317 = vmatpush2.msra.mxu0 0.0
    %2318 = vmatprep.subr.mxu0 0.0
    %2319 = vmatpush2.msra.mxu0 0.0
    %2320 = vmatprep.mubr.f32.mxu0 0.0
    %2321 = vmatmul.mubr.f32.gmra.mxu0 %v2254
    %v2322 = vpop.f32.mrf.mxu0
    %v2323 = vadd.f32 0.0, %v2322
    %v2324 = vpop.f32.mrf.mxu0
    %2325 = vdwg.mxu0
    %2327 = vrot.lane.b32.xlu0 %v2155, 32
    %v2328 = vpop.permute.xlu0 %2327
    %v2329 = vsel %vm116, %v2328, 0
    %2331 = vmatprep.subr.mxu0 0.0
    %2332 = vmatpush1.msra.mxu0 0.0
    %2333 = vmatprep.subr.mxu0 0.0
    %2334 = vmatpush1.msra.mxu0 0.0
    %2335 = vmatprep.subr.mxu0 0.0
    %2336 = vmatpush1.msra.mxu0 0.0
    %2337 = vmatprep.subr.mxu0 0.0
    %2338 = vmatpush1.msra.mxu0 0.0
    %2339 = vmatprep.subr.mxu0 0.0
    %2340 = vmatpush1.msra.mxu0 0.0
    %2341 = vmatprep.subr.mxu0 0.0
    %2342 = vmatpush1.msra.mxu0 0.0
    %2343 = vmatprep.subr.mxu0 0.0
    %2344 = vmatpush1.msra.mxu0 0.0
    %2345 = vmatprep.subr.mxu0 0.0
    %2346 = vmatpush1.msra.mxu0 0.0
    %2347 = vmatprep.subr.mxu0 0.0
    %2348 = vmatpush1.msra.mxu0 0.0
    %2349 = vmatprep.subr.mxu0 0.0
    %2350 = vmatpush1.msra.mxu0 0.0
    %2351 = vmatprep.subr.mxu0 0.0
    %2352 = vmatpush1.msra.mxu0 0.0
    %2353 = vmatprep.subr.mxu0 0.0
    %2354 = vmatpush1.msra.mxu0 0.0
    %2355 = vmatprep.subr.mxu0 0.0
    %2356 = vmatpush1.msra.mxu0 %v254
    %2357 = vmatprep.subr.mxu0 0.0
    %2358 = vmatpush1.msra.mxu0 %v253
    %2359 = vmatprep.subr.mxu0 0.0
    %2360 = vmatpush1.msra.mxu0 %v252
    %2361 = vmatprep.subr.mxu0 0.0
    %2362 = vmatpush1.msra.mxu0 %v251
    %2363 = vmatprep.subr.mxu0 0.0
    %2364 = vmatpush2.msra.mxu0 0.0
    %2365 = vmatprep.subr.mxu0 0.0
    %2366 = vmatpush2.msra.mxu0 0.0
    %2367 = vmatprep.subr.mxu0 0.0
    %2368 = vmatpush2.msra.mxu0 0.0
    %2369 = vmatprep.subr.mxu0 0.0
    %2370 = vmatpush2.msra.mxu0 0.0
    %2371 = vmatprep.subr.mxu0 0.0
    %2372 = vmatpush2.msra.mxu0 0.0
    %2373 = vmatprep.subr.mxu0 0.0
    %2374 = vmatpush2.msra.mxu0 0.0
    %2375 = vmatprep.subr.mxu0 0.0
    %2376 = vmatpush2.msra.mxu0 0.0
    %2377 = vmatprep.subr.mxu0 0.0
    %2378 = vmatpush2.msra.mxu0 0.0
    %2379 = vmatprep.subr.mxu0 0.0
    %2380 = vmatpush2.msra.mxu0 0.0
    %2381 = vmatprep.subr.mxu0 0.0
    %2382 = vmatpush2.msra.mxu0 0.0
    %2383 = vmatprep.subr.mxu0 0.0
    %2384 = vmatpush2.msra.mxu0 0.0
    %2385 = vmatprep.subr.mxu0 0.0
    %2386 = vmatpush2.msra.mxu0 0.0
    %2387 = vmatprep.subr.mxu0 0.0
    %2388 = vmatpush2.msra.mxu0 0.0
    %2389 = vmatprep.subr.mxu0 0.0
    %2390 = vmatpush2.msra.mxu0 0.0
    %2391 = vmatprep.subr.mxu0 0.0
    %2392 = vmatpush2.msra.mxu0 0.0
    %2393 = vmatprep.subr.mxu0 0.0
    %2394 = vmatpush2.msra.mxu0 0.0
    %2395 = vmatprep.mubr.f32.mxu0 0.0
    %2396 = vmatmul.mubr.f32.gmra.mxu0 %v2329
    %v2397 = vpop.f32.mrf.mxu0
    %v2398 = vadd.f32 %v2323, %v2397
    %v2399 = vpop.f32.mrf.mxu0
    %2400 = vdwg.mxu0
    %v2401 = vadd.f32 %v2398, %v262
    %v2402 = vxor.u32 %v2401, 2147483648
    %v2403 = vmul.f32 %v2402, 1.442695
    %v2404 = vpow.pop %v2403
    %v2405 = vadd.f32 %v2404, 1.0
    %v2406 = vrcp.pop %v2405
    %v2407 = vmul.f32 1.0, %v2406
    %v2408 = vtanh.pop %v2401
    %v2409 = vmul.f32 %v2407, %v2149
    %2411 = vrot.lane.b32.xlu0 %v2408, 64
    %v2412 = vpop.permute.xlu0 %2411
    %v2414 = vmul.f32 %v2407, %v2412
    %2416 = vrot.lane.b32.xlu0 %v2414, 32
    %v2417 = vpop.permute.xlu0 %2416
    %v2419 = vadd.f32 %v2409, %v2417
    %v2420 = vtanh.pop %v2419
    %2422 = vrot.lane.b32.xlu0 %v2420, 64
    %v2423 = vpop.permute.xlu0 %2422
    %v2425 = vmul.f32 %v2407, %v2423
    %v2427 = vlaneseq
    %v2428 = vshrl.u32 %v2427, 7
    %v2429 = vsub.s32 0, %v2428
    %v2430 = vrot.slane %v267, %v2429
    %2433 = vrot.lane.b32.xlu0 %v2425, 32
    %v2434 = vpop.permute.xlu0 %2433
    %v2435 = vsel %vm116, %v2434, 0
    %2437 = vmatprep.subr.mxu0 0.0
    %2438 = vmatpush1.msra.mxu0 0.0
    %2439 = vmatprep.subr.mxu0 0.0
    %2440 = vmatpush1.msra.mxu0 0.0
    %2441 = vmatprep.subr.mxu0 0.0
    %2442 = vmatpush1.msra.mxu0 0.0
    %2443 = vmatprep.subr.mxu0 0.0
    %2444 = vmatpush1.msra.mxu0 0.0
    %2445 = vmatprep.subr.mxu0 0.0
    %2446 = vmatpush1.msra.mxu0 0.0
    %2447 = vmatprep.subr.mxu0 0.0
    %2448 = vmatpush1.msra.mxu0 0.0
    %2449 = vmatprep.subr.mxu0 0.0
    %2450 = vmatpush1.msra.mxu0 0.0
    %2451 = vmatprep.subr.mxu0 0.0
    %2452 = vmatpush1.msra.mxu0 0.0
    %2453 = vmatprep.subr.mxu0 0.0
    %2454 = vmatpush1.msra.mxu0 0.0
    %2455 = vmatprep.subr.mxu0 0.0
    %2456 = vmatpush1.msra.mxu0 0.0
    %2457 = vmatprep.subr.mxu0 0.0
    %2458 = vmatpush1.msra.mxu0 0.0
    %2459 = vmatprep.subr.mxu0 0.0
    %2460 = vmatpush1.msra.mxu0 0.0
    %2461 = vmatprep.subr.mxu0 0.0
    %2462 = vmatpush1.msra.mxu0 %v266
    %2463 = vmatprep.subr.mxu0 0.0
    %2464 = vmatpush1.msra.mxu0 %v265
    %2465 = vmatprep.subr.mxu0 0.0
    %2466 = vmatpush1.msra.mxu0 %v264
    %2467 = vmatprep.subr.mxu0 0.0
    %2468 = vmatpush1.msra.mxu0 %v263
    %2469 = vmatprep.subr.mxu0 0.0
    %2470 = vmatpush2.msra.mxu0 0.0
    %2471 = vmatprep.subr.mxu0 0.0
    %2472 = vmatpush2.msra.mxu0 0.0
    %2473 = vmatprep.subr.mxu0 0.0
    %2474 = vmatpush2.msra.mxu0 0.0
    %2475 = vmatprep.subr.mxu0 0.0
    %2476 = vmatpush2.msra.mxu0 0.0
    %2477 = vmatprep.subr.mxu0 0.0
    %2478 = vmatpush2.msra.mxu0 0.0
    %2479 = vmatprep.subr.mxu0 0.0
    %2480 = vmatpush2.msra.mxu0 0.0
    %2481 = vmatprep.subr.mxu0 0.0
    %2482 = vmatpush2.msra.mxu0 0.0
    %2483 = vmatprep.subr.mxu0 0.0
    %2484 = vmatpush2.msra.mxu0 0.0
    %2485 = vmatprep.subr.mxu0 0.0
    %2486 = vmatpush2.msra.mxu0 0.0
    %2487 = vmatprep.subr.mxu0 0.0
    %2488 = vmatpush2.msra.mxu0 0.0
    %2489 = vmatprep.subr.mxu0 0.0
    %2490 = vmatpush2.msra.mxu0 0.0
    %2491 = vmatprep.subr.mxu0 0.0
    %2492 = vmatpush2.msra.mxu0 0.0
    %2493 = vmatprep.subr.mxu0 0.0
    %2494 = vmatpush2.msra.mxu0 0.0
    %2495 = vmatprep.subr.mxu0 0.0
    %2496 = vmatpush2.msra.mxu0 0.0
    %2497 = vmatprep.subr.mxu0 0.0
    %2498 = vmatpush2.msra.mxu0 0.0
    %2499 = vmatprep.subr.mxu0 0.0
    %2500 = vmatpush2.msra.mxu0 0.0
    %2501 = vmatprep.mubr.f32.mxu0 0.0
    %2502 = vmatmul.mubr.f32.gmra.mxu0 %v709
    %v2503 = vpop.f32.mrf.mxu0
    %v2504 = vadd.f32 %v2430, %v2503
    %v2505 = vpop.f32.mrf.mxu0
    %2506 = vmatprep.mubr.f32.mxu0 0.0
    %2507 = vmatmul.mubr.f32.gmra.mxu0 %v979
    %v2508 = vpop.f32.mrf.mxu0
    %v2509 = vadd.f32 %v2430, %v2508
    %v2510 = vpop.f32.mrf.mxu0
    %2511 = vmatprep.mubr.f32.mxu0 0.0
    %2512 = vmatmul.mubr.f32.gmra.mxu0 %v1249
    %v2513 = vpop.f32.mrf.mxu0
    %v2514 = vadd.f32 %v2430, %v2513
    %v2515 = vpop.f32.mrf.mxu0
    %2516 = vmatprep.mubr.f32.mxu0 0.0
    %2517 = vmatmul.mubr.f32.gmra.mxu0 %v1519
    %v2518 = vpop.f32.mrf.mxu0
    %v2519 = vadd.f32 %v2430, %v2518
    %v2520 = vpop.f32.mrf.mxu0
    %2521 = vmatprep.mubr.f32.mxu0 0.0
    %2522 = vmatmul.mubr.f32.gmra.mxu0 %v1789
    %v2523 = vpop.f32.mrf.mxu0
    %v2524 = vadd.f32 %v2430, %v2523
    %v2525 = vpop.f32.mrf.mxu0
    %2526 = vmatprep.mubr.f32.mxu0 0.0
    %2527 = vmatmul.mubr.f32.gmra.mxu0 %v2059
    %v2528 = vpop.f32.mrf.mxu0
    %v2529 = vadd.f32 %v2430, %v2528
    %v2530 = vpop.f32.mrf.mxu0
    %2531 = vmatprep.mubr.f32.mxu0 0.0
    %2532 = vmatmul.mubr.f32.gmra.mxu0 %v2329
    %v2533 = vpop.f32.mrf.mxu0
    %v2534 = vadd.f32 %v2430, %v2533
    %v2535 = vpop.f32.mrf.mxu0
    %2536 = vmatprep.mubr.f32.mxu0 0.0
    %2537 = vmatmul.mubr.f32.gmra.mxu0 %v2435
    %v2538 = vpop.f32.mrf.mxu0
    %v2539 = vadd.f32 %v2430, %v2538
    %v2540 = vpop.f32.mrf.mxu0
    %2541 = vdwg.mxu0
    %2542 = vst [vmem:[#allocation11] sm:$0xff] %v2504
    %2543 = vst [vmem:[#allocation11 + $0x8] sm:$0xff] %v2509
    %2544 = vst [vmem:[#allocation11 + $0x10] sm:$0xff] %v2514
    %2545 = vst [vmem:[#allocation11 + $0x18] sm:$0xff] %v2519
    %2546 = vst [vmem:[#allocation11 + $0x20] sm:$0xff] %v2524
    %2547 = vst [vmem:[#allocation11 + $0x28] sm:$0xff] %v2529
    %2548 = vst [vmem:[#allocation11 + $0x30] sm:$0xff] %v2534
    %2549 = vst [vmem:[#allocation11 + $0x38] sm:$0xff] %v2539
    %2552 = vst.msk [vmem:[#allocation12] sm:$0xff] %vm116, %v2253
    %2553 = vst.msk [vmem:[#allocation12 + $0x8] sm:$0xff] %vm116, %v2434
    %2556 = vrot.lane.b32.xlu0 %v2244, 96
    %v2557 = vpop.permute.xlu0 %2556
    %2558 = vrot.lane.b32.xlu0 %v2419, 96
    %v2559 = vpop.permute.xlu0 %2558
    %2562 = vst.msk [vmem:[#allocation14] sm:$0xff] %vm116, %v2557
    %2563 = vst.msk [vmem:[#allocation14 + $0x8] sm:$0xff] %vm116, %v2559
    // Predicated region
    $region50: #{tpu_custom_call.1} parent=1 // pred_check
      _
    $region51: #{tpu_custom_call.1} parent=1 // pred_check_branch
      %2565 = sbr.rel (0) target = $region53
    $region52: #{tpu_custom_call.1} parent=1 // pred_region
      %s2567 = ssub.s32 1024, 1024
      %2568 = vsyncadd [#allocation4], %s2567
      %s2569 = sshll.u32 [#allocation11], 4
      %s2570 = int_to_ptr.vmem [resolvable:$true] %s2569
      %2575 = dma.vmem_to_hbm [thread:$0]  %s2570, 1024, %s7, [#allocation4], 128, 128, 8
    $region53: #{tpu_custom_call.1} parent=1 // pred_fallthru
      _
    // Predicated region
    $region54: #{tpu_custom_call.1} parent=1 // pred_check
      _
    $region55: #{tpu_custom_call.1} parent=1 // pred_check_branch
      %2577 = sbr.rel (0) target = $region57
    $region56: #{tpu_custom_call.1} parent=1 // pred_region
      %s2579 = ssub.s32 256, 256
      %2580 = vsyncadd [#allocation13], %s2579
      %s2581 = sshll.u32 [#allocation12], 4
      %s2582 = int_to_ptr.vmem [resolvable:$true] %s2581
      %2587 = dma.vmem_to_hbm [thread:$0]  %s2582, 256, %s8, [#allocation13], 128, 128, 8
    $region57: #{tpu_custom_call.1} parent=1 // pred_fallthru
      _
    // Predicated region
    $region58: #{tpu_custom_call.1} parent=1 // pred_check
      _
    $region59: #{tpu_custom_call.1} parent=1 // pred_check_branch
      %2589 = sbr.rel (0) target = $region61
    $region60: #{tpu_custom_call.1} parent=1 // pred_region
      %s2591 = ssub.s32 256, 256
      %2592 = vsyncadd [#allocation13], %s2591
      %s2593 = sshll.u32 [#allocation14], 4
      %s2594 = int_to_ptr.vmem [resolvable:$true] %s2593
      %2599 = dma.vmem_to_hbm [thread:$0]  %s2594, 256, %s9, [#allocation13], 128, 128, 8
    $region61: #{tpu_custom_call.1} parent=1 // pred_fallthru
      _
    // Predicated region
    $region62: #{tpu_custom_call.1} parent=1 // pred_check
      _
    $region63: #{tpu_custom_call.1} parent=1 // pred_check_branch
      %2601 = sbr.rel (0) target = $region65
    $region64: #{tpu_custom_call.1} parent=1 // pred_region
      %2602 = dma.done [#allocation4], 1024
    $region65: #{tpu_custom_call.1} parent=1 // pred_fallthru
      _
    // Predicated region
    $region66: #{tpu_custom_call.1} parent=1 // pred_check
      _
    $region67: #{tpu_custom_call.1} parent=1 // pred_check_branch
      %2604 = sbr.rel (0) target = $region69
    $region68: #{tpu_custom_call.1} parent=1 // pred_region
      %2605 = dma.done [#allocation13], 256
    $region69: #{tpu_custom_call.1} parent=1 // pred_fallthru
      _
    // Predicated region
    $region70: #{tpu_custom_call.1} parent=1 // pred_check
      _
    $region71: #{tpu_custom_call.1} parent=1 // pred_check_branch
      %2607 = sbr.rel (0) target = $region73
    $region72: #{tpu_custom_call.1} parent=1 // pred_region
      %2608 = dma.done [#allocation13], 256
    $region73: #{tpu_custom_call.1} parent=1 // pred_fallthru
      _
    %2609 = vsyncpa [#allocation3], 1
    %2610 = vsyncpa [#allocation6], 1
    %2611 = vsyncpa [#allocation9], 1
    %2612 = vsyncpa [#allocation4], 1
    %2613 = vsyncpa [#allocation13], 1

</llo_original>
